<compile_context>
chip_gen: v7x
topology: tpu7x:2x2x1
jax: 0.10.0
libtpu: 0.0.40
codegen_flags: <defaults>
</compile_context>

<pallas_src>
import functools

import jax
import jax.numpy as jnp
import numpy as np
from jax.experimental import pallas as pl
from jax.experimental.pallas import tpu as pltpu


# ----------------------------------------------------------------------------
# Fused kernel: conv3x3+BN+ReLU+pool  ->  conv3x3+BN+ReLU+pool  ->  fc
# ----------------------------------------------------------------------------
def _cnn_fused_kernel(x_ref, w1_ref, t1_ref, w2_ref, t2_ref, wfc_ref, bfc_ref,
                      out_ref, y1_scr, pad2_scr, y2_scr, p2_scr,
                      *, H, W, C_in, C1, C2):
    Hh, Wh = H // 2, W // 2
    Hq, Wq = H // 4, W // 4

    # ---------- layer 1: conv3x3 (in-kernel im2col, 9 taps) + BN + ReLU ------
    acc1 = jnp.zeros((H * W, C1), jnp.float32)
    for dh in range(3):
        for dw in range(3):
            tap = x_ref[0, dh:dh + H, dw:dw + W, :]              # (H, W, C_in)
            tap = tap.reshape(H * W, C_in).astype(jnp.bfloat16)
            acc1 = acc1 + jnp.dot(tap, w1_ref[dh, dw],
                                  preferred_element_type=jnp.float32)
    y1 = jnp.maximum(acc1 + t1_ref[...], 0.0)                    # (H*W, C1)

    # ---------- 2x2 max-pool #1 (vectorized) ---------------------------------
    # W-pool: one store + two strided sublane reads of the flat (H*W, C1) tile.
    y1_scr[...] = y1
    wmax = jnp.maximum(y1_scr[pl.ds(0, H * Wh, 2), :],
                       y1_scr[pl.ds(1, H * Wh, 2), :])           # (H*Wh, C1)
    # H-pool: pair rows in registers.
    wmax = wmax.reshape(Hh, 2, Wh, C1)
    pooled1 = jnp.maximum(wmax[:, 0], wmax[:, 1])                # (Hh, Wh, C1)

    # ---------- zero-padded layer-2 input kept entirely in VMEM --------------
    pad2_scr[...] = jnp.zeros_like(pad2_scr)
    pad2_scr[1:1 + Hh, 1:1 + Wh, :] = pooled1

    # ---------- layer 2: conv3x3 + BN + ReLU ---------------------------------
    acc2 = jnp.zeros((Hh * Wh, C2), jnp.float32)
    for dh in range(3):
        for dw in range(3):
            tap = pad2_scr[dh:dh + Hh, dw:dw + Wh, :]            # (Hh, Wh, C1)
            tap = tap.reshape(Hh * Wh, C1).astype(jnp.bfloat16)
            acc2 = acc2 + jnp.dot(tap, w2_ref[dh, dw],
                                  preferred_element_type=jnp.float32)
    y2 = jnp.maximum(acc2 + t2_ref[...], 0.0)                    # (Hh*Wh, C2)

    # ---------- 2x2 max-pool #2 ----------------------------------------------
    # H-pool in registers, W-pool via strided sublane reads.
    y2 = y2.reshape(Hq, 2, Wh, C2)
    rowmax = jnp.maximum(y2[:, 0], y2[:, 1])                     # (Hq, Wh, C2)
    y2_scr[...] = rowmax.reshape(Hq * Wh, C2)
    p2_scr[...] = jnp.maximum(y2_scr[pl.ds(0, Hq * Wq, 2), :],
                              y2_scr[pl.ds(1, Hq * Wq, 2), :])   # (Hq*Wq, C2)

    # ---------- fc over the pooled-width axis (K=Wq, P=3): VPU, not MXU ------
    for k in range(3):
        acc = jnp.zeros((Hq, C2), jnp.float32) + bfc_ref[k]
        for w in range(Wq):
            acc = acc + p2_scr[pl.ds(w, Hq, Wq), :] * wfc_ref[k, w]
        out_ref[0, k, :, :] = acc.astype(out_ref.dtype)


# ----------------------------------------------------------------------------
# Wrapper (parameter folding / layout plumbing only; compute is in the kernel)
# ----------------------------------------------------------------------------
def _fold_bn_into_conv(w_oihw, b, gamma, beta, mean, var, eps=1e-5):
    scale = gamma / jnp.sqrt(var + eps)                          # (C_out,)
    shift = beta + (b - mean) * scale                            # (C_out,)
    w_scaled = w_oihw * scale[:, None, None, None]               # fold BN scale
    # (C_out, C_in, 3, 3) -> (3, 3, C_in, C_out), bf16 for the MXU.
    w_taps = jnp.transpose(w_scaled, (2, 3, 1, 0)).astype(jnp.bfloat16)
    return w_taps, shift.reshape(1, -1).astype(jnp.float32)


def cnn_forward(x_nchw, params):
    # PyTorch inputs are NCHW; the kernel runs NHWC (channels on lanes).
    x = jnp.transpose(x_nchw, (0, 2, 3, 1)).astype(jnp.float32)
    N, H, W, C_in = x.shape
    assert H % 4 == 0 and W % 16 == 0, "kernel layout needs H%4==0, W%16==0"

    w1, t1 = _fold_bn_into_conv(*params["layer1"])
    w2, t2 = _fold_bn_into_conv(*params["layer2"])
    wfc, bfc = params["fc"]
    C1, C2 = w1.shape[-1], w2.shape[-1]
    Hh, Wh = H // 2, W // 2
    Hq, Wq = H // 4, W // 4
    assert wfc.shape == (3, Wq)

    # pad=1 "same" halo only — no im2col blow-up (taps are formed in-kernel).
    x_pad = jnp.pad(x, ((0, 0), (1, 1), (1, 1), (0, 0)))

    kernel = functools.partial(_cnn_fused_kernel, H=H, W=W, C_in=C_in,
                               C1=C1, C2=C2)
    out = pl.pallas_call(
        kernel,
        out_shape=jax.ShapeDtypeStruct((N, 3, Hq, C2), jnp.float32),
        grid_spec=pltpu.PrefetchScalarGridSpec(
            num_scalar_prefetch=0,
            grid=(N,),
            in_specs=[
                pl.BlockSpec((1, H + 2, W + 2, C_in), lambda n: (n, 0, 0, 0)),
                pl.BlockSpec((3, 3, C_in, C1), lambda n: (0, 0, 0, 0)),
                pl.BlockSpec((1, C1), lambda n: (0, 0)),
                pl.BlockSpec((3, 3, C1, C2), lambda n: (0, 0, 0, 0)),
                pl.BlockSpec((1, C2), lambda n: (0, 0)),
                pl.BlockSpec(memory_space=pltpu.MemorySpace.SMEM),   # wfc
                pl.BlockSpec(memory_space=pltpu.MemorySpace.SMEM),   # bfc
            ],
            out_specs=pl.BlockSpec((1, 3, Hq, C2), lambda n: (n, 0, 0, 0)),
            scratch_shapes=[
                pltpu.VMEM((H * W, C1), jnp.float32),            # layer1 act
                pltpu.VMEM((Hh + 2, Wh + 2, C1), jnp.float32),   # padded l2 in
                pltpu.VMEM((Hq * Wh, C2), jnp.float32),          # l2 row-max
                pltpu.VMEM((Hq * Wq, C2), jnp.float32),          # pooled l2
            ],
        ),
        compiler_params=pltpu.CompilerParams(
            dimension_semantics=("parallel",)),
    )(x_pad, w1, t1, w2, t2,
      wfc.astype(jnp.float32), bfc.astype(jnp.float32))

    # kernel output is (N, 3, H//4, C) -> PyTorch's (N, C, H//4, 3)
    return jnp.transpose(out, (0, 3, 2, 1))


# ----------------------------------------------------------------------------
# Pure-JAX reference (correctness check only)
# ----------------------------------------------------------------------------
def reference_forward(x_nchw, params, eps=1e-5):
    def layer(x, w, b, g, be, m, v):
        y = jax.lax.conv_general_dilated(
            x, w, (1, 1), ((1, 1), (1, 1)),
            dimension_numbers=("NCHW", "OIHW", "NCHW"))
        y = y + b[None, :, None, None]
        y = (y - m[None, :, None, None]) / jnp.sqrt(v[None, :, None, None] + eps)
        y = y * g[None, :, None, None] + be[None, :, None, None]
        y = jnp.maximum(y, 0.0)
        return jax.lax.reduce_window(y, -jnp.inf, jax.lax.max,
                                     (1, 1, 2, 2), (1, 1, 2, 2), "VALID")

    x = layer(x_nchw, *params["layer1"])
    x = layer(x, *params["layer2"])
    wfc, bfc = params["fc"]
    return jnp.einsum("nchw,kw->nchk", x, wfc) + bfc


# ----------------------------------------------------------------------------
if __name__ == "__main__":
    key = jax.random.PRNGKey(0)
    ks = jax.random.split(key, 16)

    N, C_in, H, W = 2, 3, 16, 16
    x = jax.random.normal(ks[0], (N, C_in, H, W), jnp.float32)

    def conv_params(kw, kb, c_in, c_out):
        bound = 1.0 / np.sqrt(c_in * 9)
        w = jax.random.uniform(kw, (c_out, c_in, 3, 3), jnp.float32, -bound, bound)
        b = jax.random.uniform(kb, (c_out,), jnp.float32, -bound, bound)
        return w, b

    def bn_params(kg, kb, km, kv, c):
        gamma = 1.0 + 0.1 * jax.random.normal(kg, (c,), jnp.float32)
        beta = 0.1 * jax.random.normal(kb, (c,), jnp.float32)
        mean = 0.1 * jax.random.normal(km, (c,), jnp.float32)
        var = 1.0 + 0.1 * jax.random.uniform(kv, (c,), jnp.float32)
        return gamma, beta, mean, var

    w1, b1 = conv_params(ks[1], ks[2], 3, 32)
    g1, be1, m1, v1 = bn_params(ks[3], ks[4], ks[5], ks[6], 32)
    w2, b2 = conv_params(ks[7], ks[8], 32, 32)
    g2, be2, m2, v2 = bn_params(ks[9], ks[10], ks[11], ks[12], 32)

    Wp = W // 4  # pooled width seen by fc (see TODO(synk) above)
    fb = 1.0 / np.sqrt(Wp)
    wfc = jax.random.uniform(ks[13], (3, Wp), jnp.float32, -fb, fb)
    bfc = jax.random.uniform(ks[14], (3,), jnp.float32, -fb, fb)

    params = {"layer1": (w1, b1, g1, be1, m1, v1),
              "layer2": (w2, b2, g2, be2, m2, v2),
              "fc": (wfc, bfc)}

    out = jax.jit(cnn_forward)(x, params)
    out = jax.block_until_ready(out)

    ref = reference_forward(x, params)
    assert out.shape == (N, 32, H // 4, 3), out.shape
    # bf16 MXU operands (f32 accumulation) -> compare at bf16-level tolerance.
    np.testing.assert_allclose(np.asarray(out), np.asarray(ref),
                               rtol=3e-2, atol=3e-2)
    print("KERNEL_OK")
</pallas_src>

<mosaic_0001>
module attributes {stable_mosaic.version = 11 : i64} {
  func.func @_cnn_fused_kernel(%arg0: i32, %arg1: memref<1x18x18x3xf32, #tpu.memory_space<vmem>>, %arg2: memref<3x3x3x32xbf16, #tpu.memory_space<vmem>>, %arg3: memref<1x32xf32, #tpu.memory_space<vmem>>, %arg4: memref<3x3x32x32xbf16, #tpu.memory_space<vmem>>, %arg5: memref<1x32xf32, #tpu.memory_space<vmem>>, %arg6: memref<3x4xf32, #tpu.memory_space<smem>>, %arg7: memref<3xf32, #tpu.memory_space<smem>>, %arg8: memref<1x3x4x32xf32, #tpu.memory_space<vmem>>, %arg9: memref<256x32xf32, #tpu.memory_space<vmem>>, %arg10: memref<10x10x32xf32, #tpu.memory_space<vmem>>, %arg11: memref<32x32xf32, #tpu.memory_space<vmem>>, %arg12: memref<16x32xf32, #tpu.memory_space<vmem>>) attributes {dimension_semantics = [#tpu.dimension_semantics<parallel>], iteration_bounds = array<i64: 2>, scalar_prefetch = 0 : i64, scratch_operands = 4 : i64, tpu.core_type = #tpu.core_type<tc>, window_params = [{transform_indices = @transform_0, window_bounds = array<i64: 1, 18, 18, 3>}, {pipeline_mode = #tpu.pipeline_mode<synchronous>, transform_indices = @transform_1, window_bounds = array<i64: 3, 3, 3, 32>}, {pipeline_mode = #tpu.pipeline_mode<synchronous>, transform_indices = @transform_2, window_bounds = array<i64: 1, 32>}, {pipeline_mode = #tpu.pipeline_mode<synchronous>, transform_indices = @transform_3, window_bounds = array<i64: 3, 3, 32, 32>}, {pipeline_mode = #tpu.pipeline_mode<synchronous>, transform_indices = @transform_4, window_bounds = array<i64: 1, 32>}, {transform_indices = @transform_5, window_bounds = array<i64: 3, 4>}, {transform_indices = @transform_6, window_bounds = array<i64: 3>}, {transform_indices = @transform_7, window_bounds = array<i64: 1, 3, 4, 32>}]} {
    %cst = arith.constant 0.000000e+00 : f32
    %0 = vector.broadcast %cst : f32 to vector<256x32xf32>
    %c0 = arith.constant 0 : index
    %c0_0 = arith.constant 0 : index
    %c0_1 = arith.constant 0 : index
    %c0_2 = arith.constant 0 : index
    %1 = vector.load %arg1[%c0, %c0_0, %c0_1, %c0_2] : memref<1x18x18x3xf32, #tpu.memory_space<vmem>>, vector<1x16x16x3xf32>
    %2 = vector.shape_cast %1 : vector<1x16x16x3xf32> to vector<16x16x3xf32>
    %3 = vector.shape_cast %2 : vector<16x16x3xf32> to vector<256x3xf32>
    %4 = arith.truncf %3 : vector<256x3xf32> to vector<256x3xbf16>
    %c0_3 = arith.constant 0 : index
    %c0_4 = arith.constant 0 : index
    %c0_5 = arith.constant 0 : index
    %c0_6 = arith.constant 0 : index
    %5 = vector.load %arg2[%c0_3, %c0_4, %c0_5, %c0_6] : memref<3x3x3x32xbf16, #tpu.memory_space<vmem>>, vector<1x1x3x32xbf16>
    %6 = vector.shape_cast %5 : vector<1x1x3x32xbf16> to vector<3x32xbf16>
    %cst_7 = arith.constant dense<0.000000e+00> : vector<256x32xf32>
    %7 = tpu.matmul %4, %6, %cst_7 {dimension_numbers = #tpu.dot_dimension_numbers<[1], [0], [0], [1], [0, 0, 1, 1], [], []>} : vector<256x3xbf16>, vector<3x32xbf16>, vector<256x32xf32> -> vector<256x32xf32>
    %8 = arith.addf %0, %7 : vector<256x32xf32>
    %c0_8 = arith.constant 0 : index
    %c0_9 = arith.constant 0 : index
    %c1 = arith.constant 1 : index
    %c0_10 = arith.constant 0 : index
    %9 = vector.load %arg1[%c0_8, %c0_9, %c1, %c0_10] : memref<1x18x18x3xf32, #tpu.memory_space<vmem>>, vector<1x16x16x3xf32>
    %10 = vector.shape_cast %9 : vector<1x16x16x3xf32> to vector<16x16x3xf32>
    %11 = vector.shape_cast %10 : vector<16x16x3xf32> to vector<256x3xf32>
    %12 = arith.truncf %11 : vector<256x3xf32> to vector<256x3xbf16>
    %c0_11 = arith.constant 0 : index
    %c1_12 = arith.constant 1 : index
    %c0_13 = arith.constant 0 : index
    %c0_14 = arith.constant 0 : index
    %13 = vector.load %arg2[%c0_11, %c1_12, %c0_13, %c0_14] : memref<3x3x3x32xbf16, #tpu.memory_space<vmem>>, vector<1x1x3x32xbf16>
    %14 = vector.shape_cast %13 : vector<1x1x3x32xbf16> to vector<3x32xbf16>
    %cst_15 = arith.constant dense<0.000000e+00> : vector<256x32xf32>
    %15 = tpu.matmul %12, %14, %cst_15 {dimension_numbers = #tpu.dot_dimension_numbers<[1], [0], [0], [1], [0, 0, 1, 1], [], []>} : vector<256x3xbf16>, vector<3x32xbf16>, vector<256x32xf32> -> vector<256x32xf32>
    %16 = arith.addf %8, %15 : vector<256x32xf32>
    %c0_16 = arith.constant 0 : index
    %c0_17 = arith.constant 0 : index
    %c2 = arith.constant 2 : index
    %c0_18 = arith.constant 0 : index
    %17 = vector.load %arg1[%c0_16, %c0_17, %c2, %c0_18] : memref<1x18x18x3xf32, #tpu.memory_space<vmem>>, vector<1x16x16x3xf32>
    %18 = vector.shape_cast %17 : vector<1x16x16x3xf32> to vector<16x16x3xf32>
    %19 = vector.shape_cast %18 : vector<16x16x3xf32> to vector<256x3xf32>
    %20 = arith.truncf %19 : vector<256x3xf32> to vector<256x3xbf16>
    %c0_19 = arith.constant 0 : index
    %c2_20 = arith.constant 2 : index
    %c0_21 = arith.constant 0 : index
    %c0_22 = arith.constant 0 : index
    %21 = vector.load %arg2[%c0_19, %c2_20, %c0_21, %c0_22] : memref<3x3x3x32xbf16, #tpu.memory_space<vmem>>, vector<1x1x3x32xbf16>
    %22 = vector.shape_cast %21 : vector<1x1x3x32xbf16> to vector<3x32xbf16>
    %cst_23 = arith.constant dense<0.000000e+00> : vector<256x32xf32>
    %23 = tpu.matmul %20, %22, %cst_23 {dimension_numbers = #tpu.dot_dimension_numbers<[1], [0], [0], [1], [0, 0, 1, 1], [], []>} : vector<256x3xbf16>, vector<3x32xbf16>, vector<256x32xf32> -> vector<256x32xf32>
    %24 = arith.addf %16, %23 : vector<256x32xf32>
    %c0_24 = arith.constant 0 : index
    %c1_25 = arith.constant 1 : index
    %c0_26 = arith.constant 0 : index
    %c0_27 = arith.constant 0 : index
    %25 = vector.load %arg1[%c0_24, %c1_25, %c0_26, %c0_27] : memref<1x18x18x3xf32, #tpu.memory_space<vmem>>, vector<1x16x16x3xf32>
    %26 = vector.shape_cast %25 : vector<1x16x16x3xf32> to vector<16x16x3xf32>
    %27 = vector.shape_cast %26 : vector<16x16x3xf32> to vector<256x3xf32>
    %28 = arith.truncf %27 : vector<256x3xf32> to vector<256x3xbf16>
    %c1_28 = arith.constant 1 : index
    %c0_29 = arith.constant 0 : index
    %c0_30 = arith.constant 0 : index
    %c0_31 = arith.constant 0 : index
    %29 = vector.load %arg2[%c1_28, %c0_29, %c0_30, %c0_31] : memref<3x3x3x32xbf16, #tpu.memory_space<vmem>>, vector<1x1x3x32xbf16>
    %30 = vector.shape_cast %29 : vector<1x1x3x32xbf16> to vector<3x32xbf16>
    %cst_32 = arith.constant dense<0.000000e+00> : vector<256x32xf32>
    %31 = tpu.matmul %28, %30, %cst_32 {dimension_numbers = #tpu.dot_dimension_numbers<[1], [0], [0], [1], [0, 0, 1, 1], [], []>} : vector<256x3xbf16>, vector<3x32xbf16>, vector<256x32xf32> -> vector<256x32xf32>
    %32 = arith.addf %24, %31 : vector<256x32xf32>
    %c0_33 = arith.constant 0 : index
    %c1_34 = arith.constant 1 : index
    %c1_35 = arith.constant 1 : index
    %c0_36 = arith.constant 0 : index
    %33 = vector.load %arg1[%c0_33, %c1_34, %c1_35, %c0_36] : memref<1x18x18x3xf32, #tpu.memory_space<vmem>>, vector<1x16x16x3xf32>
    %34 = vector.shape_cast %33 : vector<1x16x16x3xf32> to vector<16x16x3xf32>
    %35 = vector.shape_cast %34 : vector<16x16x3xf32> to vector<256x3xf32>
    %36 = arith.truncf %35 : vector<256x3xf32> to vector<256x3xbf16>
    %c1_37 = arith.constant 1 : index
    %c1_38 = arith.constant 1 : index
    %c0_39 = arith.constant 0 : index
    %c0_40 = arith.constant 0 : index
    %37 = vector.load %arg2[%c1_37, %c1_38, %c0_39, %c0_40] : memref<3x3x3x32xbf16, #tpu.memory_space<vmem>>, vector<1x1x3x32xbf16>
    %38 = vector.shape_cast %37 : vector<1x1x3x32xbf16> to vector<3x32xbf16>
    %cst_41 = arith.constant dense<0.000000e+00> : vector<256x32xf32>
    %39 = tpu.matmul %36, %38, %cst_41 {dimension_numbers = #tpu.dot_dimension_numbers<[1], [0], [0], [1], [0, 0, 1, 1], [], []>} : vector<256x3xbf16>, vector<3x32xbf16>, vector<256x32xf32> -> vector<256x32xf32>
    %40 = arith.addf %32, %39 : vector<256x32xf32>
    %c0_42 = arith.constant 0 : index
    %c1_43 = arith.constant 1 : index
    %c2_44 = arith.constant 2 : index
    %c0_45 = arith.constant 0 : index
    %41 = vector.load %arg1[%c0_42, %c1_43, %c2_44, %c0_45] : memref<1x18x18x3xf32, #tpu.memory_space<vmem>>, vector<1x16x16x3xf32>
    %42 = vector.shape_cast %41 : vector<1x16x16x3xf32> to vector<16x16x3xf32>
    %43 = vector.shape_cast %42 : vector<16x16x3xf32> to vector<256x3xf32>
    %44 = arith.truncf %43 : vector<256x3xf32> to vector<256x3xbf16>
    %c1_46 = arith.constant 1 : index
    %c2_47 = arith.constant 2 : index
    %c0_48 = arith.constant 0 : index
    %c0_49 = arith.constant 0 : index
    %45 = vector.load %arg2[%c1_46, %c2_47, %c0_48, %c0_49] : memref<3x3x3x32xbf16, #tpu.memory_space<vmem>>, vector<1x1x3x32xbf16>
    %46 = vector.shape_cast %45 : vector<1x1x3x32xbf16> to vector<3x32xbf16>
    %cst_50 = arith.constant dense<0.000000e+00> : vector<256x32xf32>
    %47 = tpu.matmul %44, %46, %cst_50 {dimension_numbers = #tpu.dot_dimension_numbers<[1], [0], [0], [1], [0, 0, 1, 1], [], []>} : vector<256x3xbf16>, vector<3x32xbf16>, vector<256x32xf32> -> vector<256x32xf32>
    %48 = arith.addf %40, %47 : vector<256x32xf32>
    %c0_51 = arith.constant 0 : index
    %c2_52 = arith.constant 2 : index
    %c0_53 = arith.constant 0 : index
    %c0_54 = arith.constant 0 : index
    %49 = vector.load %arg1[%c0_51, %c2_52, %c0_53, %c0_54] : memref<1x18x18x3xf32, #tpu.memory_space<vmem>>, vector<1x16x16x3xf32>
    %50 = vector.shape_cast %49 : vector<1x16x16x3xf32> to vector<16x16x3xf32>
    %51 = vector.shape_cast %50 : vector<16x16x3xf32> to vector<256x3xf32>
    %52 = arith.truncf %51 : vector<256x3xf32> to vector<256x3xbf16>
    %c2_55 = arith.constant 2 : index
    %c0_56 = arith.constant 0 : index
    %c0_57 = arith.constant 0 : index
    %c0_58 = arith.constant 0 : index
    %53 = vector.load %arg2[%c2_55, %c0_56, %c0_57, %c0_58] : memref<3x3x3x32xbf16, #tpu.memory_space<vmem>>, vector<1x1x3x32xbf16>
    %54 = vector.shape_cast %53 : vector<1x1x3x32xbf16> to vector<3x32xbf16>
    %cst_59 = arith.constant dense<0.000000e+00> : vector<256x32xf32>
    %55 = tpu.matmul %52, %54, %cst_59 {dimension_numbers = #tpu.dot_dimension_numbers<[1], [0], [0], [1], [0, 0, 1, 1], [], []>} : vector<256x3xbf16>, vector<3x32xbf16>, vector<256x32xf32> -> vector<256x32xf32>
    %56 = arith.addf %48, %55 : vector<256x32xf32>
    %c0_60 = arith.constant 0 : index
    %c2_61 = arith.constant 2 : index
    %c1_62 = arith.constant 1 : index
    %c0_63 = arith.constant 0 : index
    %57 = vector.load %arg1[%c0_60, %c2_61, %c1_62, %c0_63] : memref<1x18x18x3xf32, #tpu.memory_space<vmem>>, vector<1x16x16x3xf32>
    %58 = vector.shape_cast %57 : vector<1x16x16x3xf32> to vector<16x16x3xf32>
    %59 = vector.shape_cast %58 : vector<16x16x3xf32> to vector<256x3xf32>
    %60 = arith.truncf %59 : vector<256x3xf32> to vector<256x3xbf16>
    %c2_64 = arith.constant 2 : index
    %c1_65 = arith.constant 1 : index
    %c0_66 = arith.constant 0 : index
    %c0_67 = arith.constant 0 : index
    %61 = vector.load %arg2[%c2_64, %c1_65, %c0_66, %c0_67] : memref<3x3x3x32xbf16, #tpu.memory_space<vmem>>, vector<1x1x3x32xbf16>
    %62 = vector.shape_cast %61 : vector<1x1x3x32xbf16> to vector<3x32xbf16>
    %cst_68 = arith.constant dense<0.000000e+00> : vector<256x32xf32>
    %63 = tpu.matmul %60, %62, %cst_68 {dimension_numbers = #tpu.dot_dimension_numbers<[1], [0], [0], [1], [0, 0, 1, 1], [], []>} : vector<256x3xbf16>, vector<3x32xbf16>, vector<256x32xf32> -> vector<256x32xf32>
    %64 = arith.addf %56, %63 : vector<256x32xf32>
    %c0_69 = arith.constant 0 : index
    %c2_70 = arith.constant 2 : index
    %c2_71 = arith.constant 2 : index
    %c0_72 = arith.constant 0 : index
    %65 = vector.load %arg1[%c0_69, %c2_70, %c2_71, %c0_72] : memref<1x18x18x3xf32, #tpu.memory_space<vmem>>, vector<1x16x16x3xf32>
    %66 = vector.shape_cast %65 : vector<1x16x16x3xf32> to vector<16x16x3xf32>
    %67 = vector.shape_cast %66 : vector<16x16x3xf32> to vector<256x3xf32>
    %68 = arith.truncf %67 : vector<256x3xf32> to vector<256x3xbf16>
    %c2_73 = arith.constant 2 : index
    %c2_74 = arith.constant 2 : index
    %c0_75 = arith.constant 0 : index
    %c0_76 = arith.constant 0 : index
    %69 = vector.load %arg2[%c2_73, %c2_74, %c0_75, %c0_76] : memref<3x3x3x32xbf16, #tpu.memory_space<vmem>>, vector<1x1x3x32xbf16>
    %70 = vector.shape_cast %69 : vector<1x1x3x32xbf16> to vector<3x32xbf16>
    %cst_77 = arith.constant dense<0.000000e+00> : vector<256x32xf32>
    %71 = tpu.matmul %68, %70, %cst_77 {dimension_numbers = #tpu.dot_dimension_numbers<[1], [0], [0], [1], [0, 0, 1, 1], [], []>} : vector<256x3xbf16>, vector<3x32xbf16>, vector<256x32xf32> -> vector<256x32xf32>
    %72 = arith.addf %64, %71 : vector<256x32xf32>
    %c0_78 = arith.constant 0 : index
    %c0_79 = arith.constant 0 : index
    %73 = vector.load %arg3[%c0_78, %c0_79] : memref<1x32xf32, #tpu.memory_space<vmem>>, vector<1x32xf32>
    %74 = vector.broadcast %73 : vector<1x32xf32> to vector<256x32xf32>
    %75 = arith.addf %72, %74 : vector<256x32xf32>
    %cst_80 = arith.constant 0.000000e+00 : f32
    %76 = vector.broadcast %cst_80 : f32 to vector<256x32xf32>
    %77 = arith.maximumf %75, %76 : vector<256x32xf32>
    %c0_81 = arith.constant 0 : index
    %c0_82 = arith.constant 0 : index
    %78 = vector.load %arg9[%c0_81, %c0_82] : memref<256x32xf32, #tpu.memory_space<vmem>>, vector<256x32xf32>
    tpu.vector_store %arg9[%c0_81, %c0_82], %77 {strides = array<i32>} : memref<256x32xf32, #tpu.memory_space<vmem>>, vector<256x32xf32>,
    %c0_83 = arith.constant 0 : index
    %c0_84 = arith.constant 0 : index
    %79 = tpu.strided_load %arg9[%c0_83, %c0_84] {strides = array<i32: 2, 1>} : memref<256x32xf32, #tpu.memory_space<vmem>>, vector<128x32xf32>
    %c1_85 = arith.constant 1 : index
    %c0_86 = arith.constant 0 : index
    %80 = tpu.strided_load %arg9[%c1_85, %c0_86] {strides = array<i32: 2, 1>} : memref<256x32xf32, #tpu.memory_space<vmem>>, vector<128x32xf32>
    %81 = arith.maximumf %79, %80 : vector<128x32xf32>
    %82 = vector.shape_cast %81 : vector<128x32xf32> to vector<8x2x8x32xf32>
    %83 = vector.extract_strided_slice %82 {offsets = [0, 0, 0, 0], sizes = [8, 1, 8, 32], strides = [1, 1, 1, 1]} : vector<8x2x8x32xf32> to vector<8x1x8x32xf32>
    %84 = vector.shape_cast %83 : vector<8x1x8x32xf32> to vector<8x8x32xf32>
    %85 = vector.extract_strided_slice %82 {offsets = [0, 1, 0, 0], sizes = [8, 1, 8, 32], strides = [1, 1, 1, 1]} : vector<8x2x8x32xf32> to vector<8x1x8x32xf32>
    %86 = vector.shape_cast %85 : vector<8x1x8x32xf32> to vector<8x8x32xf32>
    %87 = arith.maximumf %84, %86 : vector<8x8x32xf32>
    %cst_87 = arith.constant 0.000000e+00 : f32
    %88 = vector.broadcast %cst_87 : f32 to vector<10x10x32xf32>
    %c0_88 = arith.constant 0 : index
    %c0_89 = arith.constant 0 : index
    %c0_90 = arith.constant 0 : index
    %89 = vector.load %arg10[%c0_88, %c0_89, %c0_90] : memref<10x10x32xf32, #tpu.memory_space<vmem>>, vector<10x10x32xf32>
    tpu.vector_store %arg10[%c0_88, %c0_89, %c0_90], %88 {strides = array<i32>} : memref<10x10x32xf32, #tpu.memory_space<vmem>>, vector<10x10x32xf32>,
    %c1_91 = arith.constant 1 : index
    %c1_92 = arith.constant 1 : index
    %c0_93 = arith.constant 0 : index
    %90 = vector.load %arg10[%c1_91, %c1_92, %c0_93] : memref<10x10x32xf32, #tpu.memory_space<vmem>>, vector<8x8x32xf32>
    tpu.vector_store %arg10[%c1_91, %c1_92, %c0_93], %87 {strides = array<i32>} : memref<10x10x32xf32, #tpu.memory_space<vmem>>, vector<8x8x32xf32>,
    %cst_94 = arith.constant 0.000000e+00 : f32
    %91 = vector.broadcast %cst_94 : f32 to vector<64x32xf32>
    %c0_95 = arith.constant 0 : index
    %c0_96 = arith.constant 0 : index
    %c0_97 = arith.constant 0 : index
    %92 = vector.load %arg10[%c0_95, %c0_96, %c0_97] : memref<10x10x32xf32, #tpu.memory_space<vmem>>, vector<8x8x32xf32>
    %93 = vector.shape_cast %92 : vector<8x8x32xf32> to vector<64x32xf32>
    %94 = arith.truncf %93 : vector<64x32xf32> to vector<64x32xbf16>
    %c0_98 = arith.constant 0 : index
    %c0_99 = arith.constant 0 : index
    %c0_100 = arith.constant 0 : index
    %c0_101 = arith.constant 0 : index
    %95 = vector.load %arg4[%c0_98, %c0_99, %c0_100, %c0_101] : memref<3x3x32x32xbf16, #tpu.memory_space<vmem>>, vector<1x1x32x32xbf16>
    %96 = vector.shape_cast %95 : vector<1x1x32x32xbf16> to vector<32x32xbf16>
    %cst_102 = arith.constant dense<0.000000e+00> : vector<64x32xf32>
    %97 = tpu.matmul %94, %96, %cst_102 {dimension_numbers = #tpu.dot_dimension_numbers<[1], [0], [0], [1], [0, 0, 1, 1], [], []>} : vector<64x32xbf16>, vector<32x32xbf16>, vector<64x32xf32> -> vector<64x32xf32>
    %98 = arith.addf %91, %97 : vector<64x32xf32>
    %c0_103 = arith.constant 0 : index
    %c1_104 = arith.constant 1 : index
    %c0_105 = arith.constant 0 : index
    %99 = vector.load %arg10[%c0_103, %c1_104, %c0_105] : memref<10x10x32xf32, #tpu.memory_space<vmem>>, vector<8x8x32xf32>
    %100 = vector.shape_cast %99 : vector<8x8x32xf32> to vector<64x32xf32>
    %101 = arith.truncf %100 : vector<64x32xf32> to vector<64x32xbf16>
    %c0_106 = arith.constant 0 : index
    %c1_107 = arith.constant 1 : index
    %c0_108 = arith.constant 0 : index
    %c0_109 = arith.constant 0 : index
    %102 = vector.load %arg4[%c0_106, %c1_107, %c0_108, %c0_109] : memref<3x3x32x32xbf16, #tpu.memory_space<vmem>>, vector<1x1x32x32xbf16>
    %103 = vector.shape_cast %102 : vector<1x1x32x32xbf16> to vector<32x32xbf16>
    %cst_110 = arith.constant dense<0.000000e+00> : vector<64x32xf32>
    %104 = tpu.matmul %101, %103, %cst_110 {dimension_numbers = #tpu.dot_dimension_numbers<[1], [0], [0], [1], [0, 0, 1, 1], [], []>} : vector<64x32xbf16>, vector<32x32xbf16>, vector<64x32xf32> -> vector<64x32xf32>
    %105 = arith.addf %98, %104 : vector<64x32xf32>
    %c0_111 = arith.constant 0 : index
    %c2_112 = arith.constant 2 : index
    %c0_113 = arith.constant 0 : index
    %106 = vector.load %arg10[%c0_111, %c2_112, %c0_113] : memref<10x10x32xf32, #tpu.memory_space<vmem>>, vector<8x8x32xf32>
    %107 = vector.shape_cast %106 : vector<8x8x32xf32> to vector<64x32xf32>
    %108 = arith.truncf %107 : vector<64x32xf32> to vector<64x32xbf16>
    %c0_114 = arith.constant 0 : index
    %c2_115 = arith.constant 2 : index
    %c0_116 = arith.constant 0 : index
    %c0_117 = arith.constant 0 : index
    %109 = vector.load %arg4[%c0_114, %c2_115, %c0_116, %c0_117] : memref<3x3x32x32xbf16, #tpu.memory_space<vmem>>, vector<1x1x32x32xbf16>
    %110 = vector.shape_cast %109 : vector<1x1x32x32xbf16> to vector<32x32xbf16>
    %cst_118 = arith.constant dense<0.000000e+00> : vector<64x32xf32>
    %111 = tpu.matmul %108, %110, %cst_118 {dimension_numbers = #tpu.dot_dimension_numbers<[1], [0], [0], [1], [0, 0, 1, 1], [], []>} : vector<64x32xbf16>, vector<32x32xbf16>, vector<64x32xf32> -> vector<64x32xf32>
    %112 = arith.addf %105, %111 : vector<64x32xf32>
    %c1_119 = arith.constant 1 : index
    %c0_120 = arith.constant 0 : index
    %c0_121 = arith.constant 0 : index
    %113 = vector.load %arg10[%c1_119, %c0_120, %c0_121] : memref<10x10x32xf32, #tpu.memory_space<vmem>>, vector<8x8x32xf32>
    %114 = vector.shape_cast %113 : vector<8x8x32xf32> to vector<64x32xf32>
    %115 = arith.truncf %114 : vector<64x32xf32> to vector<64x32xbf16>
    %c1_122 = arith.constant 1 : index
    %c0_123 = arith.constant 0 : index
    %c0_124 = arith.constant 0 : index
    %c0_125 = arith.constant 0 : index
    %116 = vector.load %arg4[%c1_122, %c0_123, %c0_124, %c0_125] : memref<3x3x32x32xbf16, #tpu.memory_space<vmem>>, vector<1x1x32x32xbf16>
    %117 = vector.shape_cast %116 : vector<1x1x32x32xbf16> to vector<32x32xbf16>
    %cst_126 = arith.constant dense<0.000000e+00> : vector<64x32xf32>
    %118 = tpu.matmul %115, %117, %cst_126 {dimension_numbers = #tpu.dot_dimension_numbers<[1], [0], [0], [1], [0, 0, 1, 1], [], []>} : vector<64x32xbf16>, vector<32x32xbf16>, vector<64x32xf32> -> vector<64x32xf32>
    %119 = arith.addf %112, %118 : vector<64x32xf32>
    %c1_127 = arith.constant 1 : index
    %c1_128 = arith.constant 1 : index
    %c0_129 = arith.constant 0 : index
    %120 = vector.load %arg10[%c1_127, %c1_128, %c0_129] : memref<10x10x32xf32, #tpu.memory_space<vmem>>, vector<8x8x32xf32>
    %121 = vector.shape_cast %120 : vector<8x8x32xf32> to vector<64x32xf32>
    %122 = arith.truncf %121 : vector<64x32xf32> to vector<64x32xbf16>
    %c1_130 = arith.constant 1 : index
    %c1_131 = arith.constant 1 : index
    %c0_132 = arith.constant 0 : index
    %c0_133 = arith.constant 0 : index
    %123 = vector.load %arg4[%c1_130, %c1_131, %c0_132, %c0_133] : memref<3x3x32x32xbf16, #tpu.memory_space<vmem>>, vector<1x1x32x32xbf16>
    %124 = vector.shape_cast %123 : vector<1x1x32x32xbf16> to vector<32x32xbf16>
    %cst_134 = arith.constant dense<0.000000e+00> : vector<64x32xf32>
    %125 = tpu.matmul %122, %124, %cst_134 {dimension_numbers = #tpu.dot_dimension_numbers<[1], [0], [0], [1], [0, 0, 1, 1], [], []>} : vector<64x32xbf16>, vector<32x32xbf16>, vector<64x32xf32> -> vector<64x32xf32>
    %126 = arith.addf %119, %125 : vector<64x32xf32>
    %c1_135 = arith.constant 1 : index
    %c2_136 = arith.constant 2 : index
    %c0_137 = arith.constant 0 : index
    %127 = vector.load %arg10[%c1_135, %c2_136, %c0_137] : memref<10x10x32xf32, #tpu.memory_space<vmem>>, vector<8x8x32xf32>
    %128 = vector.shape_cast %127 : vector<8x8x32xf32> to vector<64x32xf32>
    %129 = arith.truncf %128 : vector<64x32xf32> to vector<64x32xbf16>
    %c1_138 = arith.constant 1 : index
    %c2_139 = arith.constant 2 : index
    %c0_140 = arith.constant 0 : index
    %c0_141 = arith.constant 0 : index
    %130 = vector.load %arg4[%c1_138, %c2_139, %c0_140, %c0_141] : memref<3x3x32x32xbf16, #tpu.memory_space<vmem>>, vector<1x1x32x32xbf16>
    %131 = vector.shape_cast %130 : vector<1x1x32x32xbf16> to vector<32x32xbf16>
    %cst_142 = arith.constant dense<0.000000e+00> : vector<64x32xf32>
    %132 = tpu.matmul %129, %131, %cst_142 {dimension_numbers = #tpu.dot_dimension_numbers<[1], [0], [0], [1], [0, 0, 1, 1], [], []>} : vector<64x32xbf16>, vector<32x32xbf16>, vector<64x32xf32> -> vector<64x32xf32>
    %133 = arith.addf %126, %132 : vector<64x32xf32>
    %c2_143 = arith.constant 2 : index
    %c0_144 = arith.constant 0 : index
    %c0_145 = arith.constant 0 : index
    %134 = vector.load %arg10[%c2_143, %c0_144, %c0_145] : memref<10x10x32xf32, #tpu.memory_space<vmem>>, vector<8x8x32xf32>
    %135 = vector.shape_cast %134 : vector<8x8x32xf32> to vector<64x32xf32>
    %136 = arith.truncf %135 : vector<64x32xf32> to vector<64x32xbf16>
    %c2_146 = arith.constant 2 : index
    %c0_147 = arith.constant 0 : index
    %c0_148 = arith.constant 0 : index
    %c0_149 = arith.constant 0 : index
    %137 = vector.load %arg4[%c2_146, %c0_147, %c0_148, %c0_149] : memref<3x3x32x32xbf16, #tpu.memory_space<vmem>>, vector<1x1x32x32xbf16>
    %138 = vector.shape_cast %137 : vector<1x1x32x32xbf16> to vector<32x32xbf16>
    %cst_150 = arith.constant dense<0.000000e+00> : vector<64x32xf32>
    %139 = tpu.matmul %136, %138, %cst_150 {dimension_numbers = #tpu.dot_dimension_numbers<[1], [0], [0], [1], [0, 0, 1, 1], [], []>} : vector<64x32xbf16>, vector<32x32xbf16>, vector<64x32xf32> -> vector<64x32xf32>
    %140 = arith.addf %133, %139 : vector<64x32xf32>
    %c2_151 = arith.constant 2 : index
    %c1_152 = arith.constant 1 : index
    %c0_153 = arith.constant 0 : index
    %141 = vector.load %arg10[%c2_151, %c1_152, %c0_153] : memref<10x10x32xf32, #tpu.memory_space<vmem>>, vector<8x8x32xf32>
    %142 = vector.shape_cast %141 : vector<8x8x32xf32> to vector<64x32xf32>
    %143 = arith.truncf %142 : vector<64x32xf32> to vector<64x32xbf16>
    %c2_154 = arith.constant 2 : index
    %c1_155 = arith.constant 1 : index
    %c0_156 = arith.constant 0 : index
    %c0_157 = arith.constant 0 : index
    %144 = vector.load %arg4[%c2_154, %c1_155, %c0_156, %c0_157] : memref<3x3x32x32xbf16, #tpu.memory_space<vmem>>, vector<1x1x32x32xbf16>
    %145 = vector.shape_cast %144 : vector<1x1x32x32xbf16> to vector<32x32xbf16>
    %cst_158 = arith.constant dense<0.000000e+00> : vector<64x32xf32>
    %146 = tpu.matmul %143, %145, %cst_158 {dimension_numbers = #tpu.dot_dimension_numbers<[1], [0], [0], [1], [0, 0, 1, 1], [], []>} : vector<64x32xbf16>, vector<32x32xbf16>, vector<64x32xf32> -> vector<64x32xf32>
    %147 = arith.addf %140, %146 : vector<64x32xf32>
    %c2_159 = arith.constant 2 : index
    %c2_160 = arith.constant 2 : index
    %c0_161 = arith.constant 0 : index
    %148 = vector.load %arg10[%c2_159, %c2_160, %c0_161] : memref<10x10x32xf32, #tpu.memory_space<vmem>>, vector<8x8x32xf32>
    %149 = vector.shape_cast %148 : vector<8x8x32xf32> to vector<64x32xf32>
    %150 = arith.truncf %149 : vector<64x32xf32> to vector<64x32xbf16>
    %c2_162 = arith.constant 2 : index
    %c2_163 = arith.constant 2 : index
    %c0_164 = arith.constant 0 : index
    %c0_165 = arith.constant 0 : index
    %151 = vector.load %arg4[%c2_162, %c2_163, %c0_164, %c0_165] : memref<3x3x32x32xbf16, #tpu.memory_space<vmem>>, vector<1x1x32x32xbf16>
    %152 = vector.shape_cast %151 : vector<1x1x32x32xbf16> to vector<32x32xbf16>
    %cst_166 = arith.constant dense<0.000000e+00> : vector<64x32xf32>
    %153 = tpu.matmul %150, %152, %cst_166 {dimension_numbers = #tpu.dot_dimension_numbers<[1], [0], [0], [1], [0, 0, 1, 1], [], []>} : vector<64x32xbf16>, vector<32x32xbf16>, vector<64x32xf32> -> vector<64x32xf32>
    %154 = arith.addf %147, %153 : vector<64x32xf32>
    %c0_167 = arith.constant 0 : index
    %c0_168 = arith.constant 0 : index
    %155 = vector.load %arg5[%c0_167, %c0_168] : memref<1x32xf32, #tpu.memory_space<vmem>>, vector<1x32xf32>
    %156 = vector.broadcast %155 : vector<1x32xf32> to vector<64x32xf32>
    %157 = arith.addf %154, %156 : vector<64x32xf32>
    %cst_169 = arith.constant 0.000000e+00 : f32
    %158 = vector.broadcast %cst_169 : f32 to vector<64x32xf32>
    %159 = arith.maximumf %157, %158 : vector<64x32xf32>
    %160 = vector.shape_cast %159 : vector<64x32xf32> to vector<4x2x8x32xf32>
    %161 = vector.extract_strided_slice %160 {offsets = [0, 0, 0, 0], sizes = [4, 1, 8, 32], strides = [1, 1, 1, 1]} : vector<4x2x8x32xf32> to vector<4x1x8x32xf32>
    %162 = vector.shape_cast %161 : vector<4x1x8x32xf32> to vector<4x8x32xf32>
    %163 = vector.extract_strided_slice %160 {offsets = [0, 1, 0, 0], sizes = [4, 1, 8, 32], strides = [1, 1, 1, 1]} : vector<4x2x8x32xf32> to vector<4x1x8x32xf32>
    %164 = vector.shape_cast %163 : vector<4x1x8x32xf32> to vector<4x8x32xf32>
    %165 = arith.maximumf %162, %164 : vector<4x8x32xf32>
    %166 = vector.shape_cast %165 : vector<4x8x32xf32> to vector<32x32xf32>
    %c0_170 = arith.constant 0 : index
    %c0_171 = arith.constant 0 : index
    %167 = vector.load %arg11[%c0_170, %c0_171] : memref<32x32xf32, #tpu.memory_space<vmem>>, vector<32x32xf32>
    tpu.vector_store %arg11[%c0_170, %c0_171], %166 {strides = array<i32>} : memref<32x32xf32, #tpu.memory_space<vmem>>, vector<32x32xf32>,
    %c0_172 = arith.constant 0 : index
    %c0_173 = arith.constant 0 : index
    %168 = tpu.strided_load %arg11[%c0_172, %c0_173] {strides = array<i32: 2, 1>} : memref<32x32xf32, #tpu.memory_space<vmem>>, vector<16x32xf32>
    %c1_174 = arith.constant 1 : index
    %c0_175 = arith.constant 0 : index
    %169 = tpu.strided_load %arg11[%c1_174, %c0_175] {strides = array<i32: 2, 1>} : memref<32x32xf32, #tpu.memory_space<vmem>>, vector<16x32xf32>
    %170 = arith.maximumf %168, %169 : vector<16x32xf32>
    %c0_176 = arith.constant 0 : index
    %c0_177 = arith.constant 0 : index
    %171 = vector.load %arg12[%c0_176, %c0_177] : memref<16x32xf32, #tpu.memory_space<vmem>>, vector<16x32xf32>
    tpu.vector_store %arg12[%c0_176, %c0_177], %170 {strides = array<i32>} : memref<16x32xf32, #tpu.memory_space<vmem>>, vector<16x32xf32>,
    %cst_178 = arith.constant 0.000000e+00 : f32
    %172 = vector.broadcast %cst_178 : f32 to vector<4x32xf32>
    %c0_179 = arith.constant 0 : index
    %173 = memref.load %arg7[%c0_179] : memref<3xf32, #tpu.memory_space<smem>>
    %174 = vector.broadcast %173 : f32 to vector<4x32xf32>
    %175 = arith.addf %172, %174 : vector<4x32xf32>
    %c0_180 = arith.constant 0 : index
    %c0_181 = arith.constant 0 : index
    %176 = tpu.strided_load %arg12[%c0_180, %c0_181] {strides = array<i32: 4, 1>} : memref<16x32xf32, #tpu.memory_space<vmem>>, vector<4x32xf32>
    %c0_182 = arith.constant 0 : index
    %c0_183 = arith.constant 0 : index
    %177 = memref.load %arg6[%c0_182, %c0_183] : memref<3x4xf32, #tpu.memory_space<smem>>
    %178 = vector.broadcast %177 : f32 to vector<4x32xf32>
    %179 = arith.mulf %176, %178 : vector<4x32xf32>
    %180 = arith.addf %175, %179 : vector<4x32xf32>
    %c1_184 = arith.constant 1 : index
    %c0_185 = arith.constant 0 : index
    %181 = tpu.strided_load %arg12[%c1_184, %c0_185] {strides = array<i32: 4, 1>} : memref<16x32xf32, #tpu.memory_space<vmem>>, vector<4x32xf32>
    %c0_186 = arith.constant 0 : index
    %c1_187 = arith.constant 1 : index
    %182 = memref.load %arg6[%c0_186, %c1_187] : memref<3x4xf32, #tpu.memory_space<smem>>
    %183 = vector.broadcast %182 : f32 to vector<4x32xf32>
    %184 = arith.mulf %181, %183 : vector<4x32xf32>
    %185 = arith.addf %180, %184 : vector<4x32xf32>
    %c2_188 = arith.constant 2 : index
    %c0_189 = arith.constant 0 : index
    %186 = tpu.strided_load %arg12[%c2_188, %c0_189] {strides = array<i32: 4, 1>} : memref<16x32xf32, #tpu.memory_space<vmem>>, vector<4x32xf32>
    %c0_190 = arith.constant 0 : index
    %c2_191 = arith.constant 2 : index
    %187 = memref.load %arg6[%c0_190, %c2_191] : memref<3x4xf32, #tpu.memory_space<smem>>
    %188 = vector.broadcast %187 : f32 to vector<4x32xf32>
    %189 = arith.mulf %186, %188 : vector<4x32xf32>
    %190 = arith.addf %185, %189 : vector<4x32xf32>
    %c3 = arith.constant 3 : index
    %c0_192 = arith.constant 0 : index
    %191 = tpu.strided_load %arg12[%c3, %c0_192] {strides = array<i32: 4, 1>} : memref<16x32xf32, #tpu.memory_space<vmem>>, vector<4x32xf32>
    %c0_193 = arith.constant 0 : index
    %c3_194 = arith.constant 3 : index
    %192 = memref.load %arg6[%c0_193, %c3_194] : memref<3x4xf32, #tpu.memory_space<smem>>
    %193 = vector.broadcast %192 : f32 to vector<4x32xf32>
    %194 = arith.mulf %191, %193 : vector<4x32xf32>
    %195 = arith.addf %190, %194 : vector<4x32xf32>
    %c0_195 = arith.constant 0 : index
    %c0_196 = arith.constant 0 : index
    %c0_197 = arith.constant 0 : index
    %c0_198 = arith.constant 0 : index
    %196 = vector.load %arg8[%c0_195, %c0_196, %c0_197, %c0_198] : memref<1x3x4x32xf32, #tpu.memory_space<vmem>>, vector<1x1x4x32xf32>
    %197 = vector.shape_cast %196 : vector<1x1x4x32xf32> to vector<4x32xf32>
    %198 = vector.shape_cast %195 : vector<4x32xf32> to vector<1x1x4x32xf32>
    tpu.vector_store %arg8[%c0_195, %c0_196, %c0_197, %c0_198], %198 {strides = array<i32>} : memref<1x3x4x32xf32, #tpu.memory_space<vmem>>, vector<1x1x4x32xf32>,
    %cst_199 = arith.constant 0.000000e+00 : f32
    %199 = vector.broadcast %cst_199 : f32 to vector<4x32xf32>
    %c1_200 = arith.constant 1 : index
    %200 = memref.load %arg7[%c1_200] : memref<3xf32, #tpu.memory_space<smem>>
    %201 = vector.broadcast %200 : f32 to vector<4x32xf32>
    %202 = arith.addf %199, %201 : vector<4x32xf32>
    %c0_201 = arith.constant 0 : index
    %c0_202 = arith.constant 0 : index
    %203 = tpu.strided_load %arg12[%c0_201, %c0_202] {strides = array<i32: 4, 1>} : memref<16x32xf32, #tpu.memory_space<vmem>>, vector<4x32xf32>
    %c1_203 = arith.constant 1 : index
    %c0_204 = arith.constant 0 : index
    %204 = memref.load %arg6[%c1_203, %c0_204] : memref<3x4xf32, #tpu.memory_space<smem>>
    %205 = vector.broadcast %204 : f32 to vector<4x32xf32>
    %206 = arith.mulf %203, %205 : vector<4x32xf32>
    %207 = arith.addf %202, %206 : vector<4x32xf32>
    %c1_205 = arith.constant 1 : index
    %c0_206 = arith.constant 0 : index
    %208 = tpu.strided_load %arg12[%c1_205, %c0_206] {strides = array<i32: 4, 1>} : memref<16x32xf32, #tpu.memory_space<vmem>>, vector<4x32xf32>
    %c1_207 = arith.constant 1 : index
    %c1_208 = arith.constant 1 : index
    %209 = memref.load %arg6[%c1_207, %c1_208] : memref<3x4xf32, #tpu.memory_space<smem>>
    %210 = vector.broadcast %209 : f32 to vector<4x32xf32>
    %211 = arith.mulf %208, %210 : vector<4x32xf32>
    %212 = arith.addf %207, %211 : vector<4x32xf32>
    %c2_209 = arith.constant 2 : index
    %c0_210 = arith.constant 0 : index
    %213 = tpu.strided_load %arg12[%c2_209, %c0_210] {strides = array<i32: 4, 1>} : memref<16x32xf32, #tpu.memory_space<vmem>>, vector<4x32xf32>
    %c1_211 = arith.constant 1 : index
    %c2_212 = arith.constant 2 : index
    %214 = memref.load %arg6[%c1_211, %c2_212] : memref<3x4xf32, #tpu.memory_space<smem>>
    %215 = vector.broadcast %214 : f32 to vector<4x32xf32>
    %216 = arith.mulf %213, %215 : vector<4x32xf32>
    %217 = arith.addf %212, %216 : vector<4x32xf32>
    %c3_213 = arith.constant 3 : index
    %c0_214 = arith.constant 0 : index
    %218 = tpu.strided_load %arg12[%c3_213, %c0_214] {strides = array<i32: 4, 1>} : memref<16x32xf32, #tpu.memory_space<vmem>>, vector<4x32xf32>
    %c1_215 = arith.constant 1 : index
    %c3_216 = arith.constant 3 : index
    %219 = memref.load %arg6[%c1_215, %c3_216] : memref<3x4xf32, #tpu.memory_space<smem>>
    %220 = vector.broadcast %219 : f32 to vector<4x32xf32>
    %221 = arith.mulf %218, %220 : vector<4x32xf32>
    %222 = arith.addf %217, %221 : vector<4x32xf32>
    %c0_217 = arith.constant 0 : index
    %c1_218 = arith.constant 1 : index
    %c0_219 = arith.constant 0 : index
    %c0_220 = arith.constant 0 : index
    %223 = vector.load %arg8[%c0_217, %c1_218, %c0_219, %c0_220] : memref<1x3x4x32xf32, #tpu.memory_space<vmem>>, vector<1x1x4x32xf32>
    %224 = vector.shape_cast %223 : vector<1x1x4x32xf32> to vector<4x32xf32>
    %225 = vector.shape_cast %222 : vector<4x32xf32> to vector<1x1x4x32xf32>
    tpu.vector_store %arg8[%c0_217, %c1_218, %c0_219, %c0_220], %225 {strides = array<i32>} : memref<1x3x4x32xf32, #tpu.memory_space<vmem>>, vector<1x1x4x32xf32>,
    %cst_221 = arith.constant 0.000000e+00 : f32
    %226 = vector.broadcast %cst_221 : f32 to vector<4x32xf32>
    %c2_222 = arith.constant 2 : index
    %227 = memref.load %arg7[%c2_222] : memref<3xf32, #tpu.memory_space<smem>>
    %228 = vector.broadcast %227 : f32 to vector<4x32xf32>
    %229 = arith.addf %226, %228 : vector<4x32xf32>
    %c0_223 = arith.constant 0 : index
    %c0_224 = arith.constant 0 : index
    %230 = tpu.strided_load %arg12[%c0_223, %c0_224] {strides = array<i32: 4, 1>} : memref<16x32xf32, #tpu.memory_space<vmem>>, vector<4x32xf32>
    %c2_225 = arith.constant 2 : index
    %c0_226 = arith.constant 0 : index
    %231 = memref.load %arg6[%c2_225, %c0_226] : memref<3x4xf32, #tpu.memory_space<smem>>
    %232 = vector.broadcast %231 : f32 to vector<4x32xf32>
    %233 = arith.mulf %230, %232 : vector<4x32xf32>
    %234 = arith.addf %229, %233 : vector<4x32xf32>
    %c1_227 = arith.constant 1 : index
    %c0_228 = arith.constant 0 : index
    %235 = tpu.strided_load %arg12[%c1_227, %c0_228] {strides = array<i32: 4, 1>} : memref<16x32xf32, #tpu.memory_space<vmem>>, vector<4x32xf32>
    %c2_229 = arith.constant 2 : index
    %c1_230 = arith.constant 1 : index
    %236 = memref.load %arg6[%c2_229, %c1_230] : memref<3x4xf32, #tpu.memory_space<smem>>
    %237 = vector.broadcast %236 : f32 to vector<4x32xf32>
    %238 = arith.mulf %235, %237 : vector<4x32xf32>
    %239 = arith.addf %234, %238 : vector<4x32xf32>
    %c2_231 = arith.constant 2 : index
    %c0_232 = arith.constant 0 : index
    %240 = tpu.strided_load %arg12[%c2_231, %c0_232] {strides = array<i32: 4, 1>} : memref<16x32xf32, #tpu.memory_space<vmem>>, vector<4x32xf32>
    %c2_233 = arith.constant 2 : index
    %c2_234 = arith.constant 2 : index
    %241 = memref.load %arg6[%c2_233, %c2_234] : memref<3x4xf32, #tpu.memory_space<smem>>
    %242 = vector.broadcast %241 : f32 to vector<4x32xf32>
    %243 = arith.mulf %240, %242 : vector<4x32xf32>
    %244 = arith.addf %239, %243 : vector<4x32xf32>
    %c3_235 = arith.constant 3 : index
    %c0_236 = arith.constant 0 : index
    %245 = tpu.strided_load %arg12[%c3_235, %c0_236] {strides = array<i32: 4, 1>} : memref<16x32xf32, #tpu.memory_space<vmem>>, vector<4x32xf32>
    %c2_237 = arith.constant 2 : index
    %c3_238 = arith.constant 3 : index
    %246 = memref.load %arg6[%c2_237, %c3_238] : memref<3x4xf32, #tpu.memory_space<smem>>
    %247 = vector.broadcast %246 : f32 to vector<4x32xf32>
    %248 = arith.mulf %245, %247 : vector<4x32xf32>
    %249 = arith.addf %244, %248 : vector<4x32xf32>
    %c0_239 = arith.constant 0 : index
    %c2_240 = arith.constant 2 : index
    %c0_241 = arith.constant 0 : index
    %c0_242 = arith.constant 0 : index
    %250 = vector.load %arg8[%c0_239, %c2_240, %c0_241, %c0_242] : memref<1x3x4x32xf32, #tpu.memory_space<vmem>>, vector<1x1x4x32xf32>
    %251 = vector.shape_cast %250 : vector<1x1x4x32xf32> to vector<4x32xf32>
    %252 = vector.shape_cast %249 : vector<4x32xf32> to vector<1x1x4x32xf32>
    tpu.vector_store %arg8[%c0_239, %c2_240, %c0_241, %c0_242], %252 {strides = array<i32>} : memref<1x3x4x32xf32, #tpu.memory_space<vmem>>, vector<1x1x4x32xf32>,
    return
  }
  func.func @transform_0(%arg0: i32) -> (i32, i32, i32, i32) {
    %c0_i32 = arith.constant 0 : i32
    %c0_i32_0 = arith.constant 0 : i32
    %c0_i32_1 = arith.constant 0 : i32
    %c0_i32_2 = arith.constant 0 : i32
    return %arg0, %c0_i32, %c0_i32_0, %c0_i32_1 : i32, i32, i32, i32
  }
  func.func @transform_1(%arg0: i32) -> (i32, i32, i32, i32) {
    %c0_i32 = arith.constant 0 : i32
    %c0_i32_0 = arith.constant 0 : i32
    %c0_i32_1 = arith.constant 0 : i32
    %c0_i32_2 = arith.constant 0 : i32
    %c0_i32_3 = arith.constant 0 : i32
    return %c0_i32, %c0_i32_0, %c0_i32_1, %c0_i32_2 : i32, i32, i32, i32
  }
  func.func @transform_2(%arg0: i32) -> (i32, i32) {
    %c0_i32 = arith.constant 0 : i32
    %c0_i32_0 = arith.constant 0 : i32
    %c0_i32_1 = arith.constant 0 : i32
    return %c0_i32, %c0_i32_0 : i32, i32
  }
  func.func @transform_3(%arg0: i32) -> (i32, i32, i32, i32) {
    %c0_i32 = arith.constant 0 : i32
    %c0_i32_0 = arith.constant 0 : i32
    %c0_i32_1 = arith.constant 0 : i32
    %c0_i32_2 = arith.constant 0 : i32
    %c0_i32_3 = arith.constant 0 : i32
    return %c0_i32, %c0_i32_0, %c0_i32_1, %c0_i32_2 : i32, i32, i32, i32
  }
  func.func @transform_4(%arg0: i32) -> (i32, i32) {
    %c0_i32 = arith.constant 0 : i32
    %c0_i32_0 = arith.constant 0 : i32
    %c0_i32_1 = arith.constant 0 : i32
    return %c0_i32, %c0_i32_0 : i32, i32
  }
  func.func @transform_5(%arg0: i32) -> (i32, i32) {
    %c0_i32 = arith.constant 0 : i32
    %c0_i32_0 = arith.constant 0 : i32
    %c0_i32_1 = arith.constant 0 : i32
    return %c0_i32, %c0_i32_0 : i32, i32
  }
  func.func @transform_6(%arg0: i32) -> i32 {
    %c0_i32 = arith.constant 0 : i32
    %c0_i32_0 = arith.constant 0 : i32
    return %c0_i32 : i32
  }
  func.func @transform_7(%arg0: i32) -> (i32, i32, i32, i32) {
    %c0_i32 = arith.constant 0 : i32
    %c0_i32_0 = arith.constant 0 : i32
    %c0_i32_1 = arith.constant 0 : i32
    %c0_i32_2 = arith.constant 0 : i32
    return %arg0, %c0_i32, %c0_i32_0, %c0_i32_1 : i32, i32, i32, i32
  }
}

</mosaic_0001>

<llo_original>
// kernel: cnn_forward.1
$region0: #{cnn_forward.1}
  #allocation0 [shape = 'u32[]', space=smem, size = 0x4, offset = 0x4, fixed_abs, tag = 'smem constant byte address 0x4 - core index']
  #allocation1 [shape = 'u32[144,128]{1,0:T(1,128)}', space=vmem, size = 0x12000, scoped, tag = 'internal scratch']
  #allocation2 [shape = 'f32[256,32]{1,0:T(8,128)}', space=vmem, size = 0x20000, scoped, tag = 'scratch operand']
  #allocation3 [shape = 'f32[10,10,32]{2,1,0:T(8,128)}', space=vmem, size = 0x14000, scoped, tag = 'scratch operand']
  #allocation4 [shape = 'f32[32,32]{1,0:T(8,128)}', space=vmem, size = 0x4000, scoped, tag = 'scratch operand']
  #allocation5 [shape = 'f32[16,32]{1,0:T(8,128)}', space=vmem, size = 0x2000, scoped, tag = 'scratch operand']
  %s0 = inlined_call_operand.vmem [shape: f32[2,18,18,3], index: 0, kind: input, shape index: {}]
  %s1 = inlined_call_operand.vmem [shape: bf16[3,3,3,32], index: 1, kind: input, shape index: {}]
  %s2 = inlined_call_operand.vmem [shape: f32[1,32], index: 2, kind: input, shape index: {}]
  %s3 = inlined_call_operand.vmem [shape: bf16[3,3,32,32], index: 3, kind: input, shape index: {}]
  %s4 = inlined_call_operand.vmem [shape: f32[1,32], index: 4, kind: input, shape index: {}]
  %s5 = inlined_call_operand.vmem [shape: f32[3,4], index: 5, kind: input, shape index: {}]
  %s6 = inlined_call_operand.vmem [shape: f32[3], index: 6, kind: input, shape index: {}]
  %s7 = inlined_call_operand.hbm [shape: f32[2,3,4,32], index: 7, kind: output, shape index: {}]
  %s8 = sld [smem:[#allocation0]]
  $region69: #{cnn_forward.1} parent=0
    _
  %s10 = ssub.s32 1, %s8
  %s11 = scalar_select 0, %s10, %s8
  $region1: #{cnn_forward.1} parent=0
    #allocation6 [shape = 'u8[2048]{0}', space=smem, size = 0x800, scoped, tag = 'input window, operand 5, single buffered']
    #allocation7 [shape = 's32[2]{0}', space=sflag, size = 0x8, scoped, tag = 'scoped memory for cnn_forward.1']
    #allocation8 [shape = 's32[2]{0}', space=sflag, size = 0x8, scoped, tag = 'scoped memory for cnn_forward.1']
    #allocation9 [shape = 'u8[512]{0}', space=smem, size = 0x200, scoped, tag = 'input window, operand 6, single buffered']
    #allocation10 [shape = 's32[1]{0}', space=sflag, size = 0x4, scoped, tag = 'scoped memory for cnn_forward.1']
    #allocation11 [shape = 'u8[12288]{0}', space=vmem, size = 0x3000, scoped, tag = 'output window, operand 0']
    %12 = vsyncpa [#allocation8], 0
    %13 = vsyncpa [#allocation10], 0
    %14 = vsyncpa [#allocation7], 0
    %s15 = scalar_lea.sflag [#allocation7], 1
    %16 = vsyncpa %s15, 0
    loop: start=0, step=1, limit=4
    $region2: #{cnn_forward.1} parent=1 // loop_pre_header
      _
    $region3: #{cnn_forward.1} parent=1 // loop_header
      %s18 = sphi 0, %s22
      %p19 = scmp.ge.s32.totalorder %s18, 4
      %s28 = sphi 0, %s30
      %s31 = sphi 0, %s28
      %s32 = sphi 0, %s31
      %s48 = sphi 0, %s32
      %s52 = sphi 0, %s52
      %s54 = sphi 0, %s52
      %s55 = sphi 0, %s54
      %s69 = sphi 0, %s55
      %s73 = sphi 0, %s73
      %s75 = sphi 0, %s73
      %s76 = sphi 0, %s75
      %s90 = sphi 0, %s76
      %s94 = sphi 0, %s94
      %s96 = sphi 0, %s94
      %s97 = sphi 0, %s96
      %s111 = sphi 0, %s97
      %s115 = sphi 0, %s115
      %s117 = sphi 0, %s115
      %s118 = sphi 0, %s117
      %s132 = sphi 0, %s118
      %s136 = sphi 0, %s136
      %s138 = sphi 0, %s136
      %s139 = sphi 0, %s138
      %s153 = sphi 0, %s139
      %s157 = sphi 0, %s157
      %s159 = sphi 0, %s157
      %s160 = sphi 0, %s159
      %s174 = sphi 0, %s160
      %s180 = sphi 0, %s182
      %s183 = sphi 0, %s180
      %s184 = sphi 0, %s183
      %s200 = sphi 0, %s184
    $region4: #{cnn_forward.1} parent=1 // loop_header_branch
      %21 = sbr.rel (%p19) target = $region8
    $region5: #{cnn_forward.1} parent=1 // loop_body
      %s23 = ssub.s32 %s18, 1
      %s24 = ssub.s32 %s18, 2
      %s25 = sadd.s32 %s18, 1
      %s26 = ssub.s32 %s18, %s25
      %p27 = scmp.eq.s32.totalorder %s26, 0
      %s29 = sadd.s32 %s28, 1
      %s30 = scalar_select %p27, %s28, %s29
      %p33 = pneg %p27
      %p34 = scmp.eq.s32.totalorder %s18, 1
      %p35 = por %p33, %p34
      %p36 = scmp.ne.s32.totalorder %s28, %s31
      %p37 = scmp.eq.s32.totalorder %s18, 0
      %p38 = por %p36, %p37
      %p39 = scmp.ne.s32.totalorder %s28, %s31
      %p40 = scmp.eq.s32.totalorder %s23, 1
      %p41 = por %p39, %p40
      %p42 = scmp.ne.s32.totalorder %s31, %s32
      %p43 = scmp.eq.s32.totalorder %s23, 0
      %p44 = por %p42, %p43
      %p45 = scmp.ne.s32.totalorder %s31, %s32
      %p46 = scmp.eq.s32.totalorder %s24, 1
      %p47 = por %p45, %p46
      %p49 = scmp.ne.s32.totalorder %s32, %s48
      %p50 = scmp.eq.s32.totalorder %s24, 0
      %p51 = por %p49, %p50
      %s53 = sadd.s32 %s52, 1
      %p56 = scmp.eq.s32.totalorder %s18, 1
      %p57 = scmp.ne.s32.totalorder %s52, %s54
      %p58 = scmp.eq.s32.totalorder %s18, 0
      %p59 = por %p57, %p58
      %p60 = scmp.ne.s32.totalorder %s52, %s54
      %p61 = scmp.eq.s32.totalorder %s23, 1
      %p62 = por %p60, %p61
      %p63 = scmp.ne.s32.totalorder %s54, %s55
      %p64 = scmp.eq.s32.totalorder %s23, 0
      %p65 = por %p63, %p64
      %p66 = scmp.ne.s32.totalorder %s54, %s55
      %p67 = scmp.eq.s32.totalorder %s24, 1
      %p68 = por %p66, %p67
      %p70 = scmp.ne.s32.totalorder %s55, %s69
      %p71 = scmp.eq.s32.totalorder %s24, 0
      %p72 = por %p70, %p71
      %s74 = sadd.s32 %s73, 1
      %p77 = scmp.eq.s32.totalorder %s18, 1
      %p78 = scmp.ne.s32.totalorder %s73, %s75
      %p79 = scmp.eq.s32.totalorder %s18, 0
      %p80 = por %p78, %p79
      %p81 = scmp.ne.s32.totalorder %s73, %s75
      %p82 = scmp.eq.s32.totalorder %s23, 1
      %p83 = por %p81, %p82
      %p84 = scmp.ne.s32.totalorder %s75, %s76
      %p85 = scmp.eq.s32.totalorder %s23, 0
      %p86 = por %p84, %p85
      %p87 = scmp.ne.s32.totalorder %s75, %s76
      %p88 = scmp.eq.s32.totalorder %s24, 1
      %p89 = por %p87, %p88
      %p91 = scmp.ne.s32.totalorder %s76, %s90
      %p92 = scmp.eq.s32.totalorder %s24, 0
      %p93 = por %p91, %p92
      %s95 = sadd.s32 %s94, 1
      %p98 = scmp.eq.s32.totalorder %s18, 1
      %p99 = scmp.ne.s32.totalorder %s94, %s96
      %p100 = scmp.eq.s32.totalorder %s18, 0
      %p101 = por %p99, %p100
      %p102 = scmp.ne.s32.totalorder %s94, %s96
      %p103 = scmp.eq.s32.totalorder %s23, 1
      %p104 = por %p102, %p103
      %p105 = scmp.ne.s32.totalorder %s96, %s97
      %p106 = scmp.eq.s32.totalorder %s23, 0
      %p107 = por %p105, %p106
      %p108 = scmp.ne.s32.totalorder %s96, %s97
      %p109 = scmp.eq.s32.totalorder %s24, 1
      %p110 = por %p108, %p109
      %p112 = scmp.ne.s32.totalorder %s97, %s111
      %p113 = scmp.eq.s32.totalorder %s24, 0
      %p114 = por %p112, %p113
      %s116 = sadd.s32 %s115, 1
      %p119 = scmp.eq.s32.totalorder %s18, 1
      %p120 = scmp.ne.s32.totalorder %s115, %s117
      %p121 = scmp.eq.s32.totalorder %s18, 0
      %p122 = por %p120, %p121
      %p123 = scmp.ne.s32.totalorder %s115, %s117
      %p124 = scmp.eq.s32.totalorder %s23, 1
      %p125 = por %p123, %p124
      %p126 = scmp.ne.s32.totalorder %s117, %s118
      %p127 = scmp.eq.s32.totalorder %s23, 0
      %p128 = por %p126, %p127
      %p129 = scmp.ne.s32.totalorder %s117, %s118
      %p130 = scmp.eq.s32.totalorder %s24, 1
      %p131 = por %p129, %p130
      %p133 = scmp.ne.s32.totalorder %s118, %s132
      %p134 = scmp.eq.s32.totalorder %s24, 0
      %p135 = por %p133, %p134
      %s137 = sadd.s32 %s136, 1
      %p140 = scmp.eq.s32.totalorder %s18, 1
      %p141 = scmp.ne.s32.totalorder %s136, %s138
      %p142 = scmp.eq.s32.totalorder %s18, 0
      %p143 = por %p141, %p142
      %p144 = scmp.ne.s32.totalorder %s136, %s138
      %p145 = scmp.eq.s32.totalorder %s23, 1
      %p146 = por %p144, %p145
      %p147 = scmp.ne.s32.totalorder %s138, %s139
      %p148 = scmp.eq.s32.totalorder %s23, 0
      %p149 = por %p147, %p148
      %p150 = scmp.ne.s32.totalorder %s138, %s139
      %p151 = scmp.eq.s32.totalorder %s24, 1
      %p152 = por %p150, %p151
      %p154 = scmp.ne.s32.totalorder %s139, %s153
      %p155 = scmp.eq.s32.totalorder %s24, 0
      %p156 = por %p154, %p155
      %s158 = sadd.s32 %s157, 1
      %p161 = scmp.eq.s32.totalorder %s18, 1
      %p162 = scmp.ne.s32.totalorder %s157, %s159
      %p163 = scmp.eq.s32.totalorder %s18, 0
      %p164 = por %p162, %p163
      %p165 = scmp.ne.s32.totalorder %s157, %s159
      %p166 = scmp.eq.s32.totalorder %s23, 1
      %p167 = por %p165, %p166
      %p168 = scmp.ne.s32.totalorder %s159, %s160
      %p169 = scmp.eq.s32.totalorder %s23, 0
      %p170 = por %p168, %p169
      %p171 = scmp.ne.s32.totalorder %s159, %s160
      %p172 = scmp.eq.s32.totalorder %s24, 1
      %p173 = por %p171, %p172
      %p175 = scmp.ne.s32.totalorder %s160, %s174
      %p176 = scmp.eq.s32.totalorder %s24, 0
      %p177 = por %p175, %p176
      %s178 = ssub.s32 %s18, %s25
      %p179 = scmp.eq.s32.totalorder %s178, 0
      %s181 = sadd.s32 %s180, 1
      %s182 = scalar_select %p179, %s180, %s181
      %p185 = pneg %p179
      %p186 = scmp.eq.s32.totalorder %s18, 1
      %p187 = por %p185, %p186
      %p188 = scmp.ne.s32.totalorder %s180, %s183
      %p189 = scmp.eq.s32.totalorder %s18, 0
      %p190 = por %p188, %p189
      %p191 = scmp.ne.s32.totalorder %s180, %s183
      %p192 = scmp.eq.s32.totalorder %s23, 1
      %p193 = por %p191, %p192
      %p194 = scmp.ne.s32.totalorder %s183, %s184
      %p195 = scmp.eq.s32.totalorder %s23, 0
      %p196 = por %p194, %p195
      %p197 = scmp.ne.s32.totalorder %s183, %s184
      %p198 = scmp.eq.s32.totalorder %s24, 1
      %p199 = por %p197, %p198
      %p201 = scmp.ne.s32.totalorder %s184, %s200
      %p202 = scmp.eq.s32.totalorder %s24, 0
      %p203 = por %p201, %p202
      %p204 = scmp.le.s32.totalorder 1, %s18
      %p205 = scmp.lt.s32.totalorder %s18, 3
      %p206 = pnand %p204, %p205
      %p207 = pneg %p206
      // Predicated region
      $region9: #{cnn_forward.1} parent=5 // pred_check
        _
      $region10: #{cnn_forward.1} parent=5 // pred_check_branch
        %209 = sbr.rel (%p206) target = $region12
      $region11: #{cnn_forward.1} parent=5 // pred_region
        %s210 = ssub.s32 %s18, 1
        // Predicated region
        $region13: #{cnn_forward.1} parent=11 // pred_check
          %p211 = pneg %p65
        $region14: #{cnn_forward.1} parent=11 // pred_check_branch
          %213 = sbr.rel (%p211) target = $region16
        $region15: #{cnn_forward.1} parent=11 // pred_region
          _
        $region16: #{cnn_forward.1} parent=11 // pred_fallthru
          _
        // Predicated region
        $region17: #{cnn_forward.1} parent=11 // pred_check
          %p214 = pneg %p86
        $region18: #{cnn_forward.1} parent=11 // pred_check_branch
          %216 = sbr.rel (%p214) target = $region20
        $region19: #{cnn_forward.1} parent=11 // pred_region
          _
        $region20: #{cnn_forward.1} parent=11 // pred_fallthru
          _
        // Predicated region
        $region21: #{cnn_forward.1} parent=11 // pred_check
          %p217 = pneg %p107
        $region22: #{cnn_forward.1} parent=11 // pred_check_branch
          %219 = sbr.rel (%p217) target = $region24
        $region23: #{cnn_forward.1} parent=11 // pred_region
          _
        $region24: #{cnn_forward.1} parent=11 // pred_fallthru
          _
        // Predicated region
        $region25: #{cnn_forward.1} parent=11 // pred_check
          %p220 = pneg %p128
        $region26: #{cnn_forward.1} parent=11 // pred_check_branch
          %222 = sbr.rel (%p220) target = $region28
        $region27: #{cnn_forward.1} parent=11 // pred_region
          _
        $region28: #{cnn_forward.1} parent=11 // pred_fallthru
          _
        // Predicated region
        $region29: #{cnn_forward.1} parent=11 // pred_check
          %p223 = pneg %p149
        $region30: #{cnn_forward.1} parent=11 // pred_check_branch
          %225 = sbr.rel (%p223) target = $region32
        $region31: #{cnn_forward.1} parent=11 // pred_region
          %s227 = ssub.s32 64, 64
          %228 = vsyncadd [#allocation8], %s227
          %s230 = sshll.u32 %s5, 4
          %s231 = int_to_ptr.vmem [resolvable:$true] %s230
          %233 = dma.vmem_to_smem %s231, 64, [#allocation6], [#allocation8]
        $region32: #{cnn_forward.1} parent=11 // pred_fallthru
          _
        // Predicated region
        $region33: #{cnn_forward.1} parent=11 // pred_check
          %p234 = pneg %p170
        $region34: #{cnn_forward.1} parent=11 // pred_check_branch
          %236 = sbr.rel (%p234) target = $region36
        $region35: #{cnn_forward.1} parent=11 // pred_region
          %s238 = ssub.s32 16, 16
          %239 = vsyncadd [#allocation10], %s238
          %s241 = sshll.u32 %s6, 4
          %s242 = int_to_ptr.vmem [resolvable:$true] %s241
          %244 = dma.vmem_to_smem %s242, 16, [#allocation9], [#allocation10]
        $region36: #{cnn_forward.1} parent=11 // pred_fallthru
          _
      $region12: #{cnn_forward.1} parent=5 // pred_fallthru
        _
      %p245 = scmp.lt.s32.totalorder %s18, 2
      // Predicated region
      $region37: #{cnn_forward.1} parent=5 // pred_check
        %p246 = pneg %p245
      $region38: #{cnn_forward.1} parent=5 // pred_check_branch
        %248 = sbr.rel (%p246) target = $region40
      $region39: #{cnn_forward.1} parent=5 // pred_region
        // Predicated region
        $region41: #{cnn_forward.1} parent=39 // pred_check
          %p249 = pneg %p38
        $region42: #{cnn_forward.1} parent=39 // pred_check_branch
          %251 = sbr.rel (%p249) target = $region44
        $region43: #{cnn_forward.1} parent=39 // pred_region
          %p252 = scmp.lt.s32.totalorder %s18, 1
          %s253 = scalar_select %p252, %s18, 1
          %s254 = smul.addr %s253, 54
          %s255 = smul.addr %s254, 8
          %s256 = scalar_lea.vmem %s0, %s255
        $region44: #{cnn_forward.1} parent=39 // pred_fallthru
          _
      $region40: #{cnn_forward.1} parent=5 // pred_fallthru
        _
      %p257 = scmp.le.s32.totalorder 1, %s18
      %p258 = scmp.lt.s32.totalorder %s18, 3
      %p259 = pnand %p257, %p258
      %p260 = pneg %p259
      // Predicated region
      $region45: #{cnn_forward.1} parent=5 // pred_check
        _
      $region46: #{cnn_forward.1} parent=5 // pred_check_branch
        %262 = sbr.rel (%p259) target = $region48
      $region47: #{cnn_forward.1} parent=5 // pred_region
        %s263 = ssub.s32 %s18, 1
        // Predicated region
        $region49: #{cnn_forward.1} parent=47 // pred_check
          %p264 = pneg %p149
        $region50: #{cnn_forward.1} parent=47 // pred_check_branch
          %266 = sbr.rel (%p264) target = $region52
        $region51: #{cnn_forward.1} parent=47 // pred_region
          %267 = dma.done [#allocation8], 64
        $region52: #{cnn_forward.1} parent=47 // pred_fallthru
          _
        // Predicated region
        $region53: #{cnn_forward.1} parent=47 // pred_check
          %p268 = pneg %p170
        $region54: #{cnn_forward.1} parent=47 // pred_check_branch
          %270 = sbr.rel (%p268) target = $region56
        $region55: #{cnn_forward.1} parent=47 // pred_region
          %271 = dma.done [#allocation10], 16
        $region56: #{cnn_forward.1} parent=47 // pred_fallthru
          _
        %272 = sfence
        %p273 = scmp.lt.s32.totalorder %s23, 1
        %s274 = scalar_select %p273, %s23, 1
        %s275 = smul.addr %s274, 54
        %s276 = smul.addr %s275, 8
        %s277 = scalar_lea.vmem %s0, %s276
        %p278 = pneg %p44
        %p279 = pneg %p41
        %p280 = pneg %p65
        %p281 = pneg %p62
        %p282 = pneg %p86
        %p283 = pneg %p83
        %p284 = pneg %p107
        %p285 = pneg %p104
        %p286 = pneg %p128
        %p287 = pneg %p125
        %p288 = pneg %p149
        %p289 = pneg %p146
        %p290 = pneg %p170
        %p291 = pneg %p167
        %p292 = pneg %p196
        %p293 = pneg %p193
        %s294 = sand.u32 %s183, 1
        %s295 = scalar_lea.sflag [#allocation7], %s294
        %s296 = sand.u32 %s183, 1
        %s297 = smul.addr %s296, 12
        %s298 = scalar_lea.vmem [#allocation11], %s297
        %p299 = scmp.lt.s32.totalorder %s23, 1
        %s300 = scalar_select %p299, %s23, 1
        %s301 = smul.addr %s300, 54
        %s302 = smul.addr %s301, 8
        %s303 = scalar_lea.vmem %s0, %s302
        %v305 = vld [vmem:[%s303] sm:$0xff]
        %v306 = vld [vmem:[%s303 + $0x8] sm:$0xff]
        %v307 = vld [vmem:[%s303 + $0x18] sm:$0xff]
        %v308 = vld [vmem:[%s303 + $0x20] sm:$0xff]
        %v309 = vld [vmem:[%s303 + $0x30] sm:$0xff]
        %v310 = vld [vmem:[%s303 + $0x38] sm:$0xff]
        %v311 = vld [vmem:[%s303 + $0x48] sm:$0xff]
        %v312 = vld [vmem:[%s303 + $0x50] sm:$0xff]
        %v313 = vld [vmem:[%s303 + $0x60] sm:$0xff]
        %v314 = vld [vmem:[%s303 + $0x68] sm:$0xff]
        %v315 = vld [vmem:[%s303 + $0x78] sm:$0xff]
        %v316 = vld [vmem:[%s303 + $0x80] sm:$0xff]
        %v317 = vld [vmem:[%s303 + $0x90] sm:$0xff]
        %v318 = vld [vmem:[%s303 + $0x98] sm:$0xff]
        %v319 = vld [vmem:[%s303 + $0xa8] sm:$0xff]
        %v320 = vld [vmem:[%s303 + $0xb0] sm:$0xff]
        %v321 = vld [vmem:[%s303 + $0xc0] sm:$0xff]
        %v322 = vld [vmem:[%s303 + $0xc8] sm:$0xff]
        %v323 = vld [vmem:[%s303 + $0xd8] sm:$0xff]
        %v324 = vld [vmem:[%s303 + $0xe0] sm:$0xff]
        %v325 = vld [vmem:[%s303 + $0xf0] sm:$0xff]
        %v326 = vld [vmem:[%s303 + $0xf8] sm:$0xff]
        %v327 = vld [vmem:[%s303 + $0x108] sm:$0xff]
        %v328 = vld [vmem:[%s303 + $0x110] sm:$0xff]
        %v329 = vld [vmem:[%s303 + $0x120] sm:$0xff]
        %v330 = vld [vmem:[%s303 + $0x128] sm:$0xff]
        %v331 = vld [vmem:[%s303 + $0x138] sm:$0xff]
        %v332 = vld [vmem:[%s303 + $0x140] sm:$0xff]
        %v333 = vld [vmem:[%s303 + $0x150] sm:$0xff]
        %v334 = vld [vmem:[%s303 + $0x158] sm:$0xff]
        %v335 = vld [vmem:[%s303 + $0x168] sm:$0xff]
        %v336 = vld [vmem:[%s303 + $0x170] sm:$0xff]
        %v337 = vpack.c.bf16 %v306, %v305
        %v338 = vpack.c.bf16 %v308, %v307
        %v339 = vpack.c.bf16 %v310, %v309
        %v340 = vpack.c.bf16 %v312, %v311
        %v341 = vpack.c.bf16 %v314, %v313
        %v342 = vpack.c.bf16 %v316, %v315
        %v343 = vpack.c.bf16 %v318, %v317
        %v344 = vpack.c.bf16 %v320, %v319
        %v345 = vpack.c.bf16 %v322, %v321
        %v346 = vpack.c.bf16 %v324, %v323
        %v347 = vpack.c.bf16 %v326, %v325
        %v348 = vpack.c.bf16 %v328, %v327
        %v349 = vpack.c.bf16 %v330, %v329
        %v350 = vpack.c.bf16 %v332, %v331
        %v351 = vpack.c.bf16 %v334, %v333
        %v352 = vpack.c.bf16 %v336, %v335
        %v353 = vld [vmem:[%s1] sm:$0x3]
        %v354 = vld [vmem:[%s303 + $0x1] sm:$0xff]
        %v355 = vld [vmem:[%s303 + $0x9] sm:$0xff]
        %v356 = vld [vmem:[%s303 + $0x19] sm:$0xff]
        %v357 = vld [vmem:[%s303 + $0x21] sm:$0xff]
        %v358 = vld [vmem:[%s303 + $0x31] sm:$0xff]
        %v359 = vld [vmem:[%s303 + $0x39] sm:$0xff]
        %v360 = vld [vmem:[%s303 + $0x49] sm:$0xff]
        %v361 = vld [vmem:[%s303 + $0x51] sm:$0xff]
        %v362 = vld [vmem:[%s303 + $0x61] sm:$0xff]
        %v363 = vld [vmem:[%s303 + $0x69] sm:$0xff]
        %v364 = vld [vmem:[%s303 + $0x79] sm:$0xff]
        %v365 = vld [vmem:[%s303 + $0x81] sm:$0xff]
        %v366 = vld [vmem:[%s303 + $0x91] sm:$0xff]
        %v367 = vld [vmem:[%s303 + $0x99] sm:$0xff]
        %v368 = vld [vmem:[%s303 + $0xa9] sm:$0xff]
        %v369 = vld [vmem:[%s303 + $0xb1] sm:$0xff]
        %v370 = vld [vmem:[%s303 + $0xc1] sm:$0xff]
        %v371 = vld [vmem:[%s303 + $0xc9] sm:$0xff]
        %v372 = vld [vmem:[%s303 + $0xd9] sm:$0xff]
        %v373 = vld [vmem:[%s303 + $0xe1] sm:$0xff]
        %v374 = vld [vmem:[%s303 + $0xf1] sm:$0xff]
        %v375 = vld [vmem:[%s303 + $0xf9] sm:$0xff]
        %v376 = vld [vmem:[%s303 + $0x109] sm:$0xff]
        %v377 = vld [vmem:[%s303 + $0x111] sm:$0xff]
        %v378 = vld [vmem:[%s303 + $0x121] sm:$0xff]
        %v379 = vld [vmem:[%s303 + $0x129] sm:$0xff]
        %v380 = vld [vmem:[%s303 + $0x139] sm:$0xff]
        %v381 = vld [vmem:[%s303 + $0x141] sm:$0xff]
        %v382 = vld [vmem:[%s303 + $0x151] sm:$0xff]
        %v383 = vld [vmem:[%s303 + $0x159] sm:$0xff]
        %v384 = vld [vmem:[%s303 + $0x169] sm:$0xff]
        %v385 = vld [vmem:[%s303 + $0x171] sm:$0xff]
        %v386 = vpack.c.bf16 %v355, %v354
        %v387 = vpack.c.bf16 %v357, %v356
        %v388 = vpack.c.bf16 %v359, %v358
        %v389 = vpack.c.bf16 %v361, %v360
        %v390 = vpack.c.bf16 %v363, %v362
        %v391 = vpack.c.bf16 %v365, %v364
        %v392 = vpack.c.bf16 %v367, %v366
        %v393 = vpack.c.bf16 %v369, %v368
        %v394 = vpack.c.bf16 %v371, %v370
        %v395 = vpack.c.bf16 %v373, %v372
        %v396 = vpack.c.bf16 %v375, %v374
        %v397 = vpack.c.bf16 %v377, %v376
        %v398 = vpack.c.bf16 %v379, %v378
        %v399 = vpack.c.bf16 %v381, %v380
        %v400 = vpack.c.bf16 %v383, %v382
        %v401 = vpack.c.bf16 %v385, %v384
        %s402 = scalar_lea.vmem %s1, 2
        %v403 = vld [vmem:[%s402] sm:$0x3]
        %vm404 = vcmask 23552
        %v406 = vsel %vm404, %v386, 0
        %v409 = vsel %vm404, %v387, 0
        %v412 = vsel %vm404, %v388, 0
        %v415 = vsel %vm404, %v389, 0
        %v418 = vsel %vm404, %v390, 0
        %v421 = vsel %vm404, %v391, 0
        %v424 = vsel %vm404, %v392, 0
        %v427 = vsel %vm404, %v393, 0
        %v430 = vsel %vm404, %v394, 0
        %v433 = vsel %vm404, %v395, 0
        %v436 = vsel %vm404, %v396, 0
        %v439 = vsel %vm404, %v397, 0
        %v442 = vsel %vm404, %v398, 0
        %v445 = vsel %vm404, %v399, 0
        %v448 = vsel %vm404, %v400, 0
        %v451 = vsel %vm404, %v401, 0
        %vm453 = vcmask 1040384
        %vm454 = vcmask 1041408
        %v455 = vsel %vm453, 4294967295, 65535
        %v456 = vsel %vm454, %v455, 0
        %v458 = vand.u32 %v403, %v456
        %460 = vmatprep.subr.bf16.mxu0 0
        %461 = vmatpush1.bf16.msra.mxu0 %v458
        %462 = vmatprep.subr.bf16.mxu0 0
        %463 = vmatpush1.bf16.msra.mxu0 0
        %464 = vmatprep.subr.bf16.mxu0 0
        %465 = vmatpush1.bf16.msra.mxu0 0
        %466 = vmatprep.subr.bf16.mxu0 0
        %467 = vmatpush1.bf16.msra.mxu0 0
        %468 = vmatprep.subr.bf16.mxu0 0
        %469 = vmatpush1.bf16.msra.mxu0 0
        %470 = vmatprep.subr.bf16.mxu0 0
        %471 = vmatpush1.bf16.msra.mxu0 0
        %472 = vmatprep.subr.bf16.mxu0 0
        %473 = vmatpush1.bf16.msra.mxu0 0
        %474 = vmatprep.subr.bf16.mxu0 0
        %475 = vmatpush1.bf16.msra.mxu0 0
        %476 = vmatprep.subr.bf16.mxu0 0
        %477 = vmatpush1.bf16.msra.mxu0 0
        %478 = vmatprep.subr.bf16.mxu0 0
        %479 = vmatpush1.bf16.msra.mxu0 0
        %480 = vmatprep.subr.bf16.mxu0 0
        %481 = vmatpush1.bf16.msra.mxu0 0
        %482 = vmatprep.subr.bf16.mxu0 0
        %483 = vmatpush1.bf16.msra.mxu0 0
        %484 = vmatprep.subr.bf16.mxu0 0
        %485 = vmatpush1.bf16.msra.mxu0 0
        %486 = vmatprep.subr.bf16.mxu0 0
        %487 = vmatpush1.bf16.msra.mxu0 0
        %488 = vmatprep.subr.bf16.mxu0 0
        %489 = vmatpush1.bf16.msra.mxu0 0
        %490 = vmatprep.subr.bf16.mxu0 0
        %491 = vmatpush1.bf16.msra.mxu0 0
        %492 = vmatprep.mubr.bf16.mxu0 0
        %493 = vmatmul.mubr.bf16.gmra.mrb[0].mxu0 %v406
        %v494 = vpop.f32.mrb[0].mxu0
        %v495 = vadd.f32 0.0, %v494
        %v496 = vpop.f32.mrb[0].mxu0
        %v497 = vpop.f32.mrb[0].mxu0
        %v498 = vadd.f32 0.0, %v497
        %v499 = vpop.f32.mrb[0].mxu0
        %500 = vmatprep.mubr.bf16.mxu0 0
        %501 = vmatmul.mubr.bf16.gmra.mrb[0].mxu0 %v409
        %v502 = vpop.f32.mrb[0].mxu0
        %v503 = vadd.f32 0.0, %v502
        %v504 = vpop.f32.mrb[0].mxu0
        %v505 = vpop.f32.mrb[0].mxu0
        %v506 = vadd.f32 0.0, %v505
        %v507 = vpop.f32.mrb[0].mxu0
        %508 = vmatprep.mubr.bf16.mxu0 0
        %509 = vmatmul.mubr.bf16.gmra.mrb[0].mxu0 %v412
        %v510 = vpop.f32.mrb[0].mxu0
        %v511 = vadd.f32 0.0, %v510
        %v512 = vpop.f32.mrb[0].mxu0
        %v513 = vpop.f32.mrb[0].mxu0
        %v514 = vadd.f32 0.0, %v513
        %v515 = vpop.f32.mrb[0].mxu0
        %516 = vmatprep.mubr.bf16.mxu0 0
        %517 = vmatmul.mubr.bf16.gmra.mrb[0].mxu0 %v415
        %v518 = vpop.f32.mrb[0].mxu0
        %v519 = vadd.f32 0.0, %v518
        %v520 = vpop.f32.mrb[0].mxu0
        %v521 = vpop.f32.mrb[0].mxu0
        %v522 = vadd.f32 0.0, %v521
        %v523 = vpop.f32.mrb[0].mxu0
        %524 = vmatprep.mubr.bf16.mxu0 0
        %525 = vmatmul.mubr.bf16.gmra.mrb[0].mxu0 %v418
        %v526 = vpop.f32.mrb[0].mxu0
        %v527 = vadd.f32 0.0, %v526
        %v528 = vpop.f32.mrb[0].mxu0
        %v529 = vpop.f32.mrb[0].mxu0
        %v530 = vadd.f32 0.0, %v529
        %v531 = vpop.f32.mrb[0].mxu0
        %532 = vmatprep.mubr.bf16.mxu0 0
        %533 = vmatmul.mubr.bf16.gmra.mrb[0].mxu0 %v421
        %v534 = vpop.f32.mrb[0].mxu0
        %v535 = vadd.f32 0.0, %v534
        %v536 = vpop.f32.mrb[0].mxu0
        %v537 = vpop.f32.mrb[0].mxu0
        %v538 = vadd.f32 0.0, %v537
        %v539 = vpop.f32.mrb[0].mxu0
        %540 = vmatprep.mubr.bf16.mxu0 0
        %541 = vmatmul.mubr.bf16.gmra.mrb[0].mxu0 %v424
        %v542 = vpop.f32.mrb[0].mxu0
        %v543 = vadd.f32 0.0, %v542
        %v544 = vpop.f32.mrb[0].mxu0
        %v545 = vpop.f32.mrb[0].mxu0
        %v546 = vadd.f32 0.0, %v545
        %v547 = vpop.f32.mrb[0].mxu0
        %548 = vmatprep.mubr.bf16.mxu0 0
        %549 = vmatmul.mubr.bf16.gmra.mrb[0].mxu0 %v427
        %v550 = vpop.f32.mrb[0].mxu0
        %v551 = vadd.f32 0.0, %v550
        %v552 = vpop.f32.mrb[0].mxu0
        %v553 = vpop.f32.mrb[0].mxu0
        %v554 = vadd.f32 0.0, %v553
        %v555 = vpop.f32.mrb[0].mxu0
        %556 = vmatprep.mubr.bf16.mxu0 0
        %557 = vmatmul.mubr.bf16.gmra.mrb[0].mxu0 %v430
        %v558 = vpop.f32.mrb[0].mxu0
        %v559 = vadd.f32 0.0, %v558
        %v560 = vpop.f32.mrb[0].mxu0
        %v561 = vpop.f32.mrb[0].mxu0
        %v562 = vadd.f32 0.0, %v561
        %v563 = vpop.f32.mrb[0].mxu0
        %564 = vmatprep.mubr.bf16.mxu0 0
        %565 = vmatmul.mubr.bf16.gmra.mrb[0].mxu0 %v433
        %v566 = vpop.f32.mrb[0].mxu0
        %v567 = vadd.f32 0.0, %v566
        %v568 = vpop.f32.mrb[0].mxu0
        %v569 = vpop.f32.mrb[0].mxu0
        %v570 = vadd.f32 0.0, %v569
        %v571 = vpop.f32.mrb[0].mxu0
        %572 = vmatprep.mubr.bf16.mxu0 0
        %573 = vmatmul.mubr.bf16.gmra.mrb[0].mxu0 %v436
        %v574 = vpop.f32.mrb[0].mxu0
        %v575 = vadd.f32 0.0, %v574
        %v576 = vpop.f32.mrb[0].mxu0
        %v577 = vpop.f32.mrb[0].mxu0
        %v578 = vadd.f32 0.0, %v577
        %v579 = vpop.f32.mrb[0].mxu0
        %580 = vmatprep.mubr.bf16.mxu0 0
        %581 = vmatmul.mubr.bf16.gmra.mrb[0].mxu0 %v439
        %v582 = vpop.f32.mrb[0].mxu0
        %v583 = vadd.f32 0.0, %v582
        %v584 = vpop.f32.mrb[0].mxu0
        %v585 = vpop.f32.mrb[0].mxu0
        %v586 = vadd.f32 0.0, %v585
        %v587 = vpop.f32.mrb[0].mxu0
        %588 = vmatprep.mubr.bf16.mxu0 0
        %589 = vmatmul.mubr.bf16.gmra.mrb[0].mxu0 %v442
        %v590 = vpop.f32.mrb[0].mxu0
        %v591 = vadd.f32 0.0, %v590
        %v592 = vpop.f32.mrb[0].mxu0
        %v593 = vpop.f32.mrb[0].mxu0
        %v594 = vadd.f32 0.0, %v593
        %v595 = vpop.f32.mrb[0].mxu0
        %596 = vmatprep.mubr.bf16.mxu0 0
        %597 = vmatmul.mubr.bf16.gmra.mrb[0].mxu0 %v445
        %v598 = vpop.f32.mrb[0].mxu0
        %v599 = vadd.f32 0.0, %v598
        %v600 = vpop.f32.mrb[0].mxu0
        %v601 = vpop.f32.mrb[0].mxu0
        %v602 = vadd.f32 0.0, %v601
        %v603 = vpop.f32.mrb[0].mxu0
        %604 = vmatprep.mubr.bf16.mxu0 0
        %605 = vmatmul.mubr.bf16.gmra.mrb[0].mxu0 %v448
        %v606 = vpop.f32.mrb[0].mxu0
        %v607 = vadd.f32 0.0, %v606
        %v608 = vpop.f32.mrb[0].mxu0
        %v609 = vpop.f32.mrb[0].mxu0
        %v610 = vadd.f32 0.0, %v609
        %v611 = vpop.f32.mrb[0].mxu0
        %612 = vmatprep.mubr.bf16.mxu0 0
        %613 = vmatmul.mubr.bf16.gmra.mrb[0].mxu0 %v451
        %v614 = vpop.f32.mrb[0].mxu0
        %v615 = vadd.f32 0.0, %v614
        %v616 = vpop.f32.mrb[0].mxu0
        %v617 = vpop.f32.mrb[0].mxu0
        %v618 = vadd.f32 0.0, %v617
        %v619 = vpop.f32.mrb[0].mxu0
        %620 = vdwg.mxu0
        %v622 = vsel %vm404, %v337, 0
        %v625 = vsel %vm404, %v338, 0
        %v628 = vsel %vm404, %v339, 0
        %v631 = vsel %vm404, %v340, 0
        %v634 = vsel %vm404, %v341, 0
        %v637 = vsel %vm404, %v342, 0
        %v640 = vsel %vm404, %v343, 0
        %v643 = vsel %vm404, %v344, 0
        %v646 = vsel %vm404, %v345, 0
        %v649 = vsel %vm404, %v346, 0
        %v652 = vsel %vm404, %v347, 0
        %v655 = vsel %vm404, %v348, 0
        %v658 = vsel %vm404, %v349, 0
        %v661 = vsel %vm404, %v350, 0
        %v664 = vsel %vm404, %v351, 0
        %v667 = vsel %vm404, %v352, 0
        %v670 = vand.u32 %v353, %v456
        %672 = vmatprep.subr.bf16.mxu0 0
        %673 = vmatpush1.bf16.msra.mxu0 %v670
        %674 = vmatprep.subr.bf16.mxu0 0
        %675 = vmatpush1.bf16.msra.mxu0 0
        %676 = vmatprep.subr.bf16.mxu0 0
        %677 = vmatpush1.bf16.msra.mxu0 0
        %678 = vmatprep.subr.bf16.mxu0 0
        %679 = vmatpush1.bf16.msra.mxu0 0
        %680 = vmatprep.subr.bf16.mxu0 0
        %681 = vmatpush1.bf16.msra.mxu0 0
        %682 = vmatprep.subr.bf16.mxu0 0
        %683 = vmatpush1.bf16.msra.mxu0 0
        %684 = vmatprep.subr.bf16.mxu0 0
        %685 = vmatpush1.bf16.msra.mxu0 0
        %686 = vmatprep.subr.bf16.mxu0 0
        %687 = vmatpush1.bf16.msra.mxu0 0
        %688 = vmatprep.subr.bf16.mxu0 0
        %689 = vmatpush1.bf16.msra.mxu0 0
        %690 = vmatprep.subr.bf16.mxu0 0
        %691 = vmatpush1.bf16.msra.mxu0 0
        %692 = vmatprep.subr.bf16.mxu0 0
        %693 = vmatpush1.bf16.msra.mxu0 0
        %694 = vmatprep.subr.bf16.mxu0 0
        %695 = vmatpush1.bf16.msra.mxu0 0
        %696 = vmatprep.subr.bf16.mxu0 0
        %697 = vmatpush1.bf16.msra.mxu0 0
        %698 = vmatprep.subr.bf16.mxu0 0
        %699 = vmatpush1.bf16.msra.mxu0 0
        %700 = vmatprep.subr.bf16.mxu0 0
        %701 = vmatpush1.bf16.msra.mxu0 0
        %702 = vmatprep.subr.bf16.mxu0 0
        %703 = vmatpush1.bf16.msra.mxu0 0
        %704 = vmatprep.mubr.bf16.mxu0 0
        %705 = vmatmul.mubr.bf16.gmra.mrb[0].mxu0 %v622
        %v706 = vpop.f32.mrb[0].mxu0
        %v707 = vadd.f32 %v495, %v706
        %v708 = vpop.f32.mrb[0].mxu0
        %v709 = vpop.f32.mrb[0].mxu0
        %v710 = vadd.f32 %v498, %v709
        %v711 = vpop.f32.mrb[0].mxu0
        %712 = vmatprep.mubr.bf16.mxu0 0
        %713 = vmatmul.mubr.bf16.gmra.mrb[0].mxu0 %v625
        %v714 = vpop.f32.mrb[0].mxu0
        %v715 = vadd.f32 %v503, %v714
        %v716 = vpop.f32.mrb[0].mxu0
        %v717 = vpop.f32.mrb[0].mxu0
        %v718 = vadd.f32 %v506, %v717
        %v719 = vpop.f32.mrb[0].mxu0
        %720 = vmatprep.mubr.bf16.mxu0 0
        %721 = vmatmul.mubr.bf16.gmra.mrb[0].mxu0 %v628
        %v722 = vpop.f32.mrb[0].mxu0
        %v723 = vadd.f32 %v511, %v722
        %v724 = vpop.f32.mrb[0].mxu0
        %v725 = vpop.f32.mrb[0].mxu0
        %v726 = vadd.f32 %v514, %v725
        %v727 = vpop.f32.mrb[0].mxu0
        %728 = vmatprep.mubr.bf16.mxu0 0
        %729 = vmatmul.mubr.bf16.gmra.mrb[0].mxu0 %v631
        %v730 = vpop.f32.mrb[0].mxu0
        %v731 = vadd.f32 %v519, %v730
        %v732 = vpop.f32.mrb[0].mxu0
        %v733 = vpop.f32.mrb[0].mxu0
        %v734 = vadd.f32 %v522, %v733
        %v735 = vpop.f32.mrb[0].mxu0
        %736 = vmatprep.mubr.bf16.mxu0 0
        %737 = vmatmul.mubr.bf16.gmra.mrb[0].mxu0 %v634
        %v738 = vpop.f32.mrb[0].mxu0
        %v739 = vadd.f32 %v527, %v738
        %v740 = vpop.f32.mrb[0].mxu0
        %v741 = vpop.f32.mrb[0].mxu0
        %v742 = vadd.f32 %v530, %v741
        %v743 = vpop.f32.mrb[0].mxu0
        %744 = vmatprep.mubr.bf16.mxu0 0
        %745 = vmatmul.mubr.bf16.gmra.mrb[0].mxu0 %v637
        %v746 = vpop.f32.mrb[0].mxu0
        %v747 = vadd.f32 %v535, %v746
        %v748 = vpop.f32.mrb[0].mxu0
        %v749 = vpop.f32.mrb[0].mxu0
        %v750 = vadd.f32 %v538, %v749
        %v751 = vpop.f32.mrb[0].mxu0
        %752 = vmatprep.mubr.bf16.mxu0 0
        %753 = vmatmul.mubr.bf16.gmra.mrb[0].mxu0 %v640
        %v754 = vpop.f32.mrb[0].mxu0
        %v755 = vadd.f32 %v543, %v754
        %v756 = vpop.f32.mrb[0].mxu0
        %v757 = vpop.f32.mrb[0].mxu0
        %v758 = vadd.f32 %v546, %v757
        %v759 = vpop.f32.mrb[0].mxu0
        %760 = vmatprep.mubr.bf16.mxu0 0
        %761 = vmatmul.mubr.bf16.gmra.mrb[0].mxu0 %v643
        %v762 = vpop.f32.mrb[0].mxu0
        %v763 = vadd.f32 %v551, %v762
        %v764 = vpop.f32.mrb[0].mxu0
        %v765 = vpop.f32.mrb[0].mxu0
        %v766 = vadd.f32 %v554, %v765
        %v767 = vpop.f32.mrb[0].mxu0
        %768 = vmatprep.mubr.bf16.mxu0 0
        %769 = vmatmul.mubr.bf16.gmra.mrb[0].mxu0 %v646
        %v770 = vpop.f32.mrb[0].mxu0
        %v771 = vadd.f32 %v559, %v770
        %v772 = vpop.f32.mrb[0].mxu0
        %v773 = vpop.f32.mrb[0].mxu0
        %v774 = vadd.f32 %v562, %v773
        %v775 = vpop.f32.mrb[0].mxu0
        %776 = vmatprep.mubr.bf16.mxu0 0
        %777 = vmatmul.mubr.bf16.gmra.mrb[0].mxu0 %v649
        %v778 = vpop.f32.mrb[0].mxu0
        %v779 = vadd.f32 %v567, %v778
        %v780 = vpop.f32.mrb[0].mxu0
        %v781 = vpop.f32.mrb[0].mxu0
        %v782 = vadd.f32 %v570, %v781
        %v783 = vpop.f32.mrb[0].mxu0
        %784 = vmatprep.mubr.bf16.mxu0 0
        %785 = vmatmul.mubr.bf16.gmra.mrb[0].mxu0 %v652
        %v786 = vpop.f32.mrb[0].mxu0
        %v787 = vadd.f32 %v575, %v786
        %v788 = vpop.f32.mrb[0].mxu0
        %v789 = vpop.f32.mrb[0].mxu0
        %v790 = vadd.f32 %v578, %v789
        %v791 = vpop.f32.mrb[0].mxu0
        %792 = vmatprep.mubr.bf16.mxu0 0
        %793 = vmatmul.mubr.bf16.gmra.mrb[0].mxu0 %v655
        %v794 = vpop.f32.mrb[0].mxu0
        %v795 = vadd.f32 %v583, %v794
        %v796 = vpop.f32.mrb[0].mxu0
        %v797 = vpop.f32.mrb[0].mxu0
        %v798 = vadd.f32 %v586, %v797
        %v799 = vpop.f32.mrb[0].mxu0
        %800 = vmatprep.mubr.bf16.mxu0 0
        %801 = vmatmul.mubr.bf16.gmra.mrb[0].mxu0 %v658
        %v802 = vpop.f32.mrb[0].mxu0
        %v803 = vadd.f32 %v591, %v802
        %v804 = vpop.f32.mrb[0].mxu0
        %v805 = vpop.f32.mrb[0].mxu0
        %v806 = vadd.f32 %v594, %v805
        %v807 = vpop.f32.mrb[0].mxu0
        %808 = vmatprep.mubr.bf16.mxu0 0
        %809 = vmatmul.mubr.bf16.gmra.mrb[0].mxu0 %v661
        %v810 = vpop.f32.mrb[0].mxu0
        %v811 = vadd.f32 %v599, %v810
        %v812 = vpop.f32.mrb[0].mxu0
        %v813 = vpop.f32.mrb[0].mxu0
        %v814 = vadd.f32 %v602, %v813
        %v815 = vpop.f32.mrb[0].mxu0
        %816 = vmatprep.mubr.bf16.mxu0 0
        %817 = vmatmul.mubr.bf16.gmra.mrb[0].mxu0 %v664
        %v818 = vpop.f32.mrb[0].mxu0
        %v819 = vadd.f32 %v607, %v818
        %v820 = vpop.f32.mrb[0].mxu0
        %v821 = vpop.f32.mrb[0].mxu0
        %v822 = vadd.f32 %v610, %v821
        %v823 = vpop.f32.mrb[0].mxu0
        %824 = vmatprep.mubr.bf16.mxu0 0
        %825 = vmatmul.mubr.bf16.gmra.mrb[0].mxu0 %v667
        %v826 = vpop.f32.mrb[0].mxu0
        %v827 = vadd.f32 %v615, %v826
        %v828 = vpop.f32.mrb[0].mxu0
        %v829 = vpop.f32.mrb[0].mxu0
        %v830 = vadd.f32 %v618, %v829
        %v831 = vpop.f32.mrb[0].mxu0
        %832 = vdwg.mxu0
        %v833 = vld [vmem:[%s303 + $0x2] sm:$0xff]
        %v834 = vld [vmem:[%s303 + $0xa] sm:$0xff]
        %v835 = vld [vmem:[%s303 + $0x1a] sm:$0xff]
        %v836 = vld [vmem:[%s303 + $0x22] sm:$0xff]
        %v837 = vld [vmem:[%s303 + $0x32] sm:$0xff]
        %v838 = vld [vmem:[%s303 + $0x3a] sm:$0xff]
        %v839 = vld [vmem:[%s303 + $0x4a] sm:$0xff]
        %v840 = vld [vmem:[%s303 + $0x52] sm:$0xff]
        %v841 = vld [vmem:[%s303 + $0x62] sm:$0xff]
        %v842 = vld [vmem:[%s303 + $0x6a] sm:$0xff]
        %v843 = vld [vmem:[%s303 + $0x7a] sm:$0xff]
        %v844 = vld [vmem:[%s303 + $0x82] sm:$0xff]
        %v845 = vld [vmem:[%s303 + $0x92] sm:$0xff]
        %v846 = vld [vmem:[%s303 + $0x9a] sm:$0xff]
        %v847 = vld [vmem:[%s303 + $0xaa] sm:$0xff]
        %v848 = vld [vmem:[%s303 + $0xb2] sm:$0xff]
        %v849 = vld [vmem:[%s303 + $0xc2] sm:$0xff]
        %v850 = vld [vmem:[%s303 + $0xca] sm:$0xff]
        %v851 = vld [vmem:[%s303 + $0xda] sm:$0xff]
        %v852 = vld [vmem:[%s303 + $0xe2] sm:$0xff]
        %v853 = vld [vmem:[%s303 + $0xf2] sm:$0xff]
        %v854 = vld [vmem:[%s303 + $0xfa] sm:$0xff]
        %v855 = vld [vmem:[%s303 + $0x10a] sm:$0xff]
        %v856 = vld [vmem:[%s303 + $0x112] sm:$0xff]
        %v857 = vld [vmem:[%s303 + $0x122] sm:$0xff]
        %v858 = vld [vmem:[%s303 + $0x12a] sm:$0xff]
        %v859 = vld [vmem:[%s303 + $0x13a] sm:$0xff]
        %v860 = vld [vmem:[%s303 + $0x142] sm:$0xff]
        %v861 = vld [vmem:[%s303 + $0x152] sm:$0xff]
        %v862 = vld [vmem:[%s303 + $0x15a] sm:$0xff]
        %v863 = vld [vmem:[%s303 + $0x16a] sm:$0xff]
        %v864 = vld [vmem:[%s303 + $0x172] sm:$0xff]
        %v865 = vpack.c.bf16 %v834, %v833
        %v866 = vpack.c.bf16 %v836, %v835
        %v867 = vpack.c.bf16 %v838, %v837
        %v868 = vpack.c.bf16 %v840, %v839
        %v869 = vpack.c.bf16 %v842, %v841
        %v870 = vpack.c.bf16 %v844, %v843
        %v871 = vpack.c.bf16 %v846, %v845
        %v872 = vpack.c.bf16 %v848, %v847
        %v873 = vpack.c.bf16 %v850, %v849
        %v874 = vpack.c.bf16 %v852, %v851
        %v875 = vpack.c.bf16 %v854, %v853
        %v876 = vpack.c.bf16 %v856, %v855
        %v877 = vpack.c.bf16 %v858, %v857
        %v878 = vpack.c.bf16 %v860, %v859
        %v879 = vpack.c.bf16 %v862, %v861
        %v880 = vpack.c.bf16 %v864, %v863
        %s881 = scalar_lea.vmem %s1, 4
        %v882 = vld [vmem:[%s881] sm:$0x3]
        %v884 = vsel %vm404, %v865, 0
        %v887 = vsel %vm404, %v866, 0
        %v890 = vsel %vm404, %v867, 0
        %v893 = vsel %vm404, %v868, 0
        %v896 = vsel %vm404, %v869, 0
        %v899 = vsel %vm404, %v870, 0
        %v902 = vsel %vm404, %v871, 0
        %v905 = vsel %vm404, %v872, 0
        %v908 = vsel %vm404, %v873, 0
        %v911 = vsel %vm404, %v874, 0
        %v914 = vsel %vm404, %v875, 0
        %v917 = vsel %vm404, %v876, 0
        %v920 = vsel %vm404, %v877, 0
        %v923 = vsel %vm404, %v878, 0
        %v926 = vsel %vm404, %v879, 0
        %v929 = vsel %vm404, %v880, 0
        %v932 = vand.u32 %v882, %v456
        %934 = vmatprep.subr.bf16.mxu0 0
        %935 = vmatpush1.bf16.msra.mxu0 %v932
        %936 = vmatprep.subr.bf16.mxu0 0
        %937 = vmatpush1.bf16.msra.mxu0 0
        %938 = vmatprep.subr.bf16.mxu0 0
        %939 = vmatpush1.bf16.msra.mxu0 0
        %940 = vmatprep.subr.bf16.mxu0 0
        %941 = vmatpush1.bf16.msra.mxu0 0
        %942 = vmatprep.subr.bf16.mxu0 0
        %943 = vmatpush1.bf16.msra.mxu0 0
        %944 = vmatprep.subr.bf16.mxu0 0
        %945 = vmatpush1.bf16.msra.mxu0 0
        %946 = vmatprep.subr.bf16.mxu0 0
        %947 = vmatpush1.bf16.msra.mxu0 0
        %948 = vmatprep.subr.bf16.mxu0 0
        %949 = vmatpush1.bf16.msra.mxu0 0
        %950 = vmatprep.subr.bf16.mxu0 0
        %951 = vmatpush1.bf16.msra.mxu0 0
        %952 = vmatprep.subr.bf16.mxu0 0
        %953 = vmatpush1.bf16.msra.mxu0 0
        %954 = vmatprep.subr.bf16.mxu0 0
        %955 = vmatpush1.bf16.msra.mxu0 0
        %956 = vmatprep.subr.bf16.mxu0 0
        %957 = vmatpush1.bf16.msra.mxu0 0
        %958 = vmatprep.subr.bf16.mxu0 0
        %959 = vmatpush1.bf16.msra.mxu0 0
        %960 = vmatprep.subr.bf16.mxu0 0
        %961 = vmatpush1.bf16.msra.mxu0 0
        %962 = vmatprep.subr.bf16.mxu0 0
        %963 = vmatpush1.bf16.msra.mxu0 0
        %964 = vmatprep.subr.bf16.mxu0 0
        %965 = vmatpush1.bf16.msra.mxu0 0
        %966 = vmatprep.mubr.bf16.mxu0 0
        %967 = vmatmul.mubr.bf16.gmra.mrb[0].mxu0 %v884
        %v968 = vpop.f32.mrb[0].mxu0
        %v969 = vadd.f32 0.0, %v968
        %v970 = vpop.f32.mrb[0].mxu0
        %v971 = vpop.f32.mrb[0].mxu0
        %v972 = vadd.f32 0.0, %v971
        %v973 = vpop.f32.mrb[0].mxu0
        %974 = vmatprep.mubr.bf16.mxu0 0
        %975 = vmatmul.mubr.bf16.gmra.mrb[0].mxu0 %v887
        %v976 = vpop.f32.mrb[0].mxu0
        %v977 = vadd.f32 0.0, %v976
        %v978 = vpop.f32.mrb[0].mxu0
        %v979 = vpop.f32.mrb[0].mxu0
        %v980 = vadd.f32 0.0, %v979
        %v981 = vpop.f32.mrb[0].mxu0
        %982 = vmatprep.mubr.bf16.mxu0 0
        %983 = vmatmul.mubr.bf16.gmra.mrb[0].mxu0 %v890
        %v984 = vpop.f32.mrb[0].mxu0
        %v985 = vadd.f32 0.0, %v984
        %v986 = vpop.f32.mrb[0].mxu0
        %v987 = vpop.f32.mrb[0].mxu0
        %v988 = vadd.f32 0.0, %v987
        %v989 = vpop.f32.mrb[0].mxu0
        %990 = vmatprep.mubr.bf16.mxu0 0
        %991 = vmatmul.mubr.bf16.gmra.mrb[0].mxu0 %v893
        %v992 = vpop.f32.mrb[0].mxu0
        %v993 = vadd.f32 0.0, %v992
        %v994 = vpop.f32.mrb[0].mxu0
        %v995 = vpop.f32.mrb[0].mxu0
        %v996 = vadd.f32 0.0, %v995
        %v997 = vpop.f32.mrb[0].mxu0
        %998 = vmatprep.mubr.bf16.mxu0 0
        %999 = vmatmul.mubr.bf16.gmra.mrb[0].mxu0 %v896
        %v1000 = vpop.f32.mrb[0].mxu0
        %v1001 = vadd.f32 0.0, %v1000
        %v1002 = vpop.f32.mrb[0].mxu0
        %v1003 = vpop.f32.mrb[0].mxu0
        %v1004 = vadd.f32 0.0, %v1003
        %v1005 = vpop.f32.mrb[0].mxu0
        %1006 = vmatprep.mubr.bf16.mxu0 0
        %1007 = vmatmul.mubr.bf16.gmra.mrb[0].mxu0 %v899
        %v1008 = vpop.f32.mrb[0].mxu0
        %v1009 = vadd.f32 0.0, %v1008
        %v1010 = vpop.f32.mrb[0].mxu0
        %v1011 = vpop.f32.mrb[0].mxu0
        %v1012 = vadd.f32 0.0, %v1011
        %v1013 = vpop.f32.mrb[0].mxu0
        %1014 = vmatprep.mubr.bf16.mxu0 0
        %1015 = vmatmul.mubr.bf16.gmra.mrb[0].mxu0 %v902
        %v1016 = vpop.f32.mrb[0].mxu0
        %v1017 = vadd.f32 0.0, %v1016
        %v1018 = vpop.f32.mrb[0].mxu0
        %v1019 = vpop.f32.mrb[0].mxu0
        %v1020 = vadd.f32 0.0, %v1019
        %v1021 = vpop.f32.mrb[0].mxu0
        %1022 = vmatprep.mubr.bf16.mxu0 0
        %1023 = vmatmul.mubr.bf16.gmra.mrb[0].mxu0 %v905
        %v1024 = vpop.f32.mrb[0].mxu0
        %v1025 = vadd.f32 0.0, %v1024
        %v1026 = vpop.f32.mrb[0].mxu0
        %v1027 = vpop.f32.mrb[0].mxu0
        %v1028 = vadd.f32 0.0, %v1027
        %v1029 = vpop.f32.mrb[0].mxu0
        %1030 = vmatprep.mubr.bf16.mxu0 0
        %1031 = vmatmul.mubr.bf16.gmra.mrb[0].mxu0 %v908
        %v1032 = vpop.f32.mrb[0].mxu0
        %v1033 = vadd.f32 0.0, %v1032
        %v1034 = vpop.f32.mrb[0].mxu0
        %v1035 = vpop.f32.mrb[0].mxu0
        %v1036 = vadd.f32 0.0, %v1035
        %v1037 = vpop.f32.mrb[0].mxu0
        %1038 = vmatprep.mubr.bf16.mxu0 0
        %1039 = vmatmul.mubr.bf16.gmra.mrb[0].mxu0 %v911
        %v1040 = vpop.f32.mrb[0].mxu0
        %v1041 = vadd.f32 0.0, %v1040
        %v1042 = vpop.f32.mrb[0].mxu0
        %v1043 = vpop.f32.mrb[0].mxu0
        %v1044 = vadd.f32 0.0, %v1043
        %v1045 = vpop.f32.mrb[0].mxu0
        %1046 = vmatprep.mubr.bf16.mxu0 0
        %1047 = vmatmul.mubr.bf16.gmra.mrb[0].mxu0 %v914
        %v1048 = vpop.f32.mrb[0].mxu0
        %v1049 = vadd.f32 0.0, %v1048
        %v1050 = vpop.f32.mrb[0].mxu0
        %v1051 = vpop.f32.mrb[0].mxu0
        %v1052 = vadd.f32 0.0, %v1051
        %v1053 = vpop.f32.mrb[0].mxu0
        %1054 = vmatprep.mubr.bf16.mxu0 0
        %1055 = vmatmul.mubr.bf16.gmra.mrb[0].mxu0 %v917
        %v1056 = vpop.f32.mrb[0].mxu0
        %v1057 = vadd.f32 0.0, %v1056
        %v1058 = vpop.f32.mrb[0].mxu0
        %v1059 = vpop.f32.mrb[0].mxu0
        %v1060 = vadd.f32 0.0, %v1059
        %v1061 = vpop.f32.mrb[0].mxu0
        %1062 = vmatprep.mubr.bf16.mxu0 0
        %1063 = vmatmul.mubr.bf16.gmra.mrb[0].mxu0 %v920
        %v1064 = vpop.f32.mrb[0].mxu0
        %v1065 = vadd.f32 0.0, %v1064
        %v1066 = vpop.f32.mrb[0].mxu0
        %v1067 = vpop.f32.mrb[0].mxu0
        %v1068 = vadd.f32 0.0, %v1067
        %v1069 = vpop.f32.mrb[0].mxu0
        %1070 = vmatprep.mubr.bf16.mxu0 0
        %1071 = vmatmul.mubr.bf16.gmra.mrb[0].mxu0 %v923
        %v1072 = vpop.f32.mrb[0].mxu0
        %v1073 = vadd.f32 0.0, %v1072
        %v1074 = vpop.f32.mrb[0].mxu0
        %v1075 = vpop.f32.mrb[0].mxu0
        %v1076 = vadd.f32 0.0, %v1075
        %v1077 = vpop.f32.mrb[0].mxu0
        %1078 = vmatprep.mubr.bf16.mxu0 0
        %1079 = vmatmul.mubr.bf16.gmra.mrb[0].mxu0 %v926
        %v1080 = vpop.f32.mrb[0].mxu0
        %v1081 = vadd.f32 0.0, %v1080
        %v1082 = vpop.f32.mrb[0].mxu0
        %v1083 = vpop.f32.mrb[0].mxu0
        %v1084 = vadd.f32 0.0, %v1083
        %v1085 = vpop.f32.mrb[0].mxu0
        %1086 = vmatprep.mubr.bf16.mxu0 0
        %1087 = vmatmul.mubr.bf16.gmra.mrb[0].mxu0 %v929
        %v1088 = vpop.f32.mrb[0].mxu0
        %v1089 = vadd.f32 0.0, %v1088
        %v1090 = vpop.f32.mrb[0].mxu0
        %v1091 = vpop.f32.mrb[0].mxu0
        %v1092 = vadd.f32 0.0, %v1091
        %v1093 = vpop.f32.mrb[0].mxu0
        %1094 = vdwg.mxu0
        %v1095 = vadd.f32 %v707, %v969
        %v1096 = vadd.f32 %v710, %v972
        %v1097 = vadd.f32 %v715, %v977
        %v1098 = vadd.f32 %v718, %v980
        %v1099 = vadd.f32 %v723, %v985
        %v1100 = vadd.f32 %v726, %v988
        %v1101 = vadd.f32 %v731, %v993
        %v1102 = vadd.f32 %v734, %v996
        %v1103 = vadd.f32 %v739, %v1001
        %v1104 = vadd.f32 %v742, %v1004
        %v1105 = vadd.f32 %v747, %v1009
        %v1106 = vadd.f32 %v750, %v1012
        %v1107 = vadd.f32 %v755, %v1017
        %v1108 = vadd.f32 %v758, %v1020
        %v1109 = vadd.f32 %v763, %v1025
        %v1110 = vadd.f32 %v766, %v1028
        %v1111 = vadd.f32 %v771, %v1033
        %v1112 = vadd.f32 %v774, %v1036
        %v1113 = vadd.f32 %v779, %v1041
        %v1114 = vadd.f32 %v782, %v1044
        %v1115 = vadd.f32 %v787, %v1049
        %v1116 = vadd.f32 %v790, %v1052
        %v1117 = vadd.f32 %v795, %v1057
        %v1118 = vadd.f32 %v798, %v1060
        %v1119 = vadd.f32 %v803, %v1065
        %v1120 = vadd.f32 %v806, %v1068
        %v1121 = vadd.f32 %v811, %v1073
        %v1122 = vadd.f32 %v814, %v1076
        %v1123 = vadd.f32 %v819, %v1081
        %v1124 = vadd.f32 %v822, %v1084
        %v1125 = vadd.f32 %v827, %v1089
        %v1126 = vadd.f32 %v830, %v1092
        %s1127 = scalar_lea.vmem %s303, 24
        %v1128 = vld [vmem:[%s1127] sm:$0xff]
        %v1129 = vld [vmem:[%s1127 + $0x8] sm:$0xff]
        %v1130 = vld [vmem:[%s1127 + $0x18] sm:$0xff]
        %v1131 = vld [vmem:[%s1127 + $0x20] sm:$0xff]
        %v1132 = vld [vmem:[%s1127 + $0x30] sm:$0xff]
        %v1133 = vld [vmem:[%s1127 + $0x38] sm:$0xff]
        %v1134 = vld [vmem:[%s1127 + $0x48] sm:$0xff]
        %v1135 = vld [vmem:[%s1127 + $0x50] sm:$0xff]
        %v1136 = vld [vmem:[%s1127 + $0x60] sm:$0xff]
        %v1137 = vld [vmem:[%s1127 + $0x68] sm:$0xff]
        %v1138 = vld [vmem:[%s1127 + $0x78] sm:$0xff]
        %v1139 = vld [vmem:[%s1127 + $0x80] sm:$0xff]
        %v1140 = vld [vmem:[%s1127 + $0x90] sm:$0xff]
        %v1141 = vld [vmem:[%s1127 + $0x98] sm:$0xff]
        %v1142 = vld [vmem:[%s1127 + $0xa8] sm:$0xff]
        %v1143 = vld [vmem:[%s1127 + $0xb0] sm:$0xff]
        %v1144 = vld [vmem:[%s1127 + $0xc0] sm:$0xff]
        %v1145 = vld [vmem:[%s1127 + $0xc8] sm:$0xff]
        %v1146 = vld [vmem:[%s1127 + $0xd8] sm:$0xff]
        %v1147 = vld [vmem:[%s1127 + $0xe0] sm:$0xff]
        %v1148 = vld [vmem:[%s1127 + $0xf0] sm:$0xff]
        %v1149 = vld [vmem:[%s1127 + $0xf8] sm:$0xff]
        %v1150 = vld [vmem:[%s1127 + $0x108] sm:$0xff]
        %v1151 = vld [vmem:[%s1127 + $0x110] sm:$0xff]
        %v1152 = vld [vmem:[%s1127 + $0x120] sm:$0xff]
        %v1153 = vld [vmem:[%s1127 + $0x128] sm:$0xff]
        %v1154 = vld [vmem:[%s1127 + $0x138] sm:$0xff]
        %v1155 = vld [vmem:[%s1127 + $0x140] sm:$0xff]
        %v1156 = vld [vmem:[%s1127 + $0x150] sm:$0xff]
        %v1157 = vld [vmem:[%s1127 + $0x158] sm:$0xff]
        %v1158 = vld [vmem:[%s1127 + $0x168] sm:$0xff]
        %v1159 = vld [vmem:[%s1127 + $0x170] sm:$0xff]
        %v1160 = vpack.c.bf16 %v1129, %v1128
        %v1161 = vpack.c.bf16 %v1131, %v1130
        %v1162 = vpack.c.bf16 %v1133, %v1132
        %v1163 = vpack.c.bf16 %v1135, %v1134
        %v1164 = vpack.c.bf16 %v1137, %v1136
        %v1165 = vpack.c.bf16 %v1139, %v1138
        %v1166 = vpack.c.bf16 %v1141, %v1140
        %v1167 = vpack.c.bf16 %v1143, %v1142
        %v1168 = vpack.c.bf16 %v1145, %v1144
        %v1169 = vpack.c.bf16 %v1147, %v1146
        %v1170 = vpack.c.bf16 %v1149, %v1148
        %v1171 = vpack.c.bf16 %v1151, %v1150
        %v1172 = vpack.c.bf16 %v1153, %v1152
        %v1173 = vpack.c.bf16 %v1155, %v1154
        %v1174 = vpack.c.bf16 %v1157, %v1156
        %v1175 = vpack.c.bf16 %v1159, %v1158
        %s1176 = scalar_lea.vmem %s1, 6
        %v1177 = vld [vmem:[%s1176] sm:$0x3]
        %v1179 = vsel %vm404, %v1160, 0
        %v1182 = vsel %vm404, %v1161, 0
        %v1185 = vsel %vm404, %v1162, 0
        %v1188 = vsel %vm404, %v1163, 0
        %v1191 = vsel %vm404, %v1164, 0
        %v1194 = vsel %vm404, %v1165, 0
        %v1197 = vsel %vm404, %v1166, 0
        %v1200 = vsel %vm404, %v1167, 0
        %v1203 = vsel %vm404, %v1168, 0
        %v1206 = vsel %vm404, %v1169, 0
        %v1209 = vsel %vm404, %v1170, 0
        %v1212 = vsel %vm404, %v1171, 0
        %v1215 = vsel %vm404, %v1172, 0
        %v1218 = vsel %vm404, %v1173, 0
        %v1221 = vsel %vm404, %v1174, 0
        %v1224 = vsel %vm404, %v1175, 0
        %v1227 = vand.u32 %v1177, %v456
        %1229 = vmatprep.subr.bf16.mxu0 0
        %1230 = vmatpush1.bf16.msra.mxu0 %v1227
        %1231 = vmatprep.subr.bf16.mxu0 0
        %1232 = vmatpush1.bf16.msra.mxu0 0
        %1233 = vmatprep.subr.bf16.mxu0 0
        %1234 = vmatpush1.bf16.msra.mxu0 0
        %1235 = vmatprep.subr.bf16.mxu0 0
        %1236 = vmatpush1.bf16.msra.mxu0 0
        %1237 = vmatprep.subr.bf16.mxu0 0
        %1238 = vmatpush1.bf16.msra.mxu0 0
        %1239 = vmatprep.subr.bf16.mxu0 0
        %1240 = vmatpush1.bf16.msra.mxu0 0
        %1241 = vmatprep.subr.bf16.mxu0 0
        %1242 = vmatpush1.bf16.msra.mxu0 0
        %1243 = vmatprep.subr.bf16.mxu0 0
        %1244 = vmatpush1.bf16.msra.mxu0 0
        %1245 = vmatprep.subr.bf16.mxu0 0
        %1246 = vmatpush1.bf16.msra.mxu0 0
        %1247 = vmatprep.subr.bf16.mxu0 0
        %1248 = vmatpush1.bf16.msra.mxu0 0
        %1249 = vmatprep.subr.bf16.mxu0 0
        %1250 = vmatpush1.bf16.msra.mxu0 0
        %1251 = vmatprep.subr.bf16.mxu0 0
        %1252 = vmatpush1.bf16.msra.mxu0 0
        %1253 = vmatprep.subr.bf16.mxu0 0
        %1254 = vmatpush1.bf16.msra.mxu0 0
        %1255 = vmatprep.subr.bf16.mxu0 0
        %1256 = vmatpush1.bf16.msra.mxu0 0
        %1257 = vmatprep.subr.bf16.mxu0 0
        %1258 = vmatpush1.bf16.msra.mxu0 0
        %1259 = vmatprep.subr.bf16.mxu0 0
        %1260 = vmatpush1.bf16.msra.mxu0 0
        %1261 = vmatprep.mubr.bf16.mxu0 0
        %1262 = vmatmul.mubr.bf16.gmra.mrb[0].mxu0 %v1179
        %v1263 = vpop.f32.mrb[0].mxu0
        %v1264 = vadd.f32 0.0, %v1263
        %v1265 = vpop.f32.mrb[0].mxu0
        %v1266 = vpop.f32.mrb[0].mxu0
        %v1267 = vadd.f32 0.0, %v1266
        %v1268 = vpop.f32.mrb[0].mxu0
        %1269 = vmatprep.mubr.bf16.mxu0 0
        %1270 = vmatmul.mubr.bf16.gmra.mrb[0].mxu0 %v1182
        %v1271 = vpop.f32.mrb[0].mxu0
        %v1272 = vadd.f32 0.0, %v1271
        %v1273 = vpop.f32.mrb[0].mxu0
        %v1274 = vpop.f32.mrb[0].mxu0
        %v1275 = vadd.f32 0.0, %v1274
        %v1276 = vpop.f32.mrb[0].mxu0
        %1277 = vmatprep.mubr.bf16.mxu0 0
        %1278 = vmatmul.mubr.bf16.gmra.mrb[0].mxu0 %v1185
        %v1279 = vpop.f32.mrb[0].mxu0
        %v1280 = vadd.f32 0.0, %v1279
        %v1281 = vpop.f32.mrb[0].mxu0
        %v1282 = vpop.f32.mrb[0].mxu0
        %v1283 = vadd.f32 0.0, %v1282
        %v1284 = vpop.f32.mrb[0].mxu0
        %1285 = vmatprep.mubr.bf16.mxu0 0
        %1286 = vmatmul.mubr.bf16.gmra.mrb[0].mxu0 %v1188
        %v1287 = vpop.f32.mrb[0].mxu0
        %v1288 = vadd.f32 0.0, %v1287
        %v1289 = vpop.f32.mrb[0].mxu0
        %v1290 = vpop.f32.mrb[0].mxu0
        %v1291 = vadd.f32 0.0, %v1290
        %v1292 = vpop.f32.mrb[0].mxu0
        %1293 = vmatprep.mubr.bf16.mxu0 0
        %1294 = vmatmul.mubr.bf16.gmra.mrb[0].mxu0 %v1191
        %v1295 = vpop.f32.mrb[0].mxu0
        %v1296 = vadd.f32 0.0, %v1295
        %v1297 = vpop.f32.mrb[0].mxu0
        %v1298 = vpop.f32.mrb[0].mxu0
        %v1299 = vadd.f32 0.0, %v1298
        %v1300 = vpop.f32.mrb[0].mxu0
        %1301 = vmatprep.mubr.bf16.mxu0 0
        %1302 = vmatmul.mubr.bf16.gmra.mrb[0].mxu0 %v1194
        %v1303 = vpop.f32.mrb[0].mxu0
        %v1304 = vadd.f32 0.0, %v1303
        %v1305 = vpop.f32.mrb[0].mxu0
        %v1306 = vpop.f32.mrb[0].mxu0
        %v1307 = vadd.f32 0.0, %v1306
        %v1308 = vpop.f32.mrb[0].mxu0
        %1309 = vmatprep.mubr.bf16.mxu0 0
        %1310 = vmatmul.mubr.bf16.gmra.mrb[0].mxu0 %v1197
        %v1311 = vpop.f32.mrb[0].mxu0
        %v1312 = vadd.f32 0.0, %v1311
        %v1313 = vpop.f32.mrb[0].mxu0
        %v1314 = vpop.f32.mrb[0].mxu0
        %v1315 = vadd.f32 0.0, %v1314
        %v1316 = vpop.f32.mrb[0].mxu0
        %1317 = vmatprep.mubr.bf16.mxu0 0
        %1318 = vmatmul.mubr.bf16.gmra.mrb[0].mxu0 %v1200
        %v1319 = vpop.f32.mrb[0].mxu0
        %v1320 = vadd.f32 0.0, %v1319
        %v1321 = vpop.f32.mrb[0].mxu0
        %v1322 = vpop.f32.mrb[0].mxu0
        %v1323 = vadd.f32 0.0, %v1322
        %v1324 = vpop.f32.mrb[0].mxu0
        %1325 = vmatprep.mubr.bf16.mxu0 0
        %1326 = vmatmul.mubr.bf16.gmra.mrb[0].mxu0 %v1203
        %v1327 = vpop.f32.mrb[0].mxu0
        %v1328 = vadd.f32 0.0, %v1327
        %v1329 = vpop.f32.mrb[0].mxu0
        %v1330 = vpop.f32.mrb[0].mxu0
        %v1331 = vadd.f32 0.0, %v1330
        %v1332 = vpop.f32.mrb[0].mxu0
        %1333 = vmatprep.mubr.bf16.mxu0 0
        %1334 = vmatmul.mubr.bf16.gmra.mrb[0].mxu0 %v1206
        %v1335 = vpop.f32.mrb[0].mxu0
        %v1336 = vadd.f32 0.0, %v1335
        %v1337 = vpop.f32.mrb[0].mxu0
        %v1338 = vpop.f32.mrb[0].mxu0
        %v1339 = vadd.f32 0.0, %v1338
        %v1340 = vpop.f32.mrb[0].mxu0
        %1341 = vmatprep.mubr.bf16.mxu0 0
        %1342 = vmatmul.mubr.bf16.gmra.mrb[0].mxu0 %v1209
        %v1343 = vpop.f32.mrb[0].mxu0
        %v1344 = vadd.f32 0.0, %v1343
        %v1345 = vpop.f32.mrb[0].mxu0
        %v1346 = vpop.f32.mrb[0].mxu0
        %v1347 = vadd.f32 0.0, %v1346
        %v1348 = vpop.f32.mrb[0].mxu0
        %1349 = vmatprep.mubr.bf16.mxu0 0
        %1350 = vmatmul.mubr.bf16.gmra.mrb[0].mxu0 %v1212
        %v1351 = vpop.f32.mrb[0].mxu0
        %v1352 = vadd.f32 0.0, %v1351
        %v1353 = vpop.f32.mrb[0].mxu0
        %v1354 = vpop.f32.mrb[0].mxu0
        %v1355 = vadd.f32 0.0, %v1354
        %v1356 = vpop.f32.mrb[0].mxu0
        %1357 = vmatprep.mubr.bf16.mxu0 0
        %1358 = vmatmul.mubr.bf16.gmra.mrb[0].mxu0 %v1215
        %v1359 = vpop.f32.mrb[0].mxu0
        %v1360 = vadd.f32 0.0, %v1359
        %v1361 = vpop.f32.mrb[0].mxu0
        %v1362 = vpop.f32.mrb[0].mxu0
        %v1363 = vadd.f32 0.0, %v1362
        %v1364 = vpop.f32.mrb[0].mxu0
        %1365 = vmatprep.mubr.bf16.mxu0 0
        %1366 = vmatmul.mubr.bf16.gmra.mrb[0].mxu0 %v1218
        %v1367 = vpop.f32.mrb[0].mxu0
        %v1368 = vadd.f32 0.0, %v1367
        %v1369 = vpop.f32.mrb[0].mxu0
        %v1370 = vpop.f32.mrb[0].mxu0
        %v1371 = vadd.f32 0.0, %v1370
        %v1372 = vpop.f32.mrb[0].mxu0
        %1373 = vmatprep.mubr.bf16.mxu0 0
        %1374 = vmatmul.mubr.bf16.gmra.mrb[0].mxu0 %v1221
        %v1375 = vpop.f32.mrb[0].mxu0
        %v1376 = vadd.f32 0.0, %v1375
        %v1377 = vpop.f32.mrb[0].mxu0
        %v1378 = vpop.f32.mrb[0].mxu0
        %v1379 = vadd.f32 0.0, %v1378
        %v1380 = vpop.f32.mrb[0].mxu0
        %1381 = vmatprep.mubr.bf16.mxu0 0
        %1382 = vmatmul.mubr.bf16.gmra.mrb[0].mxu0 %v1224
        %v1383 = vpop.f32.mrb[0].mxu0
        %v1384 = vadd.f32 0.0, %v1383
        %v1385 = vpop.f32.mrb[0].mxu0
        %v1386 = vpop.f32.mrb[0].mxu0
        %v1387 = vadd.f32 0.0, %v1386
        %v1388 = vpop.f32.mrb[0].mxu0
        %1389 = vdwg.mxu0
        %v1390 = vadd.f32 %v1095, %v1264
        %v1391 = vadd.f32 %v1096, %v1267
        %v1392 = vadd.f32 %v1097, %v1272
        %v1393 = vadd.f32 %v1098, %v1275
        %v1394 = vadd.f32 %v1099, %v1280
        %v1395 = vadd.f32 %v1100, %v1283
        %v1396 = vadd.f32 %v1101, %v1288
        %v1397 = vadd.f32 %v1102, %v1291
        %v1398 = vadd.f32 %v1103, %v1296
        %v1399 = vadd.f32 %v1104, %v1299
        %v1400 = vadd.f32 %v1105, %v1304
        %v1401 = vadd.f32 %v1106, %v1307
        %v1402 = vadd.f32 %v1107, %v1312
        %v1403 = vadd.f32 %v1108, %v1315
        %v1404 = vadd.f32 %v1109, %v1320
        %v1405 = vadd.f32 %v1110, %v1323
        %v1406 = vadd.f32 %v1111, %v1328
        %v1407 = vadd.f32 %v1112, %v1331
        %v1408 = vadd.f32 %v1113, %v1336
        %v1409 = vadd.f32 %v1114, %v1339
        %v1410 = vadd.f32 %v1115, %v1344
        %v1411 = vadd.f32 %v1116, %v1347
        %v1412 = vadd.f32 %v1117, %v1352
        %v1413 = vadd.f32 %v1118, %v1355
        %v1414 = vadd.f32 %v1119, %v1360
        %v1415 = vadd.f32 %v1120, %v1363
        %v1416 = vadd.f32 %v1121, %v1368
        %v1417 = vadd.f32 %v1122, %v1371
        %v1418 = vadd.f32 %v1123, %v1376
        %v1419 = vadd.f32 %v1124, %v1379
        %v1420 = vadd.f32 %v1125, %v1384
        %v1421 = vadd.f32 %v1126, %v1387
        %v1422 = vld [vmem:[%s1127 + $0x1] sm:$0xff]
        %v1423 = vld [vmem:[%s1127 + $0x9] sm:$0xff]
        %v1424 = vld [vmem:[%s1127 + $0x19] sm:$0xff]
        %v1425 = vld [vmem:[%s1127 + $0x21] sm:$0xff]
        %v1426 = vld [vmem:[%s1127 + $0x31] sm:$0xff]
        %v1427 = vld [vmem:[%s1127 + $0x39] sm:$0xff]
        %v1428 = vld [vmem:[%s1127 + $0x49] sm:$0xff]
        %v1429 = vld [vmem:[%s1127 + $0x51] sm:$0xff]
        %v1430 = vld [vmem:[%s1127 + $0x61] sm:$0xff]
        %v1431 = vld [vmem:[%s1127 + $0x69] sm:$0xff]
        %v1432 = vld [vmem:[%s1127 + $0x79] sm:$0xff]
        %v1433 = vld [vmem:[%s1127 + $0x81] sm:$0xff]
        %v1434 = vld [vmem:[%s1127 + $0x91] sm:$0xff]
        %v1435 = vld [vmem:[%s1127 + $0x99] sm:$0xff]
        %v1436 = vld [vmem:[%s1127 + $0xa9] sm:$0xff]
        %v1437 = vld [vmem:[%s1127 + $0xb1] sm:$0xff]
        %v1438 = vld [vmem:[%s1127 + $0xc1] sm:$0xff]
        %v1439 = vld [vmem:[%s1127 + $0xc9] sm:$0xff]
        %v1440 = vld [vmem:[%s1127 + $0xd9] sm:$0xff]
        %v1441 = vld [vmem:[%s1127 + $0xe1] sm:$0xff]
        %v1442 = vld [vmem:[%s1127 + $0xf1] sm:$0xff]
        %v1443 = vld [vmem:[%s1127 + $0xf9] sm:$0xff]
        %v1444 = vld [vmem:[%s1127 + $0x109] sm:$0xff]
        %v1445 = vld [vmem:[%s1127 + $0x111] sm:$0xff]
        %v1446 = vld [vmem:[%s1127 + $0x121] sm:$0xff]
        %v1447 = vld [vmem:[%s1127 + $0x129] sm:$0xff]
        %v1448 = vld [vmem:[%s1127 + $0x139] sm:$0xff]
        %v1449 = vld [vmem:[%s1127 + $0x141] sm:$0xff]
        %v1450 = vld [vmem:[%s1127 + $0x151] sm:$0xff]
        %v1451 = vld [vmem:[%s1127 + $0x159] sm:$0xff]
        %v1452 = vld [vmem:[%s1127 + $0x169] sm:$0xff]
        %v1453 = vld [vmem:[%s1127 + $0x171] sm:$0xff]
        %v1454 = vpack.c.bf16 %v1423, %v1422
        %v1455 = vpack.c.bf16 %v1425, %v1424
        %v1456 = vpack.c.bf16 %v1427, %v1426
        %v1457 = vpack.c.bf16 %v1429, %v1428
        %v1458 = vpack.c.bf16 %v1431, %v1430
        %v1459 = vpack.c.bf16 %v1433, %v1432
        %v1460 = vpack.c.bf16 %v1435, %v1434
        %v1461 = vpack.c.bf16 %v1437, %v1436
        %v1462 = vpack.c.bf16 %v1439, %v1438
        %v1463 = vpack.c.bf16 %v1441, %v1440
        %v1464 = vpack.c.bf16 %v1443, %v1442
        %v1465 = vpack.c.bf16 %v1445, %v1444
        %v1466 = vpack.c.bf16 %v1447, %v1446
        %v1467 = vpack.c.bf16 %v1449, %v1448
        %v1468 = vpack.c.bf16 %v1451, %v1450
        %v1469 = vpack.c.bf16 %v1453, %v1452
        %s1470 = scalar_lea.vmem %s1, 8
        %v1471 = vld [vmem:[%s1470] sm:$0x3]
        %v1473 = vsel %vm404, %v1454, 0
        %v1476 = vsel %vm404, %v1455, 0
        %v1479 = vsel %vm404, %v1456, 0
        %v1482 = vsel %vm404, %v1457, 0
        %v1485 = vsel %vm404, %v1458, 0
        %v1488 = vsel %vm404, %v1459, 0
        %v1491 = vsel %vm404, %v1460, 0
        %v1494 = vsel %vm404, %v1461, 0
        %v1497 = vsel %vm404, %v1462, 0
        %v1500 = vsel %vm404, %v1463, 0
        %v1503 = vsel %vm404, %v1464, 0
        %v1506 = vsel %vm404, %v1465, 0
        %v1509 = vsel %vm404, %v1466, 0
        %v1512 = vsel %vm404, %v1467, 0
        %v1515 = vsel %vm404, %v1468, 0
        %v1518 = vsel %vm404, %v1469, 0
        %v1521 = vand.u32 %v1471, %v456
        %1523 = vmatprep.subr.bf16.mxu0 0
        %1524 = vmatpush1.bf16.msra.mxu0 %v1521
        %1525 = vmatprep.subr.bf16.mxu0 0
        %1526 = vmatpush1.bf16.msra.mxu0 0
        %1527 = vmatprep.subr.bf16.mxu0 0
        %1528 = vmatpush1.bf16.msra.mxu0 0
        %1529 = vmatprep.subr.bf16.mxu0 0
        %1530 = vmatpush1.bf16.msra.mxu0 0
        %1531 = vmatprep.subr.bf16.mxu0 0
        %1532 = vmatpush1.bf16.msra.mxu0 0
        %1533 = vmatprep.subr.bf16.mxu0 0
        %1534 = vmatpush1.bf16.msra.mxu0 0
        %1535 = vmatprep.subr.bf16.mxu0 0
        %1536 = vmatpush1.bf16.msra.mxu0 0
        %1537 = vmatprep.subr.bf16.mxu0 0
        %1538 = vmatpush1.bf16.msra.mxu0 0
        %1539 = vmatprep.subr.bf16.mxu0 0
        %1540 = vmatpush1.bf16.msra.mxu0 0
        %1541 = vmatprep.subr.bf16.mxu0 0
        %1542 = vmatpush1.bf16.msra.mxu0 0
        %1543 = vmatprep.subr.bf16.mxu0 0
        %1544 = vmatpush1.bf16.msra.mxu0 0
        %1545 = vmatprep.subr.bf16.mxu0 0
        %1546 = vmatpush1.bf16.msra.mxu0 0
        %1547 = vmatprep.subr.bf16.mxu0 0
        %1548 = vmatpush1.bf16.msra.mxu0 0
        %1549 = vmatprep.subr.bf16.mxu0 0
        %1550 = vmatpush1.bf16.msra.mxu0 0
        %1551 = vmatprep.subr.bf16.mxu0 0
        %1552 = vmatpush1.bf16.msra.mxu0 0
        %1553 = vmatprep.subr.bf16.mxu0 0
        %1554 = vmatpush1.bf16.msra.mxu0 0
        %1555 = vmatprep.mubr.bf16.mxu0 0
        %1556 = vmatmul.mubr.bf16.gmra.mrb[0].mxu0 %v1473
        %v1557 = vpop.f32.mrb[0].mxu0
        %v1558 = vadd.f32 0.0, %v1557
        %v1559 = vpop.f32.mrb[0].mxu0
        %v1560 = vpop.f32.mrb[0].mxu0
        %v1561 = vadd.f32 0.0, %v1560
        %v1562 = vpop.f32.mrb[0].mxu0
        %1563 = vmatprep.mubr.bf16.mxu0 0
        %1564 = vmatmul.mubr.bf16.gmra.mrb[0].mxu0 %v1476
        %v1565 = vpop.f32.mrb[0].mxu0
        %v1566 = vadd.f32 0.0, %v1565
        %v1567 = vpop.f32.mrb[0].mxu0
        %v1568 = vpop.f32.mrb[0].mxu0
        %v1569 = vadd.f32 0.0, %v1568
        %v1570 = vpop.f32.mrb[0].mxu0
        %1571 = vmatprep.mubr.bf16.mxu0 0
        %1572 = vmatmul.mubr.bf16.gmra.mrb[0].mxu0 %v1479
        %v1573 = vpop.f32.mrb[0].mxu0
        %v1574 = vadd.f32 0.0, %v1573
        %v1575 = vpop.f32.mrb[0].mxu0
        %v1576 = vpop.f32.mrb[0].mxu0
        %v1577 = vadd.f32 0.0, %v1576
        %v1578 = vpop.f32.mrb[0].mxu0
        %1579 = vmatprep.mubr.bf16.mxu0 0
        %1580 = vmatmul.mubr.bf16.gmra.mrb[0].mxu0 %v1482
        %v1581 = vpop.f32.mrb[0].mxu0
        %v1582 = vadd.f32 0.0, %v1581
        %v1583 = vpop.f32.mrb[0].mxu0
        %v1584 = vpop.f32.mrb[0].mxu0
        %v1585 = vadd.f32 0.0, %v1584
        %v1586 = vpop.f32.mrb[0].mxu0
        %1587 = vmatprep.mubr.bf16.mxu0 0
        %1588 = vmatmul.mubr.bf16.gmra.mrb[0].mxu0 %v1485
        %v1589 = vpop.f32.mrb[0].mxu0
        %v1590 = vadd.f32 0.0, %v1589
        %v1591 = vpop.f32.mrb[0].mxu0
        %v1592 = vpop.f32.mrb[0].mxu0
        %v1593 = vadd.f32 0.0, %v1592
        %v1594 = vpop.f32.mrb[0].mxu0
        %1595 = vmatprep.mubr.bf16.mxu0 0
        %1596 = vmatmul.mubr.bf16.gmra.mrb[0].mxu0 %v1488
        %v1597 = vpop.f32.mrb[0].mxu0
        %v1598 = vadd.f32 0.0, %v1597
        %v1599 = vpop.f32.mrb[0].mxu0
        %v1600 = vpop.f32.mrb[0].mxu0
        %v1601 = vadd.f32 0.0, %v1600
        %v1602 = vpop.f32.mrb[0].mxu0
        %1603 = vmatprep.mubr.bf16.mxu0 0
        %1604 = vmatmul.mubr.bf16.gmra.mrb[0].mxu0 %v1491
        %v1605 = vpop.f32.mrb[0].mxu0
        %v1606 = vadd.f32 0.0, %v1605
        %v1607 = vpop.f32.mrb[0].mxu0
        %v1608 = vpop.f32.mrb[0].mxu0
        %v1609 = vadd.f32 0.0, %v1608
        %v1610 = vpop.f32.mrb[0].mxu0
        %1611 = vmatprep.mubr.bf16.mxu0 0
        %1612 = vmatmul.mubr.bf16.gmra.mrb[0].mxu0 %v1494
        %v1613 = vpop.f32.mrb[0].mxu0
        %v1614 = vadd.f32 0.0, %v1613
        %v1615 = vpop.f32.mrb[0].mxu0
        %v1616 = vpop.f32.mrb[0].mxu0
        %v1617 = vadd.f32 0.0, %v1616
        %v1618 = vpop.f32.mrb[0].mxu0
        %1619 = vmatprep.mubr.bf16.mxu0 0
        %1620 = vmatmul.mubr.bf16.gmra.mrb[0].mxu0 %v1497
        %v1621 = vpop.f32.mrb[0].mxu0
        %v1622 = vadd.f32 0.0, %v1621
        %v1623 = vpop.f32.mrb[0].mxu0
        %v1624 = vpop.f32.mrb[0].mxu0
        %v1625 = vadd.f32 0.0, %v1624
        %v1626 = vpop.f32.mrb[0].mxu0
        %1627 = vmatprep.mubr.bf16.mxu0 0
        %1628 = vmatmul.mubr.bf16.gmra.mrb[0].mxu0 %v1500
        %v1629 = vpop.f32.mrb[0].mxu0
        %v1630 = vadd.f32 0.0, %v1629
        %v1631 = vpop.f32.mrb[0].mxu0
        %v1632 = vpop.f32.mrb[0].mxu0
        %v1633 = vadd.f32 0.0, %v1632
        %v1634 = vpop.f32.mrb[0].mxu0
        %1635 = vmatprep.mubr.bf16.mxu0 0
        %1636 = vmatmul.mubr.bf16.gmra.mrb[0].mxu0 %v1503
        %v1637 = vpop.f32.mrb[0].mxu0
        %v1638 = vadd.f32 0.0, %v1637
        %v1639 = vpop.f32.mrb[0].mxu0
        %v1640 = vpop.f32.mrb[0].mxu0
        %v1641 = vadd.f32 0.0, %v1640
        %v1642 = vpop.f32.mrb[0].mxu0
        %1643 = vmatprep.mubr.bf16.mxu0 0
        %1644 = vmatmul.mubr.bf16.gmra.mrb[0].mxu0 %v1506
        %v1645 = vpop.f32.mrb[0].mxu0
        %v1646 = vadd.f32 0.0, %v1645
        %v1647 = vpop.f32.mrb[0].mxu0
        %v1648 = vpop.f32.mrb[0].mxu0
        %v1649 = vadd.f32 0.0, %v1648
        %v1650 = vpop.f32.mrb[0].mxu0
        %1651 = vmatprep.mubr.bf16.mxu0 0
        %1652 = vmatmul.mubr.bf16.gmra.mrb[0].mxu0 %v1509
        %v1653 = vpop.f32.mrb[0].mxu0
        %v1654 = vadd.f32 0.0, %v1653
        %v1655 = vpop.f32.mrb[0].mxu0
        %v1656 = vpop.f32.mrb[0].mxu0
        %v1657 = vadd.f32 0.0, %v1656
        %v1658 = vpop.f32.mrb[0].mxu0
        %1659 = vmatprep.mubr.bf16.mxu0 0
        %1660 = vmatmul.mubr.bf16.gmra.mrb[0].mxu0 %v1512
        %v1661 = vpop.f32.mrb[0].mxu0
        %v1662 = vadd.f32 0.0, %v1661
        %v1663 = vpop.f32.mrb[0].mxu0
        %v1664 = vpop.f32.mrb[0].mxu0
        %v1665 = vadd.f32 0.0, %v1664
        %v1666 = vpop.f32.mrb[0].mxu0
        %1667 = vmatprep.mubr.bf16.mxu0 0
        %1668 = vmatmul.mubr.bf16.gmra.mrb[0].mxu0 %v1515
        %v1669 = vpop.f32.mrb[0].mxu0
        %v1670 = vadd.f32 0.0, %v1669
        %v1671 = vpop.f32.mrb[0].mxu0
        %v1672 = vpop.f32.mrb[0].mxu0
        %v1673 = vadd.f32 0.0, %v1672
        %v1674 = vpop.f32.mrb[0].mxu0
        %1675 = vmatprep.mubr.bf16.mxu0 0
        %1676 = vmatmul.mubr.bf16.gmra.mrb[0].mxu0 %v1518
        %v1677 = vpop.f32.mrb[0].mxu0
        %v1678 = vadd.f32 0.0, %v1677
        %v1679 = vpop.f32.mrb[0].mxu0
        %v1680 = vpop.f32.mrb[0].mxu0
        %v1681 = vadd.f32 0.0, %v1680
        %v1682 = vpop.f32.mrb[0].mxu0
        %1683 = vdwg.mxu0
        %v1684 = vadd.f32 %v1390, %v1558
        %v1685 = vadd.f32 %v1391, %v1561
        %v1686 = vadd.f32 %v1392, %v1566
        %v1687 = vadd.f32 %v1393, %v1569
        %v1688 = vadd.f32 %v1394, %v1574
        %v1689 = vadd.f32 %v1395, %v1577
        %v1690 = vadd.f32 %v1396, %v1582
        %v1691 = vadd.f32 %v1397, %v1585
        %v1692 = vadd.f32 %v1398, %v1590
        %v1693 = vadd.f32 %v1399, %v1593
        %v1694 = vadd.f32 %v1400, %v1598
        %v1695 = vadd.f32 %v1401, %v1601
        %v1696 = vadd.f32 %v1402, %v1606
        %v1697 = vadd.f32 %v1403, %v1609
        %v1698 = vadd.f32 %v1404, %v1614
        %v1699 = vadd.f32 %v1405, %v1617
        %v1700 = vadd.f32 %v1406, %v1622
        %v1701 = vadd.f32 %v1407, %v1625
        %v1702 = vadd.f32 %v1408, %v1630
        %v1703 = vadd.f32 %v1409, %v1633
        %v1704 = vadd.f32 %v1410, %v1638
        %v1705 = vadd.f32 %v1411, %v1641
        %v1706 = vadd.f32 %v1412, %v1646
        %v1707 = vadd.f32 %v1413, %v1649
        %v1708 = vadd.f32 %v1414, %v1654
        %v1709 = vadd.f32 %v1415, %v1657
        %v1710 = vadd.f32 %v1416, %v1662
        %v1711 = vadd.f32 %v1417, %v1665
        %v1712 = vadd.f32 %v1418, %v1670
        %v1713 = vadd.f32 %v1419, %v1673
        %v1714 = vadd.f32 %v1420, %v1678
        %v1715 = vadd.f32 %v1421, %v1681
        %v1716 = vld [vmem:[%s1127 + $0x2] sm:$0xff]
        %v1717 = vld [vmem:[%s1127 + $0xa] sm:$0xff]
        %v1718 = vld [vmem:[%s1127 + $0x1a] sm:$0xff]
        %v1719 = vld [vmem:[%s1127 + $0x22] sm:$0xff]
        %v1720 = vld [vmem:[%s1127 + $0x32] sm:$0xff]
        %v1721 = vld [vmem:[%s1127 + $0x3a] sm:$0xff]
        %v1722 = vld [vmem:[%s1127 + $0x4a] sm:$0xff]
        %v1723 = vld [vmem:[%s1127 + $0x52] sm:$0xff]
        %v1724 = vld [vmem:[%s1127 + $0x62] sm:$0xff]
        %v1725 = vld [vmem:[%s1127 + $0x6a] sm:$0xff]
        %v1726 = vld [vmem:[%s1127 + $0x7a] sm:$0xff]
        %v1727 = vld [vmem:[%s1127 + $0x82] sm:$0xff]
        %v1728 = vld [vmem:[%s1127 + $0x92] sm:$0xff]
        %v1729 = vld [vmem:[%s1127 + $0x9a] sm:$0xff]
        %v1730 = vld [vmem:[%s1127 + $0xaa] sm:$0xff]
        %v1731 = vld [vmem:[%s1127 + $0xb2] sm:$0xff]
        %v1732 = vld [vmem:[%s1127 + $0xc2] sm:$0xff]
        %v1733 = vld [vmem:[%s1127 + $0xca] sm:$0xff]
        %v1734 = vld [vmem:[%s1127 + $0xda] sm:$0xff]
        %v1735 = vld [vmem:[%s1127 + $0xe2] sm:$0xff]
        %v1736 = vld [vmem:[%s1127 + $0xf2] sm:$0xff]
        %v1737 = vld [vmem:[%s1127 + $0xfa] sm:$0xff]
        %v1738 = vld [vmem:[%s1127 + $0x10a] sm:$0xff]
        %v1739 = vld [vmem:[%s1127 + $0x112] sm:$0xff]
        %v1740 = vld [vmem:[%s1127 + $0x122] sm:$0xff]
        %v1741 = vld [vmem:[%s1127 + $0x12a] sm:$0xff]
        %v1742 = vld [vmem:[%s1127 + $0x13a] sm:$0xff]
        %v1743 = vld [vmem:[%s1127 + $0x142] sm:$0xff]
        %v1744 = vld [vmem:[%s1127 + $0x152] sm:$0xff]
        %v1745 = vld [vmem:[%s1127 + $0x15a] sm:$0xff]
        %v1746 = vld [vmem:[%s1127 + $0x16a] sm:$0xff]
        %v1747 = vld [vmem:[%s1127 + $0x172] sm:$0xff]
        %v1748 = vpack.c.bf16 %v1717, %v1716
        %v1749 = vpack.c.bf16 %v1719, %v1718
        %v1750 = vpack.c.bf16 %v1721, %v1720
        %v1751 = vpack.c.bf16 %v1723, %v1722
        %v1752 = vpack.c.bf16 %v1725, %v1724
        %v1753 = vpack.c.bf16 %v1727, %v1726
        %v1754 = vpack.c.bf16 %v1729, %v1728
        %v1755 = vpack.c.bf16 %v1731, %v1730
        %v1756 = vpack.c.bf16 %v1733, %v1732
        %v1757 = vpack.c.bf16 %v1735, %v1734
        %v1758 = vpack.c.bf16 %v1737, %v1736
        %v1759 = vpack.c.bf16 %v1739, %v1738
        %v1760 = vpack.c.bf16 %v1741, %v1740
        %v1761 = vpack.c.bf16 %v1743, %v1742
        %v1762 = vpack.c.bf16 %v1745, %v1744
        %v1763 = vpack.c.bf16 %v1747, %v1746
        %s1764 = scalar_lea.vmem %s1, 10
        %v1765 = vld [vmem:[%s1764] sm:$0x3]
        %v1767 = vsel %vm404, %v1748, 0
        %v1770 = vsel %vm404, %v1749, 0
        %v1773 = vsel %vm404, %v1750, 0
        %v1776 = vsel %vm404, %v1751, 0
        %v1779 = vsel %vm404, %v1752, 0
        %v1782 = vsel %vm404, %v1753, 0
        %v1785 = vsel %vm404, %v1754, 0
        %v1788 = vsel %vm404, %v1755, 0
        %v1791 = vsel %vm404, %v1756, 0
        %v1794 = vsel %vm404, %v1757, 0
        %v1797 = vsel %vm404, %v1758, 0
        %v1800 = vsel %vm404, %v1759, 0
        %v1803 = vsel %vm404, %v1760, 0
        %v1806 = vsel %vm404, %v1761, 0
        %v1809 = vsel %vm404, %v1762, 0
        %v1812 = vsel %vm404, %v1763, 0
        %v1815 = vand.u32 %v1765, %v456
        %1817 = vmatprep.subr.bf16.mxu0 0
        %1818 = vmatpush1.bf16.msra.mxu0 %v1815
        %1819 = vmatprep.subr.bf16.mxu0 0
        %1820 = vmatpush1.bf16.msra.mxu0 0
        %1821 = vmatprep.subr.bf16.mxu0 0
        %1822 = vmatpush1.bf16.msra.mxu0 0
        %1823 = vmatprep.subr.bf16.mxu0 0
        %1824 = vmatpush1.bf16.msra.mxu0 0
        %1825 = vmatprep.subr.bf16.mxu0 0
        %1826 = vmatpush1.bf16.msra.mxu0 0
        %1827 = vmatprep.subr.bf16.mxu0 0
        %1828 = vmatpush1.bf16.msra.mxu0 0
        %1829 = vmatprep.subr.bf16.mxu0 0
        %1830 = vmatpush1.bf16.msra.mxu0 0
        %1831 = vmatprep.subr.bf16.mxu0 0
        %1832 = vmatpush1.bf16.msra.mxu0 0
        %1833 = vmatprep.subr.bf16.mxu0 0
        %1834 = vmatpush1.bf16.msra.mxu0 0
        %1835 = vmatprep.subr.bf16.mxu0 0
        %1836 = vmatpush1.bf16.msra.mxu0 0
        %1837 = vmatprep.subr.bf16.mxu0 0
        %1838 = vmatpush1.bf16.msra.mxu0 0
        %1839 = vmatprep.subr.bf16.mxu0 0
        %1840 = vmatpush1.bf16.msra.mxu0 0
        %1841 = vmatprep.subr.bf16.mxu0 0
        %1842 = vmatpush1.bf16.msra.mxu0 0
        %1843 = vmatprep.subr.bf16.mxu0 0
        %1844 = vmatpush1.bf16.msra.mxu0 0
        %1845 = vmatprep.subr.bf16.mxu0 0
        %1846 = vmatpush1.bf16.msra.mxu0 0
        %1847 = vmatprep.subr.bf16.mxu0 0
        %1848 = vmatpush1.bf16.msra.mxu0 0
        %1849 = vmatprep.mubr.bf16.mxu0 0
        %1850 = vmatmul.mubr.bf16.gmra.mrb[0].mxu0 %v1767
        %v1851 = vpop.f32.mrb[0].mxu0
        %v1852 = vadd.f32 0.0, %v1851
        %v1853 = vpop.f32.mrb[0].mxu0
        %v1854 = vpop.f32.mrb[0].mxu0
        %v1855 = vadd.f32 0.0, %v1854
        %v1856 = vpop.f32.mrb[0].mxu0
        %1857 = vmatprep.mubr.bf16.mxu0 0
        %1858 = vmatmul.mubr.bf16.gmra.mrb[0].mxu0 %v1770
        %v1859 = vpop.f32.mrb[0].mxu0
        %v1860 = vadd.f32 0.0, %v1859
        %v1861 = vpop.f32.mrb[0].mxu0
        %v1862 = vpop.f32.mrb[0].mxu0
        %v1863 = vadd.f32 0.0, %v1862
        %v1864 = vpop.f32.mrb[0].mxu0
        %1865 = vmatprep.mubr.bf16.mxu0 0
        %1866 = vmatmul.mubr.bf16.gmra.mrb[0].mxu0 %v1773
        %v1867 = vpop.f32.mrb[0].mxu0
        %v1868 = vadd.f32 0.0, %v1867
        %v1869 = vpop.f32.mrb[0].mxu0
        %v1870 = vpop.f32.mrb[0].mxu0
        %v1871 = vadd.f32 0.0, %v1870
        %v1872 = vpop.f32.mrb[0].mxu0
        %1873 = vmatprep.mubr.bf16.mxu0 0
        %1874 = vmatmul.mubr.bf16.gmra.mrb[0].mxu0 %v1776
        %v1875 = vpop.f32.mrb[0].mxu0
        %v1876 = vadd.f32 0.0, %v1875
        %v1877 = vpop.f32.mrb[0].mxu0
        %v1878 = vpop.f32.mrb[0].mxu0
        %v1879 = vadd.f32 0.0, %v1878
        %v1880 = vpop.f32.mrb[0].mxu0
        %1881 = vmatprep.mubr.bf16.mxu0 0
        %1882 = vmatmul.mubr.bf16.gmra.mrb[0].mxu0 %v1779
        %v1883 = vpop.f32.mrb[0].mxu0
        %v1884 = vadd.f32 0.0, %v1883
        %v1885 = vpop.f32.mrb[0].mxu0
        %v1886 = vpop.f32.mrb[0].mxu0
        %v1887 = vadd.f32 0.0, %v1886
        %v1888 = vpop.f32.mrb[0].mxu0
        %1889 = vmatprep.mubr.bf16.mxu0 0
        %1890 = vmatmul.mubr.bf16.gmra.mrb[0].mxu0 %v1782
        %v1891 = vpop.f32.mrb[0].mxu0
        %v1892 = vadd.f32 0.0, %v1891
        %v1893 = vpop.f32.mrb[0].mxu0
        %v1894 = vpop.f32.mrb[0].mxu0
        %v1895 = vadd.f32 0.0, %v1894
        %v1896 = vpop.f32.mrb[0].mxu0
        %1897 = vmatprep.mubr.bf16.mxu0 0
        %1898 = vmatmul.mubr.bf16.gmra.mrb[0].mxu0 %v1785
        %v1899 = vpop.f32.mrb[0].mxu0
        %v1900 = vadd.f32 0.0, %v1899
        %v1901 = vpop.f32.mrb[0].mxu0
        %v1902 = vpop.f32.mrb[0].mxu0
        %v1903 = vadd.f32 0.0, %v1902
        %v1904 = vpop.f32.mrb[0].mxu0
        %1905 = vmatprep.mubr.bf16.mxu0 0
        %1906 = vmatmul.mubr.bf16.gmra.mrb[0].mxu0 %v1788
        %v1907 = vpop.f32.mrb[0].mxu0
        %v1908 = vadd.f32 0.0, %v1907
        %v1909 = vpop.f32.mrb[0].mxu0
        %v1910 = vpop.f32.mrb[0].mxu0
        %v1911 = vadd.f32 0.0, %v1910
        %v1912 = vpop.f32.mrb[0].mxu0
        %1913 = vmatprep.mubr.bf16.mxu0 0
        %1914 = vmatmul.mubr.bf16.gmra.mrb[0].mxu0 %v1791
        %v1915 = vpop.f32.mrb[0].mxu0
        %v1916 = vadd.f32 0.0, %v1915
        %v1917 = vpop.f32.mrb[0].mxu0
        %v1918 = vpop.f32.mrb[0].mxu0
        %v1919 = vadd.f32 0.0, %v1918
        %v1920 = vpop.f32.mrb[0].mxu0
        %1921 = vmatprep.mubr.bf16.mxu0 0
        %1922 = vmatmul.mubr.bf16.gmra.mrb[0].mxu0 %v1794
        %v1923 = vpop.f32.mrb[0].mxu0
        %v1924 = vadd.f32 0.0, %v1923
        %v1925 = vpop.f32.mrb[0].mxu0
        %v1926 = vpop.f32.mrb[0].mxu0
        %v1927 = vadd.f32 0.0, %v1926
        %v1928 = vpop.f32.mrb[0].mxu0
        %1929 = vmatprep.mubr.bf16.mxu0 0
        %1930 = vmatmul.mubr.bf16.gmra.mrb[0].mxu0 %v1797
        %v1931 = vpop.f32.mrb[0].mxu0
        %v1932 = vadd.f32 0.0, %v1931
        %v1933 = vpop.f32.mrb[0].mxu0
        %v1934 = vpop.f32.mrb[0].mxu0
        %v1935 = vadd.f32 0.0, %v1934
        %v1936 = vpop.f32.mrb[0].mxu0
        %1937 = vmatprep.mubr.bf16.mxu0 0
        %1938 = vmatmul.mubr.bf16.gmra.mrb[0].mxu0 %v1800
        %v1939 = vpop.f32.mrb[0].mxu0
        %v1940 = vadd.f32 0.0, %v1939
        %v1941 = vpop.f32.mrb[0].mxu0
        %v1942 = vpop.f32.mrb[0].mxu0
        %v1943 = vadd.f32 0.0, %v1942
        %v1944 = vpop.f32.mrb[0].mxu0
        %1945 = vmatprep.mubr.bf16.mxu0 0
        %1946 = vmatmul.mubr.bf16.gmra.mrb[0].mxu0 %v1803
        %v1947 = vpop.f32.mrb[0].mxu0
        %v1948 = vadd.f32 0.0, %v1947
        %v1949 = vpop.f32.mrb[0].mxu0
        %v1950 = vpop.f32.mrb[0].mxu0
        %v1951 = vadd.f32 0.0, %v1950
        %v1952 = vpop.f32.mrb[0].mxu0
        %1953 = vmatprep.mubr.bf16.mxu0 0
        %1954 = vmatmul.mubr.bf16.gmra.mrb[0].mxu0 %v1806
        %v1955 = vpop.f32.mrb[0].mxu0
        %v1956 = vadd.f32 0.0, %v1955
        %v1957 = vpop.f32.mrb[0].mxu0
        %v1958 = vpop.f32.mrb[0].mxu0
        %v1959 = vadd.f32 0.0, %v1958
        %v1960 = vpop.f32.mrb[0].mxu0
        %1961 = vmatprep.mubr.bf16.mxu0 0
        %1962 = vmatmul.mubr.bf16.gmra.mrb[0].mxu0 %v1809
        %v1963 = vpop.f32.mrb[0].mxu0
        %v1964 = vadd.f32 0.0, %v1963
        %v1965 = vpop.f32.mrb[0].mxu0
        %v1966 = vpop.f32.mrb[0].mxu0
        %v1967 = vadd.f32 0.0, %v1966
        %v1968 = vpop.f32.mrb[0].mxu0
        %1969 = vmatprep.mubr.bf16.mxu0 0
        %1970 = vmatmul.mubr.bf16.gmra.mrb[0].mxu0 %v1812
        %v1971 = vpop.f32.mrb[0].mxu0
        %v1972 = vadd.f32 0.0, %v1971
        %v1973 = vpop.f32.mrb[0].mxu0
        %v1974 = vpop.f32.mrb[0].mxu0
        %v1975 = vadd.f32 0.0, %v1974
        %v1976 = vpop.f32.mrb[0].mxu0
        %1977 = vdwg.mxu0
        %v1978 = vadd.f32 %v1684, %v1852
        %v1979 = vadd.f32 %v1685, %v1855
        %v1980 = vadd.f32 %v1686, %v1860
        %v1981 = vadd.f32 %v1687, %v1863
        %v1982 = vadd.f32 %v1688, %v1868
        %v1983 = vadd.f32 %v1689, %v1871
        %v1984 = vadd.f32 %v1690, %v1876
        %v1985 = vadd.f32 %v1691, %v1879
        %v1986 = vadd.f32 %v1692, %v1884
        %v1987 = vadd.f32 %v1693, %v1887
        %v1988 = vadd.f32 %v1694, %v1892
        %v1989 = vadd.f32 %v1695, %v1895
        %v1990 = vadd.f32 %v1696, %v1900
        %v1991 = vadd.f32 %v1697, %v1903
        %v1992 = vadd.f32 %v1698, %v1908
        %v1993 = vadd.f32 %v1699, %v1911
        %v1994 = vadd.f32 %v1700, %v1916
        %v1995 = vadd.f32 %v1701, %v1919
        %v1996 = vadd.f32 %v1702, %v1924
        %v1997 = vadd.f32 %v1703, %v1927
        %v1998 = vadd.f32 %v1704, %v1932
        %v1999 = vadd.f32 %v1705, %v1935
        %v2000 = vadd.f32 %v1706, %v1940
        %v2001 = vadd.f32 %v1707, %v1943
        %v2002 = vadd.f32 %v1708, %v1948
        %v2003 = vadd.f32 %v1709, %v1951
        %v2004 = vadd.f32 %v1710, %v1956
        %v2005 = vadd.f32 %v1711, %v1959
        %v2006 = vadd.f32 %v1712, %v1964
        %v2007 = vadd.f32 %v1713, %v1967
        %v2008 = vadd.f32 %v1714, %v1972
        %v2009 = vadd.f32 %v1715, %v1975
        %s2010 = scalar_lea.vmem %s303, 48
        %v2011 = vld [vmem:[%s2010] sm:$0xff]
        %v2012 = vld [vmem:[%s2010 + $0x8] sm:$0xff]
        %v2013 = vld [vmem:[%s2010 + $0x18] sm:$0xff]
        %v2014 = vld [vmem:[%s2010 + $0x20] sm:$0xff]
        %v2015 = vld [vmem:[%s2010 + $0x30] sm:$0xff]
        %v2016 = vld [vmem:[%s2010 + $0x38] sm:$0xff]
        %v2017 = vld [vmem:[%s2010 + $0x48] sm:$0xff]
        %v2018 = vld [vmem:[%s2010 + $0x50] sm:$0xff]
        %v2019 = vld [vmem:[%s2010 + $0x60] sm:$0xff]
        %v2020 = vld [vmem:[%s2010 + $0x68] sm:$0xff]
        %v2021 = vld [vmem:[%s2010 + $0x78] sm:$0xff]
        %v2022 = vld [vmem:[%s2010 + $0x80] sm:$0xff]
        %v2023 = vld [vmem:[%s2010 + $0x90] sm:$0xff]
        %v2024 = vld [vmem:[%s2010 + $0x98] sm:$0xff]
        %v2025 = vld [vmem:[%s2010 + $0xa8] sm:$0xff]
        %v2026 = vld [vmem:[%s2010 + $0xb0] sm:$0xff]
        %v2027 = vld [vmem:[%s2010 + $0xc0] sm:$0xff]
        %v2028 = vld [vmem:[%s2010 + $0xc8] sm:$0xff]
        %v2029 = vld [vmem:[%s2010 + $0xd8] sm:$0xff]
        %v2030 = vld [vmem:[%s2010 + $0xe0] sm:$0xff]
        %v2031 = vld [vmem:[%s2010 + $0xf0] sm:$0xff]
        %v2032 = vld [vmem:[%s2010 + $0xf8] sm:$0xff]
        %v2033 = vld [vmem:[%s2010 + $0x108] sm:$0xff]
        %v2034 = vld [vmem:[%s2010 + $0x110] sm:$0xff]
        %v2035 = vld [vmem:[%s2010 + $0x120] sm:$0xff]
        %v2036 = vld [vmem:[%s2010 + $0x128] sm:$0xff]
        %v2037 = vld [vmem:[%s2010 + $0x138] sm:$0xff]
        %v2038 = vld [vmem:[%s2010 + $0x140] sm:$0xff]
        %v2039 = vld [vmem:[%s2010 + $0x150] sm:$0xff]
        %v2040 = vld [vmem:[%s2010 + $0x158] sm:$0xff]
        %v2041 = vld [vmem:[%s2010 + $0x168] sm:$0xff]
        %v2042 = vld [vmem:[%s2010 + $0x170] sm:$0xff]
        %v2043 = vpack.c.bf16 %v2012, %v2011
        %v2044 = vpack.c.bf16 %v2014, %v2013
        %v2045 = vpack.c.bf16 %v2016, %v2015
        %v2046 = vpack.c.bf16 %v2018, %v2017
        %v2047 = vpack.c.bf16 %v2020, %v2019
        %v2048 = vpack.c.bf16 %v2022, %v2021
        %v2049 = vpack.c.bf16 %v2024, %v2023
        %v2050 = vpack.c.bf16 %v2026, %v2025
        %v2051 = vpack.c.bf16 %v2028, %v2027
        %v2052 = vpack.c.bf16 %v2030, %v2029
        %v2053 = vpack.c.bf16 %v2032, %v2031
        %v2054 = vpack.c.bf16 %v2034, %v2033
        %v2055 = vpack.c.bf16 %v2036, %v2035
        %v2056 = vpack.c.bf16 %v2038, %v2037
        %v2057 = vpack.c.bf16 %v2040, %v2039
        %v2058 = vpack.c.bf16 %v2042, %v2041
        %s2059 = scalar_lea.vmem %s1, 12
        %v2060 = vld [vmem:[%s2059] sm:$0x3]
        %v2062 = vsel %vm404, %v2043, 0
        %v2065 = vsel %vm404, %v2044, 0
        %v2068 = vsel %vm404, %v2045, 0
        %v2071 = vsel %vm404, %v2046, 0
        %v2074 = vsel %vm404, %v2047, 0
        %v2077 = vsel %vm404, %v2048, 0
        %v2080 = vsel %vm404, %v2049, 0
        %v2083 = vsel %vm404, %v2050, 0
        %v2086 = vsel %vm404, %v2051, 0
        %v2089 = vsel %vm404, %v2052, 0
        %v2092 = vsel %vm404, %v2053, 0
        %v2095 = vsel %vm404, %v2054, 0
        %v2098 = vsel %vm404, %v2055, 0
        %v2101 = vsel %vm404, %v2056, 0
        %v2104 = vsel %vm404, %v2057, 0
        %v2107 = vsel %vm404, %v2058, 0
        %v2110 = vand.u32 %v2060, %v456
        %2112 = vmatprep.subr.bf16.mxu0 0
        %2113 = vmatpush1.bf16.msra.mxu0 %v2110
        %2114 = vmatprep.subr.bf16.mxu0 0
        %2115 = vmatpush1.bf16.msra.mxu0 0
        %2116 = vmatprep.subr.bf16.mxu0 0
        %2117 = vmatpush1.bf16.msra.mxu0 0
        %2118 = vmatprep.subr.bf16.mxu0 0
        %2119 = vmatpush1.bf16.msra.mxu0 0
        %2120 = vmatprep.subr.bf16.mxu0 0
        %2121 = vmatpush1.bf16.msra.mxu0 0
        %2122 = vmatprep.subr.bf16.mxu0 0
        %2123 = vmatpush1.bf16.msra.mxu0 0
        %2124 = vmatprep.subr.bf16.mxu0 0
        %2125 = vmatpush1.bf16.msra.mxu0 0
        %2126 = vmatprep.subr.bf16.mxu0 0
        %2127 = vmatpush1.bf16.msra.mxu0 0
        %2128 = vmatprep.subr.bf16.mxu0 0
        %2129 = vmatpush1.bf16.msra.mxu0 0
        %2130 = vmatprep.subr.bf16.mxu0 0
        %2131 = vmatpush1.bf16.msra.mxu0 0
        %2132 = vmatprep.subr.bf16.mxu0 0
        %2133 = vmatpush1.bf16.msra.mxu0 0
        %2134 = vmatprep.subr.bf16.mxu0 0
        %2135 = vmatpush1.bf16.msra.mxu0 0
        %2136 = vmatprep.subr.bf16.mxu0 0
        %2137 = vmatpush1.bf16.msra.mxu0 0
        %2138 = vmatprep.subr.bf16.mxu0 0
        %2139 = vmatpush1.bf16.msra.mxu0 0
        %2140 = vmatprep.subr.bf16.mxu0 0
        %2141 = vmatpush1.bf16.msra.mxu0 0
        %2142 = vmatprep.subr.bf16.mxu0 0
        %2143 = vmatpush1.bf16.msra.mxu0 0
        %2144 = vmatprep.mubr.bf16.mxu0 0
        %2145 = vmatmul.mubr.bf16.gmra.mrb[0].mxu0 %v2062
        %v2146 = vpop.f32.mrb[0].mxu0
        %v2147 = vadd.f32 0.0, %v2146
        %v2148 = vpop.f32.mrb[0].mxu0
        %v2149 = vpop.f32.mrb[0].mxu0
        %v2150 = vadd.f32 0.0, %v2149
        %v2151 = vpop.f32.mrb[0].mxu0
        %2152 = vmatprep.mubr.bf16.mxu0 0
        %2153 = vmatmul.mubr.bf16.gmra.mrb[0].mxu0 %v2065
        %v2154 = vpop.f32.mrb[0].mxu0
        %v2155 = vadd.f32 0.0, %v2154
        %v2156 = vpop.f32.mrb[0].mxu0
        %v2157 = vpop.f32.mrb[0].mxu0
        %v2158 = vadd.f32 0.0, %v2157
        %v2159 = vpop.f32.mrb[0].mxu0
        %2160 = vmatprep.mubr.bf16.mxu0 0
        %2161 = vmatmul.mubr.bf16.gmra.mrb[0].mxu0 %v2068
        %v2162 = vpop.f32.mrb[0].mxu0
        %v2163 = vadd.f32 0.0, %v2162
        %v2164 = vpop.f32.mrb[0].mxu0
        %v2165 = vpop.f32.mrb[0].mxu0
        %v2166 = vadd.f32 0.0, %v2165
        %v2167 = vpop.f32.mrb[0].mxu0
        %2168 = vmatprep.mubr.bf16.mxu0 0
        %2169 = vmatmul.mubr.bf16.gmra.mrb[0].mxu0 %v2071
        %v2170 = vpop.f32.mrb[0].mxu0
        %v2171 = vadd.f32 0.0, %v2170
        %v2172 = vpop.f32.mrb[0].mxu0
        %v2173 = vpop.f32.mrb[0].mxu0
        %v2174 = vadd.f32 0.0, %v2173
        %v2175 = vpop.f32.mrb[0].mxu0
        %2176 = vmatprep.mubr.bf16.mxu0 0
        %2177 = vmatmul.mubr.bf16.gmra.mrb[0].mxu0 %v2074
        %v2178 = vpop.f32.mrb[0].mxu0
        %v2179 = vadd.f32 0.0, %v2178
        %v2180 = vpop.f32.mrb[0].mxu0
        %v2181 = vpop.f32.mrb[0].mxu0
        %v2182 = vadd.f32 0.0, %v2181
        %v2183 = vpop.f32.mrb[0].mxu0
        %2184 = vmatprep.mubr.bf16.mxu0 0
        %2185 = vmatmul.mubr.bf16.gmra.mrb[0].mxu0 %v2077
        %v2186 = vpop.f32.mrb[0].mxu0
        %v2187 = vadd.f32 0.0, %v2186
        %v2188 = vpop.f32.mrb[0].mxu0
        %v2189 = vpop.f32.mrb[0].mxu0
        %v2190 = vadd.f32 0.0, %v2189
        %v2191 = vpop.f32.mrb[0].mxu0
        %2192 = vmatprep.mubr.bf16.mxu0 0
        %2193 = vmatmul.mubr.bf16.gmra.mrb[0].mxu0 %v2080
        %v2194 = vpop.f32.mrb[0].mxu0
        %v2195 = vadd.f32 0.0, %v2194
        %v2196 = vpop.f32.mrb[0].mxu0
        %v2197 = vpop.f32.mrb[0].mxu0
        %v2198 = vadd.f32 0.0, %v2197
        %v2199 = vpop.f32.mrb[0].mxu0
        %2200 = vmatprep.mubr.bf16.mxu0 0
        %2201 = vmatmul.mubr.bf16.gmra.mrb[0].mxu0 %v2083
        %v2202 = vpop.f32.mrb[0].mxu0
        %v2203 = vadd.f32 0.0, %v2202
        %v2204 = vpop.f32.mrb[0].mxu0
        %v2205 = vpop.f32.mrb[0].mxu0
        %v2206 = vadd.f32 0.0, %v2205
        %v2207 = vpop.f32.mrb[0].mxu0
        %2208 = vmatprep.mubr.bf16.mxu0 0
        %2209 = vmatmul.mubr.bf16.gmra.mrb[0].mxu0 %v2086
        %v2210 = vpop.f32.mrb[0].mxu0
        %v2211 = vadd.f32 0.0, %v2210
        %v2212 = vpop.f32.mrb[0].mxu0
        %v2213 = vpop.f32.mrb[0].mxu0
        %v2214 = vadd.f32 0.0, %v2213
        %v2215 = vpop.f32.mrb[0].mxu0
        %2216 = vmatprep.mubr.bf16.mxu0 0
        %2217 = vmatmul.mubr.bf16.gmra.mrb[0].mxu0 %v2089
        %v2218 = vpop.f32.mrb[0].mxu0
        %v2219 = vadd.f32 0.0, %v2218
        %v2220 = vpop.f32.mrb[0].mxu0
        %v2221 = vpop.f32.mrb[0].mxu0
        %v2222 = vadd.f32 0.0, %v2221
        %v2223 = vpop.f32.mrb[0].mxu0
        %2224 = vmatprep.mubr.bf16.mxu0 0
        %2225 = vmatmul.mubr.bf16.gmra.mrb[0].mxu0 %v2092
        %v2226 = vpop.f32.mrb[0].mxu0
        %v2227 = vadd.f32 0.0, %v2226
        %v2228 = vpop.f32.mrb[0].mxu0
        %v2229 = vpop.f32.mrb[0].mxu0
        %v2230 = vadd.f32 0.0, %v2229
        %v2231 = vpop.f32.mrb[0].mxu0
        %2232 = vmatprep.mubr.bf16.mxu0 0
        %2233 = vmatmul.mubr.bf16.gmra.mrb[0].mxu0 %v2095
        %v2234 = vpop.f32.mrb[0].mxu0
        %v2235 = vadd.f32 0.0, %v2234
        %v2236 = vpop.f32.mrb[0].mxu0
        %v2237 = vpop.f32.mrb[0].mxu0
        %v2238 = vadd.f32 0.0, %v2237
        %v2239 = vpop.f32.mrb[0].mxu0
        %2240 = vmatprep.mubr.bf16.mxu0 0
        %2241 = vmatmul.mubr.bf16.gmra.mrb[0].mxu0 %v2098
        %v2242 = vpop.f32.mrb[0].mxu0
        %v2243 = vadd.f32 0.0, %v2242
        %v2244 = vpop.f32.mrb[0].mxu0
        %v2245 = vpop.f32.mrb[0].mxu0
        %v2246 = vadd.f32 0.0, %v2245
        %v2247 = vpop.f32.mrb[0].mxu0
        %2248 = vmatprep.mubr.bf16.mxu0 0
        %2249 = vmatmul.mubr.bf16.gmra.mrb[0].mxu0 %v2101
        %v2250 = vpop.f32.mrb[0].mxu0
        %v2251 = vadd.f32 0.0, %v2250
        %v2252 = vpop.f32.mrb[0].mxu0
        %v2253 = vpop.f32.mrb[0].mxu0
        %v2254 = vadd.f32 0.0, %v2253
        %v2255 = vpop.f32.mrb[0].mxu0
        %2256 = vmatprep.mubr.bf16.mxu0 0
        %2257 = vmatmul.mubr.bf16.gmra.mrb[0].mxu0 %v2104
        %v2258 = vpop.f32.mrb[0].mxu0
        %v2259 = vadd.f32 0.0, %v2258
        %v2260 = vpop.f32.mrb[0].mxu0
        %v2261 = vpop.f32.mrb[0].mxu0
        %v2262 = vadd.f32 0.0, %v2261
        %v2263 = vpop.f32.mrb[0].mxu0
        %2264 = vmatprep.mubr.bf16.mxu0 0
        %2265 = vmatmul.mubr.bf16.gmra.mrb[0].mxu0 %v2107
        %v2266 = vpop.f32.mrb[0].mxu0
        %v2267 = vadd.f32 0.0, %v2266
        %v2268 = vpop.f32.mrb[0].mxu0
        %v2269 = vpop.f32.mrb[0].mxu0
        %v2270 = vadd.f32 0.0, %v2269
        %v2271 = vpop.f32.mrb[0].mxu0
        %2272 = vdwg.mxu0
        %v2273 = vadd.f32 %v1978, %v2147
        %v2274 = vadd.f32 %v1979, %v2150
        %v2275 = vadd.f32 %v1980, %v2155
        %v2276 = vadd.f32 %v1981, %v2158
        %v2277 = vadd.f32 %v1982, %v2163
        %v2278 = vadd.f32 %v1983, %v2166
        %v2279 = vadd.f32 %v1984, %v2171
        %v2280 = vadd.f32 %v1985, %v2174
        %v2281 = vadd.f32 %v1986, %v2179
        %v2282 = vadd.f32 %v1987, %v2182
        %v2283 = vadd.f32 %v1988, %v2187
        %v2284 = vadd.f32 %v1989, %v2190
        %v2285 = vadd.f32 %v1990, %v2195
        %v2286 = vadd.f32 %v1991, %v2198
        %v2287 = vadd.f32 %v1992, %v2203
        %v2288 = vadd.f32 %v1993, %v2206
        %v2289 = vadd.f32 %v1994, %v2211
        %v2290 = vadd.f32 %v1995, %v2214
        %v2291 = vadd.f32 %v1996, %v2219
        %v2292 = vadd.f32 %v1997, %v2222
        %v2293 = vadd.f32 %v1998, %v2227
        %v2294 = vadd.f32 %v1999, %v2230
        %v2295 = vadd.f32 %v2000, %v2235
        %v2296 = vadd.f32 %v2001, %v2238
        %v2297 = vadd.f32 %v2002, %v2243
        %v2298 = vadd.f32 %v2003, %v2246
        %v2299 = vadd.f32 %v2004, %v2251
        %v2300 = vadd.f32 %v2005, %v2254
        %v2301 = vadd.f32 %v2006, %v2259
        %v2302 = vadd.f32 %v2007, %v2262
        %v2303 = vadd.f32 %v2008, %v2267
        %v2304 = vadd.f32 %v2009, %v2270
        %v2305 = vld [vmem:[%s2010 + $0x1] sm:$0xff]
        %v2306 = vld [vmem:[%s2010 + $0x9] sm:$0xff]
        %v2307 = vld [vmem:[%s2010 + $0x19] sm:$0xff]
        %v2308 = vld [vmem:[%s2010 + $0x21] sm:$0xff]
        %v2309 = vld [vmem:[%s2010 + $0x31] sm:$0xff]
        %v2310 = vld [vmem:[%s2010 + $0x39] sm:$0xff]
        %v2311 = vld [vmem:[%s2010 + $0x49] sm:$0xff]
        %v2312 = vld [vmem:[%s2010 + $0x51] sm:$0xff]
        %v2313 = vld [vmem:[%s2010 + $0x61] sm:$0xff]
        %v2314 = vld [vmem:[%s2010 + $0x69] sm:$0xff]
        %v2315 = vld [vmem:[%s2010 + $0x79] sm:$0xff]
        %v2316 = vld [vmem:[%s2010 + $0x81] sm:$0xff]
        %v2317 = vld [vmem:[%s2010 + $0x91] sm:$0xff]
        %v2318 = vld [vmem:[%s2010 + $0x99] sm:$0xff]
        %v2319 = vld [vmem:[%s2010 + $0xa9] sm:$0xff]
        %v2320 = vld [vmem:[%s2010 + $0xb1] sm:$0xff]
        %v2321 = vld [vmem:[%s2010 + $0xc1] sm:$0xff]
        %v2322 = vld [vmem:[%s2010 + $0xc9] sm:$0xff]
        %v2323 = vld [vmem:[%s2010 + $0xd9] sm:$0xff]
        %v2324 = vld [vmem:[%s2010 + $0xe1] sm:$0xff]
        %v2325 = vld [vmem:[%s2010 + $0xf1] sm:$0xff]
        %v2326 = vld [vmem:[%s2010 + $0xf9] sm:$0xff]
        %v2327 = vld [vmem:[%s2010 + $0x109] sm:$0xff]
        %v2328 = vld [vmem:[%s2010 + $0x111] sm:$0xff]
        %v2329 = vld [vmem:[%s2010 + $0x121] sm:$0xff]
        %v2330 = vld [vmem:[%s2010 + $0x129] sm:$0xff]
        %v2331 = vld [vmem:[%s2010 + $0x139] sm:$0xff]
        %v2332 = vld [vmem:[%s2010 + $0x141] sm:$0xff]
        %v2333 = vld [vmem:[%s2010 + $0x151] sm:$0xff]
        %v2334 = vld [vmem:[%s2010 + $0x159] sm:$0xff]
        %v2335 = vld [vmem:[%s2010 + $0x169] sm:$0xff]
        %v2336 = vld [vmem:[%s2010 + $0x171] sm:$0xff]
        %v2337 = vpack.c.bf16 %v2306, %v2305
        %v2338 = vpack.c.bf16 %v2308, %v2307
        %v2339 = vpack.c.bf16 %v2310, %v2309
        %v2340 = vpack.c.bf16 %v2312, %v2311
        %v2341 = vpack.c.bf16 %v2314, %v2313
        %v2342 = vpack.c.bf16 %v2316, %v2315
        %v2343 = vpack.c.bf16 %v2318, %v2317
        %v2344 = vpack.c.bf16 %v2320, %v2319
        %v2345 = vpack.c.bf16 %v2322, %v2321
        %v2346 = vpack.c.bf16 %v2324, %v2323
        %v2347 = vpack.c.bf16 %v2326, %v2325
        %v2348 = vpack.c.bf16 %v2328, %v2327
        %v2349 = vpack.c.bf16 %v2330, %v2329
        %v2350 = vpack.c.bf16 %v2332, %v2331
        %v2351 = vpack.c.bf16 %v2334, %v2333
        %v2352 = vpack.c.bf16 %v2336, %v2335
        %s2353 = scalar_lea.vmem %s1, 14
        %v2354 = vld [vmem:[%s2353] sm:$0x3]
        %v2356 = vsel %vm404, %v2337, 0
        %v2359 = vsel %vm404, %v2338, 0
        %v2362 = vsel %vm404, %v2339, 0
        %v2365 = vsel %vm404, %v2340, 0
        %v2368 = vsel %vm404, %v2341, 0
        %v2371 = vsel %vm404, %v2342, 0
        %v2374 = vsel %vm404, %v2343, 0
        %v2377 = vsel %vm404, %v2344, 0
        %v2380 = vsel %vm404, %v2345, 0
        %v2383 = vsel %vm404, %v2346, 0
        %v2386 = vsel %vm404, %v2347, 0
        %v2389 = vsel %vm404, %v2348, 0
        %v2392 = vsel %vm404, %v2349, 0
        %v2395 = vsel %vm404, %v2350, 0
        %v2398 = vsel %vm404, %v2351, 0
        %v2401 = vsel %vm404, %v2352, 0
        %v2404 = vand.u32 %v2354, %v456
        %2406 = vmatprep.subr.bf16.mxu0 0
        %2407 = vmatpush1.bf16.msra.mxu0 %v2404
        %2408 = vmatprep.subr.bf16.mxu0 0
        %2409 = vmatpush1.bf16.msra.mxu0 0
        %2410 = vmatprep.subr.bf16.mxu0 0
        %2411 = vmatpush1.bf16.msra.mxu0 0
        %2412 = vmatprep.subr.bf16.mxu0 0
        %2413 = vmatpush1.bf16.msra.mxu0 0
        %2414 = vmatprep.subr.bf16.mxu0 0
        %2415 = vmatpush1.bf16.msra.mxu0 0
        %2416 = vmatprep.subr.bf16.mxu0 0
        %2417 = vmatpush1.bf16.msra.mxu0 0
        %2418 = vmatprep.subr.bf16.mxu0 0
        %2419 = vmatpush1.bf16.msra.mxu0 0
        %2420 = vmatprep.subr.bf16.mxu0 0
        %2421 = vmatpush1.bf16.msra.mxu0 0
        %2422 = vmatprep.subr.bf16.mxu0 0
        %2423 = vmatpush1.bf16.msra.mxu0 0
        %2424 = vmatprep.subr.bf16.mxu0 0
        %2425 = vmatpush1.bf16.msra.mxu0 0
        %2426 = vmatprep.subr.bf16.mxu0 0
        %2427 = vmatpush1.bf16.msra.mxu0 0
        %2428 = vmatprep.subr.bf16.mxu0 0
        %2429 = vmatpush1.bf16.msra.mxu0 0
        %2430 = vmatprep.subr.bf16.mxu0 0
        %2431 = vmatpush1.bf16.msra.mxu0 0
        %2432 = vmatprep.subr.bf16.mxu0 0
        %2433 = vmatpush1.bf16.msra.mxu0 0
        %2434 = vmatprep.subr.bf16.mxu0 0
        %2435 = vmatpush1.bf16.msra.mxu0 0
        %2436 = vmatprep.subr.bf16.mxu0 0
        %2437 = vmatpush1.bf16.msra.mxu0 0
        %2438 = vmatprep.mubr.bf16.mxu0 0
        %2439 = vmatmul.mubr.bf16.gmra.mrb[0].mxu0 %v2356
        %v2440 = vpop.f32.mrb[0].mxu0
        %v2441 = vadd.f32 0.0, %v2440
        %v2442 = vpop.f32.mrb[0].mxu0
        %v2443 = vpop.f32.mrb[0].mxu0
        %v2444 = vadd.f32 0.0, %v2443
        %v2445 = vpop.f32.mrb[0].mxu0
        %2446 = vmatprep.mubr.bf16.mxu0 0
        %2447 = vmatmul.mubr.bf16.gmra.mrb[0].mxu0 %v2359
        %v2448 = vpop.f32.mrb[0].mxu0
        %v2449 = vadd.f32 0.0, %v2448
        %v2450 = vpop.f32.mrb[0].mxu0
        %v2451 = vpop.f32.mrb[0].mxu0
        %v2452 = vadd.f32 0.0, %v2451
        %v2453 = vpop.f32.mrb[0].mxu0
        %2454 = vmatprep.mubr.bf16.mxu0 0
        %2455 = vmatmul.mubr.bf16.gmra.mrb[0].mxu0 %v2362
        %v2456 = vpop.f32.mrb[0].mxu0
        %v2457 = vadd.f32 0.0, %v2456
        %v2458 = vpop.f32.mrb[0].mxu0
        %v2459 = vpop.f32.mrb[0].mxu0
        %v2460 = vadd.f32 0.0, %v2459
        %v2461 = vpop.f32.mrb[0].mxu0
        %2462 = vmatprep.mubr.bf16.mxu0 0
        %2463 = vmatmul.mubr.bf16.gmra.mrb[0].mxu0 %v2365
        %v2464 = vpop.f32.mrb[0].mxu0
        %v2465 = vadd.f32 0.0, %v2464
        %v2466 = vpop.f32.mrb[0].mxu0
        %v2467 = vpop.f32.mrb[0].mxu0
        %v2468 = vadd.f32 0.0, %v2467
        %v2469 = vpop.f32.mrb[0].mxu0
        %2470 = vmatprep.mubr.bf16.mxu0 0
        %2471 = vmatmul.mubr.bf16.gmra.mrb[0].mxu0 %v2368
        %v2472 = vpop.f32.mrb[0].mxu0
        %v2473 = vadd.f32 0.0, %v2472
        %v2474 = vpop.f32.mrb[0].mxu0
        %v2475 = vpop.f32.mrb[0].mxu0
        %v2476 = vadd.f32 0.0, %v2475
        %v2477 = vpop.f32.mrb[0].mxu0
        %2478 = vmatprep.mubr.bf16.mxu0 0
        %2479 = vmatmul.mubr.bf16.gmra.mrb[0].mxu0 %v2371
        %v2480 = vpop.f32.mrb[0].mxu0
        %v2481 = vadd.f32 0.0, %v2480
        %v2482 = vpop.f32.mrb[0].mxu0
        %v2483 = vpop.f32.mrb[0].mxu0
        %v2484 = vadd.f32 0.0, %v2483
        %v2485 = vpop.f32.mrb[0].mxu0
        %2486 = vmatprep.mubr.bf16.mxu0 0
        %2487 = vmatmul.mubr.bf16.gmra.mrb[0].mxu0 %v2374
        %v2488 = vpop.f32.mrb[0].mxu0
        %v2489 = vadd.f32 0.0, %v2488
        %v2490 = vpop.f32.mrb[0].mxu0
        %v2491 = vpop.f32.mrb[0].mxu0
        %v2492 = vadd.f32 0.0, %v2491
        %v2493 = vpop.f32.mrb[0].mxu0
        %2494 = vmatprep.mubr.bf16.mxu0 0
        %2495 = vmatmul.mubr.bf16.gmra.mrb[0].mxu0 %v2377
        %v2496 = vpop.f32.mrb[0].mxu0
        %v2497 = vadd.f32 0.0, %v2496
        %v2498 = vpop.f32.mrb[0].mxu0
        %v2499 = vpop.f32.mrb[0].mxu0
        %v2500 = vadd.f32 0.0, %v2499
        %v2501 = vpop.f32.mrb[0].mxu0
        %2502 = vmatprep.mubr.bf16.mxu0 0
        %2503 = vmatmul.mubr.bf16.gmra.mrb[0].mxu0 %v2380
        %v2504 = vpop.f32.mrb[0].mxu0
        %v2505 = vadd.f32 0.0, %v2504
        %v2506 = vpop.f32.mrb[0].mxu0
        %v2507 = vpop.f32.mrb[0].mxu0
        %v2508 = vadd.f32 0.0, %v2507
        %v2509 = vpop.f32.mrb[0].mxu0
        %2510 = vmatprep.mubr.bf16.mxu0 0
        %2511 = vmatmul.mubr.bf16.gmra.mrb[0].mxu0 %v2383
        %v2512 = vpop.f32.mrb[0].mxu0
        %v2513 = vadd.f32 0.0, %v2512
        %v2514 = vpop.f32.mrb[0].mxu0
        %v2515 = vpop.f32.mrb[0].mxu0
        %v2516 = vadd.f32 0.0, %v2515
        %v2517 = vpop.f32.mrb[0].mxu0
        %2518 = vmatprep.mubr.bf16.mxu0 0
        %2519 = vmatmul.mubr.bf16.gmra.mrb[0].mxu0 %v2386
        %v2520 = vpop.f32.mrb[0].mxu0
        %v2521 = vadd.f32 0.0, %v2520
        %v2522 = vpop.f32.mrb[0].mxu0
        %v2523 = vpop.f32.mrb[0].mxu0
        %v2524 = vadd.f32 0.0, %v2523
        %v2525 = vpop.f32.mrb[0].mxu0
        %2526 = vmatprep.mubr.bf16.mxu0 0
        %2527 = vmatmul.mubr.bf16.gmra.mrb[0].mxu0 %v2389
        %v2528 = vpop.f32.mrb[0].mxu0
        %v2529 = vadd.f32 0.0, %v2528
        %v2530 = vpop.f32.mrb[0].mxu0
        %v2531 = vpop.f32.mrb[0].mxu0
        %v2532 = vadd.f32 0.0, %v2531
        %v2533 = vpop.f32.mrb[0].mxu0
        %2534 = vmatprep.mubr.bf16.mxu0 0
        %2535 = vmatmul.mubr.bf16.gmra.mrb[0].mxu0 %v2392
        %v2536 = vpop.f32.mrb[0].mxu0
        %v2537 = vadd.f32 0.0, %v2536
        %v2538 = vpop.f32.mrb[0].mxu0
        %v2539 = vpop.f32.mrb[0].mxu0
        %v2540 = vadd.f32 0.0, %v2539
        %v2541 = vpop.f32.mrb[0].mxu0
        %2542 = vmatprep.mubr.bf16.mxu0 0
        %2543 = vmatmul.mubr.bf16.gmra.mrb[0].mxu0 %v2395
        %v2544 = vpop.f32.mrb[0].mxu0
        %v2545 = vadd.f32 0.0, %v2544
        %v2546 = vpop.f32.mrb[0].mxu0
        %v2547 = vpop.f32.mrb[0].mxu0
        %v2548 = vadd.f32 0.0, %v2547
        %v2549 = vpop.f32.mrb[0].mxu0
        %2550 = vmatprep.mubr.bf16.mxu0 0
        %2551 = vmatmul.mubr.bf16.gmra.mrb[0].mxu0 %v2398
        %v2552 = vpop.f32.mrb[0].mxu0
        %v2553 = vadd.f32 0.0, %v2552
        %v2554 = vpop.f32.mrb[0].mxu0
        %v2555 = vpop.f32.mrb[0].mxu0
        %v2556 = vadd.f32 0.0, %v2555
        %v2557 = vpop.f32.mrb[0].mxu0
        %2558 = vmatprep.mubr.bf16.mxu0 0
        %2559 = vmatmul.mubr.bf16.gmra.mrb[0].mxu0 %v2401
        %v2560 = vpop.f32.mrb[0].mxu0
        %v2561 = vadd.f32 0.0, %v2560
        %v2562 = vpop.f32.mrb[0].mxu0
        %v2563 = vpop.f32.mrb[0].mxu0
        %v2564 = vadd.f32 0.0, %v2563
        %v2565 = vpop.f32.mrb[0].mxu0
        %2566 = vdwg.mxu0
        %v2567 = vadd.f32 %v2273, %v2441
        %v2568 = vadd.f32 %v2274, %v2444
        %v2569 = vadd.f32 %v2275, %v2449
        %v2570 = vadd.f32 %v2276, %v2452
        %v2571 = vadd.f32 %v2277, %v2457
        %v2572 = vadd.f32 %v2278, %v2460
        %v2573 = vadd.f32 %v2279, %v2465
        %v2574 = vadd.f32 %v2280, %v2468
        %v2575 = vadd.f32 %v2281, %v2473
        %v2576 = vadd.f32 %v2282, %v2476
        %v2577 = vadd.f32 %v2283, %v2481
        %v2578 = vadd.f32 %v2284, %v2484
        %v2579 = vadd.f32 %v2285, %v2489
        %v2580 = vadd.f32 %v2286, %v2492
        %v2581 = vadd.f32 %v2287, %v2497
        %v2582 = vadd.f32 %v2288, %v2500
        %v2583 = vadd.f32 %v2289, %v2505
        %v2584 = vadd.f32 %v2290, %v2508
        %v2585 = vadd.f32 %v2291, %v2513
        %v2586 = vadd.f32 %v2292, %v2516
        %v2587 = vadd.f32 %v2293, %v2521
        %v2588 = vadd.f32 %v2294, %v2524
        %v2589 = vadd.f32 %v2295, %v2529
        %v2590 = vadd.f32 %v2296, %v2532
        %v2591 = vadd.f32 %v2297, %v2537
        %v2592 = vadd.f32 %v2298, %v2540
        %v2593 = vadd.f32 %v2299, %v2545
        %v2594 = vadd.f32 %v2300, %v2548
        %v2595 = vadd.f32 %v2301, %v2553
        %v2596 = vadd.f32 %v2302, %v2556
        %v2597 = vadd.f32 %v2303, %v2561
        %v2598 = vadd.f32 %v2304, %v2564
        %v2599 = vld [vmem:[%s2010 + $0x2] sm:$0xff]
        %v2600 = vld [vmem:[%s2010 + $0xa] sm:$0xff]
        %v2601 = vld [vmem:[%s2010 + $0x1a] sm:$0xff]
        %v2602 = vld [vmem:[%s2010 + $0x22] sm:$0xff]
        %v2603 = vld [vmem:[%s2010 + $0x32] sm:$0xff]
        %v2604 = vld [vmem:[%s2010 + $0x3a] sm:$0xff]
        %v2605 = vld [vmem:[%s2010 + $0x4a] sm:$0xff]
        %v2606 = vld [vmem:[%s2010 + $0x52] sm:$0xff]
        %v2607 = vld [vmem:[%s2010 + $0x62] sm:$0xff]
        %v2608 = vld [vmem:[%s2010 + $0x6a] sm:$0xff]
        %v2609 = vld [vmem:[%s2010 + $0x7a] sm:$0xff]
        %v2610 = vld [vmem:[%s2010 + $0x82] sm:$0xff]
        %v2611 = vld [vmem:[%s2010 + $0x92] sm:$0xff]
        %v2612 = vld [vmem:[%s2010 + $0x9a] sm:$0xff]
        %v2613 = vld [vmem:[%s2010 + $0xaa] sm:$0xff]
        %v2614 = vld [vmem:[%s2010 + $0xb2] sm:$0xff]
        %v2615 = vld [vmem:[%s2010 + $0xc2] sm:$0xff]
        %v2616 = vld [vmem:[%s2010 + $0xca] sm:$0xff]
        %v2617 = vld [vmem:[%s2010 + $0xda] sm:$0xff]
        %v2618 = vld [vmem:[%s2010 + $0xe2] sm:$0xff]
        %v2619 = vld [vmem:[%s2010 + $0xf2] sm:$0xff]
        %v2620 = vld [vmem:[%s2010 + $0xfa] sm:$0xff]
        %v2621 = vld [vmem:[%s2010 + $0x10a] sm:$0xff]
        %v2622 = vld [vmem:[%s2010 + $0x112] sm:$0xff]
        %v2623 = vld [vmem:[%s2010 + $0x122] sm:$0xff]
        %v2624 = vld [vmem:[%s2010 + $0x12a] sm:$0xff]
        %v2625 = vld [vmem:[%s2010 + $0x13a] sm:$0xff]
        %v2626 = vld [vmem:[%s2010 + $0x142] sm:$0xff]
        %v2627 = vld [vmem:[%s2010 + $0x152] sm:$0xff]
        %v2628 = vld [vmem:[%s2010 + $0x15a] sm:$0xff]
        %v2629 = vld [vmem:[%s2010 + $0x16a] sm:$0xff]
        %v2630 = vld [vmem:[%s2010 + $0x172] sm:$0xff]
        %v2631 = vpack.c.bf16 %v2600, %v2599
        %v2632 = vpack.c.bf16 %v2602, %v2601
        %v2633 = vpack.c.bf16 %v2604, %v2603
        %v2634 = vpack.c.bf16 %v2606, %v2605
        %v2635 = vpack.c.bf16 %v2608, %v2607
        %v2636 = vpack.c.bf16 %v2610, %v2609
        %v2637 = vpack.c.bf16 %v2612, %v2611
        %v2638 = vpack.c.bf16 %v2614, %v2613
        %v2639 = vpack.c.bf16 %v2616, %v2615
        %v2640 = vpack.c.bf16 %v2618, %v2617
        %v2641 = vpack.c.bf16 %v2620, %v2619
        %v2642 = vpack.c.bf16 %v2622, %v2621
        %v2643 = vpack.c.bf16 %v2624, %v2623
        %v2644 = vpack.c.bf16 %v2626, %v2625
        %v2645 = vpack.c.bf16 %v2628, %v2627
        %v2646 = vpack.c.bf16 %v2630, %v2629
        %s2647 = scalar_lea.vmem %s1, 16
        %v2648 = vld [vmem:[%s2647] sm:$0x3]
        %v2650 = vsel %vm404, %v2631, 0
        %v2653 = vsel %vm404, %v2632, 0
        %v2656 = vsel %vm404, %v2633, 0
        %v2659 = vsel %vm404, %v2634, 0
        %v2662 = vsel %vm404, %v2635, 0
        %v2665 = vsel %vm404, %v2636, 0
        %v2668 = vsel %vm404, %v2637, 0
        %v2671 = vsel %vm404, %v2638, 0
        %v2674 = vsel %vm404, %v2639, 0
        %v2677 = vsel %vm404, %v2640, 0
        %v2680 = vsel %vm404, %v2641, 0
        %v2683 = vsel %vm404, %v2642, 0
        %v2686 = vsel %vm404, %v2643, 0
        %v2689 = vsel %vm404, %v2644, 0
        %v2692 = vsel %vm404, %v2645, 0
        %v2695 = vsel %vm404, %v2646, 0
        %v2698 = vand.u32 %v2648, %v456
        %2700 = vmatprep.subr.bf16.mxu0 0
        %2701 = vmatpush1.bf16.msra.mxu0 %v2698
        %2702 = vmatprep.subr.bf16.mxu0 0
        %2703 = vmatpush1.bf16.msra.mxu0 0
        %2704 = vmatprep.subr.bf16.mxu0 0
        %2705 = vmatpush1.bf16.msra.mxu0 0
        %2706 = vmatprep.subr.bf16.mxu0 0
        %2707 = vmatpush1.bf16.msra.mxu0 0
        %2708 = vmatprep.subr.bf16.mxu0 0
        %2709 = vmatpush1.bf16.msra.mxu0 0
        %2710 = vmatprep.subr.bf16.mxu0 0
        %2711 = vmatpush1.bf16.msra.mxu0 0
        %2712 = vmatprep.subr.bf16.mxu0 0
        %2713 = vmatpush1.bf16.msra.mxu0 0
        %2714 = vmatprep.subr.bf16.mxu0 0
        %2715 = vmatpush1.bf16.msra.mxu0 0
        %2716 = vmatprep.subr.bf16.mxu0 0
        %2717 = vmatpush1.bf16.msra.mxu0 0
        %2718 = vmatprep.subr.bf16.mxu0 0
        %2719 = vmatpush1.bf16.msra.mxu0 0
        %2720 = vmatprep.subr.bf16.mxu0 0
        %2721 = vmatpush1.bf16.msra.mxu0 0
        %2722 = vmatprep.subr.bf16.mxu0 0
        %2723 = vmatpush1.bf16.msra.mxu0 0
        %2724 = vmatprep.subr.bf16.mxu0 0
        %2725 = vmatpush1.bf16.msra.mxu0 0
        %2726 = vmatprep.subr.bf16.mxu0 0
        %2727 = vmatpush1.bf16.msra.mxu0 0
        %2728 = vmatprep.subr.bf16.mxu0 0
        %2729 = vmatpush1.bf16.msra.mxu0 0
        %2730 = vmatprep.subr.bf16.mxu0 0
        %2731 = vmatpush1.bf16.msra.mxu0 0
        %2732 = vmatprep.mubr.bf16.mxu0 0
        %2733 = vmatmul.mubr.bf16.gmra.mrb[0].mxu0 %v2650
        %v2734 = vpop.f32.mrb[0].mxu0
        %v2735 = vadd.f32 0.0, %v2734
        %v2736 = vpop.f32.mrb[0].mxu0
        %v2737 = vpop.f32.mrb[0].mxu0
        %v2738 = vadd.f32 0.0, %v2737
        %v2739 = vpop.f32.mrb[0].mxu0
        %2740 = vmatprep.mubr.bf16.mxu0 0
        %2741 = vmatmul.mubr.bf16.gmra.mrb[0].mxu0 %v2653
        %v2742 = vpop.f32.mrb[0].mxu0
        %v2743 = vadd.f32 0.0, %v2742
        %v2744 = vpop.f32.mrb[0].mxu0
        %v2745 = vpop.f32.mrb[0].mxu0
        %v2746 = vadd.f32 0.0, %v2745
        %v2747 = vpop.f32.mrb[0].mxu0
        %2748 = vmatprep.mubr.bf16.mxu0 0
        %2749 = vmatmul.mubr.bf16.gmra.mrb[0].mxu0 %v2656
        %v2750 = vpop.f32.mrb[0].mxu0
        %v2751 = vadd.f32 0.0, %v2750
        %v2752 = vpop.f32.mrb[0].mxu0
        %v2753 = vpop.f32.mrb[0].mxu0
        %v2754 = vadd.f32 0.0, %v2753
        %v2755 = vpop.f32.mrb[0].mxu0
        %2756 = vmatprep.mubr.bf16.mxu0 0
        %2757 = vmatmul.mubr.bf16.gmra.mrb[0].mxu0 %v2659
        %v2758 = vpop.f32.mrb[0].mxu0
        %v2759 = vadd.f32 0.0, %v2758
        %v2760 = vpop.f32.mrb[0].mxu0
        %v2761 = vpop.f32.mrb[0].mxu0
        %v2762 = vadd.f32 0.0, %v2761
        %v2763 = vpop.f32.mrb[0].mxu0
        %2764 = vmatprep.mubr.bf16.mxu0 0
        %2765 = vmatmul.mubr.bf16.gmra.mrb[0].mxu0 %v2662
        %v2766 = vpop.f32.mrb[0].mxu0
        %v2767 = vadd.f32 0.0, %v2766
        %v2768 = vpop.f32.mrb[0].mxu0
        %v2769 = vpop.f32.mrb[0].mxu0
        %v2770 = vadd.f32 0.0, %v2769
        %v2771 = vpop.f32.mrb[0].mxu0
        %2772 = vmatprep.mubr.bf16.mxu0 0
        %2773 = vmatmul.mubr.bf16.gmra.mrb[0].mxu0 %v2665
        %v2774 = vpop.f32.mrb[0].mxu0
        %v2775 = vadd.f32 0.0, %v2774
        %v2776 = vpop.f32.mrb[0].mxu0
        %v2777 = vpop.f32.mrb[0].mxu0
        %v2778 = vadd.f32 0.0, %v2777
        %v2779 = vpop.f32.mrb[0].mxu0
        %2780 = vmatprep.mubr.bf16.mxu0 0
        %2781 = vmatmul.mubr.bf16.gmra.mrb[0].mxu0 %v2668
        %v2782 = vpop.f32.mrb[0].mxu0
        %v2783 = vadd.f32 0.0, %v2782
        %v2784 = vpop.f32.mrb[0].mxu0
        %v2785 = vpop.f32.mrb[0].mxu0
        %v2786 = vadd.f32 0.0, %v2785
        %v2787 = vpop.f32.mrb[0].mxu0
        %2788 = vmatprep.mubr.bf16.mxu0 0
        %2789 = vmatmul.mubr.bf16.gmra.mrb[0].mxu0 %v2671
        %v2790 = vpop.f32.mrb[0].mxu0
        %v2791 = vadd.f32 0.0, %v2790
        %v2792 = vpop.f32.mrb[0].mxu0
        %v2793 = vpop.f32.mrb[0].mxu0
        %v2794 = vadd.f32 0.0, %v2793
        %v2795 = vpop.f32.mrb[0].mxu0
        %2796 = vmatprep.mubr.bf16.mxu0 0
        %2797 = vmatmul.mubr.bf16.gmra.mrb[0].mxu0 %v2674
        %v2798 = vpop.f32.mrb[0].mxu0
        %v2799 = vadd.f32 0.0, %v2798
        %v2800 = vpop.f32.mrb[0].mxu0
        %v2801 = vpop.f32.mrb[0].mxu0
        %v2802 = vadd.f32 0.0, %v2801
        %v2803 = vpop.f32.mrb[0].mxu0
        %2804 = vmatprep.mubr.bf16.mxu0 0
        %2805 = vmatmul.mubr.bf16.gmra.mrb[0].mxu0 %v2677
        %v2806 = vpop.f32.mrb[0].mxu0
        %v2807 = vadd.f32 0.0, %v2806
        %v2808 = vpop.f32.mrb[0].mxu0
        %v2809 = vpop.f32.mrb[0].mxu0
        %v2810 = vadd.f32 0.0, %v2809
        %v2811 = vpop.f32.mrb[0].mxu0
        %2812 = vmatprep.mubr.bf16.mxu0 0
        %2813 = vmatmul.mubr.bf16.gmra.mrb[0].mxu0 %v2680
        %v2814 = vpop.f32.mrb[0].mxu0
        %v2815 = vadd.f32 0.0, %v2814
        %v2816 = vpop.f32.mrb[0].mxu0
        %v2817 = vpop.f32.mrb[0].mxu0
        %v2818 = vadd.f32 0.0, %v2817
        %v2819 = vpop.f32.mrb[0].mxu0
        %2820 = vmatprep.mubr.bf16.mxu0 0
        %2821 = vmatmul.mubr.bf16.gmra.mrb[0].mxu0 %v2683
        %v2822 = vpop.f32.mrb[0].mxu0
        %v2823 = vadd.f32 0.0, %v2822
        %v2824 = vpop.f32.mrb[0].mxu0
        %v2825 = vpop.f32.mrb[0].mxu0
        %v2826 = vadd.f32 0.0, %v2825
        %v2827 = vpop.f32.mrb[0].mxu0
        %2828 = vmatprep.mubr.bf16.mxu0 0
        %2829 = vmatmul.mubr.bf16.gmra.mrb[0].mxu0 %v2686
        %v2830 = vpop.f32.mrb[0].mxu0
        %v2831 = vadd.f32 0.0, %v2830
        %v2832 = vpop.f32.mrb[0].mxu0
        %v2833 = vpop.f32.mrb[0].mxu0
        %v2834 = vadd.f32 0.0, %v2833
        %v2835 = vpop.f32.mrb[0].mxu0
        %2836 = vmatprep.mubr.bf16.mxu0 0
        %2837 = vmatmul.mubr.bf16.gmra.mrb[0].mxu0 %v2689
        %v2838 = vpop.f32.mrb[0].mxu0
        %v2839 = vadd.f32 0.0, %v2838
        %v2840 = vpop.f32.mrb[0].mxu0
        %v2841 = vpop.f32.mrb[0].mxu0
        %v2842 = vadd.f32 0.0, %v2841
        %v2843 = vpop.f32.mrb[0].mxu0
        %2844 = vmatprep.mubr.bf16.mxu0 0
        %2845 = vmatmul.mubr.bf16.gmra.mrb[0].mxu0 %v2692
        %v2846 = vpop.f32.mrb[0].mxu0
        %v2847 = vadd.f32 0.0, %v2846
        %v2848 = vpop.f32.mrb[0].mxu0
        %v2849 = vpop.f32.mrb[0].mxu0
        %v2850 = vadd.f32 0.0, %v2849
        %v2851 = vpop.f32.mrb[0].mxu0
        %2852 = vmatprep.mubr.bf16.mxu0 0
        %2853 = vmatmul.mubr.bf16.gmra.mrb[0].mxu0 %v2695
        %v2854 = vpop.f32.mrb[0].mxu0
        %v2855 = vadd.f32 0.0, %v2854
        %v2856 = vpop.f32.mrb[0].mxu0
        %v2857 = vpop.f32.mrb[0].mxu0
        %v2858 = vadd.f32 0.0, %v2857
        %v2859 = vpop.f32.mrb[0].mxu0
        %2860 = vdwg.mxu0
        %v2861 = vadd.f32 %v2567, %v2735
        %v2862 = vadd.f32 %v2568, %v2738
        %v2863 = vadd.f32 %v2569, %v2743
        %v2864 = vadd.f32 %v2570, %v2746
        %v2865 = vadd.f32 %v2571, %v2751
        %v2866 = vadd.f32 %v2572, %v2754
        %v2867 = vadd.f32 %v2573, %v2759
        %v2868 = vadd.f32 %v2574, %v2762
        %v2869 = vadd.f32 %v2575, %v2767
        %v2870 = vadd.f32 %v2576, %v2770
        %v2871 = vadd.f32 %v2577, %v2775
        %v2872 = vadd.f32 %v2578, %v2778
        %v2873 = vadd.f32 %v2579, %v2783
        %v2874 = vadd.f32 %v2580, %v2786
        %v2875 = vadd.f32 %v2581, %v2791
        %v2876 = vadd.f32 %v2582, %v2794
        %v2877 = vadd.f32 %v2583, %v2799
        %v2878 = vadd.f32 %v2584, %v2802
        %v2879 = vadd.f32 %v2585, %v2807
        %v2880 = vadd.f32 %v2586, %v2810
        %v2881 = vadd.f32 %v2587, %v2815
        %v2882 = vadd.f32 %v2588, %v2818
        %v2883 = vadd.f32 %v2589, %v2823
        %v2884 = vadd.f32 %v2590, %v2826
        %v2885 = vadd.f32 %v2591, %v2831
        %v2886 = vadd.f32 %v2592, %v2834
        %v2887 = vadd.f32 %v2593, %v2839
        %v2888 = vadd.f32 %v2594, %v2842
        %v2889 = vadd.f32 %v2595, %v2847
        %v2890 = vadd.f32 %v2596, %v2850
        %v2891 = vadd.f32 %v2597, %v2855
        %v2892 = vadd.f32 %v2598, %v2858
        %v2893 = vld [vmem:[%s2] sm:$0x1]
        %v2895 = vlaneseq
        %v2896 = vshrl.u32 %v2895, 7
        %v2897 = vsub.s32 0, %v2896
        %v2898 = vrot.slane %v2893, %v2897
        %v2900 = vadd.f32 %v2861, %v2898
        %v2901 = vadd.f32 %v2862, %v2898
        %v2902 = vadd.f32 %v2863, %v2898
        %v2903 = vadd.f32 %v2864, %v2898
        %v2904 = vadd.f32 %v2865, %v2898
        %v2905 = vadd.f32 %v2866, %v2898
        %v2906 = vadd.f32 %v2867, %v2898
        %v2907 = vadd.f32 %v2868, %v2898
        %v2908 = vadd.f32 %v2869, %v2898
        %v2909 = vadd.f32 %v2870, %v2898
        %v2910 = vadd.f32 %v2871, %v2898
        %v2911 = vadd.f32 %v2872, %v2898
        %v2912 = vadd.f32 %v2873, %v2898
        %v2913 = vadd.f32 %v2874, %v2898
        %v2914 = vadd.f32 %v2875, %v2898
        %v2915 = vadd.f32 %v2876, %v2898
        %v2916 = vadd.f32 %v2877, %v2898
        %v2917 = vadd.f32 %v2878, %v2898
        %v2918 = vadd.f32 %v2879, %v2898
        %v2919 = vadd.f32 %v2880, %v2898
        %v2920 = vadd.f32 %v2881, %v2898
        %v2921 = vadd.f32 %v2882, %v2898
        %v2922 = vadd.f32 %v2883, %v2898
        %v2923 = vadd.f32 %v2884, %v2898
        %v2924 = vadd.f32 %v2885, %v2898
        %v2925 = vadd.f32 %v2886, %v2898
        %v2926 = vadd.f32 %v2887, %v2898
        %v2927 = vadd.f32 %v2888, %v2898
        %v2928 = vadd.f32 %v2889, %v2898
        %v2929 = vadd.f32 %v2890, %v2898
        %v2930 = vadd.f32 %v2891, %v2898
        %v2931 = vadd.f32 %v2892, %v2898
        %v2932 = vmax.f32 %v2900, 0.0
        %v2933 = vmax.f32 %v2901, 0.0
        %v2934 = vmax.f32 %v2902, 0.0
        %v2935 = vmax.f32 %v2903, 0.0
        %v2936 = vmax.f32 %v2904, 0.0
        %v2937 = vmax.f32 %v2905, 0.0
        %v2938 = vmax.f32 %v2906, 0.0
        %v2939 = vmax.f32 %v2907, 0.0
        %v2940 = vmax.f32 %v2908, 0.0
        %v2941 = vmax.f32 %v2909, 0.0
        %v2942 = vmax.f32 %v2910, 0.0
        %v2943 = vmax.f32 %v2911, 0.0
        %v2944 = vmax.f32 %v2912, 0.0
        %v2945 = vmax.f32 %v2913, 0.0
        %v2946 = vmax.f32 %v2914, 0.0
        %v2947 = vmax.f32 %v2915, 0.0
        %v2948 = vmax.f32 %v2916, 0.0
        %v2949 = vmax.f32 %v2917, 0.0
        %v2950 = vmax.f32 %v2918, 0.0
        %v2951 = vmax.f32 %v2919, 0.0
        %v2952 = vmax.f32 %v2920, 0.0
        %v2953 = vmax.f32 %v2921, 0.0
        %v2954 = vmax.f32 %v2922, 0.0
        %v2955 = vmax.f32 %v2923, 0.0
        %v2956 = vmax.f32 %v2924, 0.0
        %v2957 = vmax.f32 %v2925, 0.0
        %v2958 = vmax.f32 %v2926, 0.0
        %v2959 = vmax.f32 %v2927, 0.0
        %v2960 = vmax.f32 %v2928, 0.0
        %v2961 = vmax.f32 %v2929, 0.0
        %v2962 = vmax.f32 %v2930, 0.0
        %v2963 = vmax.f32 %v2931, 0.0
        %vm2964 = vcmask 261120
        %2965 = vst.msk [vmem:[#allocation2] sm:$0xff] %vm2964, %v2932
        %2966 = vst.msk [vmem:[#allocation2 + $0x8] sm:$0xff] %vm2964, %v2933
        %2967 = vst.msk [vmem:[#allocation2 + $0x10] sm:$0xff] %vm2964, %v2934
        %2968 = vst.msk [vmem:[#allocation2 + $0x18] sm:$0xff] %vm2964, %v2935
        %2969 = vst.msk [vmem:[#allocation2 + $0x20] sm:$0xff] %vm2964, %v2936
        %2970 = vst.msk [vmem:[#allocation2 + $0x28] sm:$0xff] %vm2964, %v2937
        %2971 = vst.msk [vmem:[#allocation2 + $0x30] sm:$0xff] %vm2964, %v2938
        %2972 = vst.msk [vmem:[#allocation2 + $0x38] sm:$0xff] %vm2964, %v2939
        %2973 = vst.msk [vmem:[#allocation2 + $0x40] sm:$0xff] %vm2964, %v2940
        %2974 = vst.msk [vmem:[#allocation2 + $0x48] sm:$0xff] %vm2964, %v2941
        %2975 = vst.msk [vmem:[#allocation2 + $0x50] sm:$0xff] %vm2964, %v2942
        %2976 = vst.msk [vmem:[#allocation2 + $0x58] sm:$0xff] %vm2964, %v2943
        %2977 = vst.msk [vmem:[#allocation2 + $0x60] sm:$0xff] %vm2964, %v2944
        %2978 = vst.msk [vmem:[#allocation2 + $0x68] sm:$0xff] %vm2964, %v2945
        %2979 = vst.msk [vmem:[#allocation2 + $0x70] sm:$0xff] %vm2964, %v2946
        %2980 = vst.msk [vmem:[#allocation2 + $0x78] sm:$0xff] %vm2964, %v2947
        %2981 = vst.msk [vmem:[#allocation2 + $0x80] sm:$0xff] %vm2964, %v2948
        %2982 = vst.msk [vmem:[#allocation2 + $0x88] sm:$0xff] %vm2964, %v2949
        %2983 = vst.msk [vmem:[#allocation2 + $0x90] sm:$0xff] %vm2964, %v2950
        %2984 = vst.msk [vmem:[#allocation2 + $0x98] sm:$0xff] %vm2964, %v2951
        %2985 = vst.msk [vmem:[#allocation2 + $0xa0] sm:$0xff] %vm2964, %v2952
        %2986 = vst.msk [vmem:[#allocation2 + $0xa8] sm:$0xff] %vm2964, %v2953
        %2987 = vst.msk [vmem:[#allocation2 + $0xb0] sm:$0xff] %vm2964, %v2954
        %2988 = vst.msk [vmem:[#allocation2 + $0xb8] sm:$0xff] %vm2964, %v2955
        %2989 = vst.msk [vmem:[#allocation2 + $0xc0] sm:$0xff] %vm2964, %v2956
        %2990 = vst.msk [vmem:[#allocation2 + $0xc8] sm:$0xff] %vm2964, %v2957
        %2991 = vst.msk [vmem:[#allocation2 + $0xd0] sm:$0xff] %vm2964, %v2958
        %2992 = vst.msk [vmem:[#allocation2 + $0xd8] sm:$0xff] %vm2964, %v2959
        %2993 = vst.msk [vmem:[#allocation2 + $0xe0] sm:$0xff] %vm2964, %v2960
        %2994 = vst.msk [vmem:[#allocation2 + $0xe8] sm:$0xff] %vm2964, %v2961
        %2995 = vst.msk [vmem:[#allocation2 + $0xf0] sm:$0xff] %vm2964, %v2962
        %2996 = vst.msk [vmem:[#allocation2 + $0xf8] sm:$0xff] %vm2964, %v2963
        %v2997 = vld [vmem:[#allocation2] ss:$2 sm:$0xff]
        %s2998 = scalar_lea.vmem [#allocation2], 16
        %v2999 = vld [vmem:[%s2998] ss:$2 sm:$0xff]
        %s3000 = scalar_lea.vmem [#allocation2], 32
        %v3001 = vld [vmem:[%s3000] ss:$2 sm:$0xff]
        %s3002 = scalar_lea.vmem [#allocation2], 48
        %v3003 = vld [vmem:[%s3002] ss:$2 sm:$0xff]
        %s3004 = scalar_lea.vmem [#allocation2], 64
        %v3005 = vld [vmem:[%s3004] ss:$2 sm:$0xff]
        %s3006 = scalar_lea.vmem [#allocation2], 80
        %v3007 = vld [vmem:[%s3006] ss:$2 sm:$0xff]
        %s3008 = scalar_lea.vmem [#allocation2], 96
        %v3009 = vld [vmem:[%s3008] ss:$2 sm:$0xff]
        %s3010 = scalar_lea.vmem [#allocation2], 112
        %v3011 = vld [vmem:[%s3010] ss:$2 sm:$0xff]
        %s3012 = scalar_lea.vmem [#allocation2], 128
        %v3013 = vld [vmem:[%s3012] ss:$2 sm:$0xff]
        %s3014 = scalar_lea.vmem [#allocation2], 144
        %v3015 = vld [vmem:[%s3014] ss:$2 sm:$0xff]
        %s3016 = scalar_lea.vmem [#allocation2], 160
        %v3017 = vld [vmem:[%s3016] ss:$2 sm:$0xff]
        %s3018 = scalar_lea.vmem [#allocation2], 176
        %v3019 = vld [vmem:[%s3018] ss:$2 sm:$0xff]
        %s3020 = scalar_lea.vmem [#allocation2], 192
        %v3021 = vld [vmem:[%s3020] ss:$2 sm:$0xff]
        %s3022 = scalar_lea.vmem [#allocation2], 208
        %v3023 = vld [vmem:[%s3022] ss:$2 sm:$0xff]
        %s3024 = scalar_lea.vmem [#allocation2], 224
        %v3025 = vld [vmem:[%s3024] ss:$2 sm:$0xff]
        %s3026 = scalar_lea.vmem [#allocation2], 240
        %v3027 = vld [vmem:[%s3026] ss:$2 sm:$0xff]
        %s3028 = scalar_lea.vmem [#allocation2], 1
        %v3029 = vld [vmem:[%s3028] ss:$2 sm:$0xff]
        %s3030 = scalar_lea.vmem [#allocation2], 17
        %v3031 = vld [vmem:[%s3030] ss:$2 sm:$0xff]
        %s3032 = scalar_lea.vmem [#allocation2], 33
        %v3033 = vld [vmem:[%s3032] ss:$2 sm:$0xff]
        %s3034 = scalar_lea.vmem [#allocation2], 49
        %v3035 = vld [vmem:[%s3034] ss:$2 sm:$0xff]
        %s3036 = scalar_lea.vmem [#allocation2], 65
        %v3037 = vld [vmem:[%s3036] ss:$2 sm:$0xff]
        %s3038 = scalar_lea.vmem [#allocation2], 81
        %v3039 = vld [vmem:[%s3038] ss:$2 sm:$0xff]
        %s3040 = scalar_lea.vmem [#allocation2], 97
        %v3041 = vld [vmem:[%s3040] ss:$2 sm:$0xff]
        %s3042 = scalar_lea.vmem [#allocation2], 113
        %v3043 = vld [vmem:[%s3042] ss:$2 sm:$0xff]
        %s3044 = scalar_lea.vmem [#allocation2], 129
        %v3045 = vld [vmem:[%s3044] ss:$2 sm:$0xff]
        %s3046 = scalar_lea.vmem [#allocation2], 145
        %v3047 = vld [vmem:[%s3046] ss:$2 sm:$0xff]
        %s3048 = scalar_lea.vmem [#allocation2], 161
        %v3049 = vld [vmem:[%s3048] ss:$2 sm:$0xff]
        %s3050 = scalar_lea.vmem [#allocation2], 177
        %v3051 = vld [vmem:[%s3050] ss:$2 sm:$0xff]
        %s3052 = scalar_lea.vmem [#allocation2], 193
        %v3053 = vld [vmem:[%s3052] ss:$2 sm:$0xff]
        %s3054 = scalar_lea.vmem [#allocation2], 209
        %v3055 = vld [vmem:[%s3054] ss:$2 sm:$0xff]
        %s3056 = scalar_lea.vmem [#allocation2], 225
        %v3057 = vld [vmem:[%s3056] ss:$2 sm:$0xff]
        %s3058 = scalar_lea.vmem [#allocation2], 241
        %v3059 = vld [vmem:[%s3058] ss:$2 sm:$0xff]
        %v3060 = vmax.f32 %v2997, %v3029
        %v3061 = vmax.f32 %v2999, %v3031
        %v3062 = vmax.f32 %v3001, %v3033
        %v3063 = vmax.f32 %v3003, %v3035
        %v3064 = vmax.f32 %v3005, %v3037
        %v3065 = vmax.f32 %v3007, %v3039
        %v3066 = vmax.f32 %v3009, %v3041
        %v3067 = vmax.f32 %v3011, %v3043
        %v3068 = vmax.f32 %v3013, %v3045
        %v3069 = vmax.f32 %v3015, %v3047
        %v3070 = vmax.f32 %v3017, %v3049
        %v3071 = vmax.f32 %v3019, %v3051
        %v3072 = vmax.f32 %v3021, %v3053
        %v3073 = vmax.f32 %v3023, %v3055
        %v3074 = vmax.f32 %v3025, %v3057
        %v3075 = vmax.f32 %v3027, %v3059
        %v3076 = vmax.f32 %v3060, %v3061
        %v3077 = vmax.f32 %v3062, %v3063
        %v3078 = vmax.f32 %v3064, %v3065
        %v3079 = vmax.f32 %v3066, %v3067
        %v3080 = vmax.f32 %v3068, %v3069
        %v3081 = vmax.f32 %v3070, %v3071
        %v3082 = vmax.f32 %v3072, %v3073
        %v3083 = vmax.f32 %v3074, %v3075
        %3084 = vst.msk [vmem:[#allocation3] sm:$0xff] %vm2964, 0.0
        %vm3085 = vcmask 254976
        %3086 = vst.msk [vmem:[#allocation3 + $0x8] sm:$0x3] %vm3085, 0.0
        %3087 = vst.msk [vmem:[#allocation3 + $0x10] sm:$0xff] %vm2964, 0.0
        %3088 = vst.msk [vmem:[#allocation3 + $0x18] sm:$0x3] %vm3085, 0.0
        %3089 = vst.msk [vmem:[#allocation3 + $0x20] sm:$0xff] %vm2964, 0.0
        %3090 = vst.msk [vmem:[#allocation3 + $0x28] sm:$0x3] %vm3085, 0.0
        %3091 = vst.msk [vmem:[#allocation3 + $0x30] sm:$0xff] %vm2964, 0.0
        %3092 = vst.msk [vmem:[#allocation3 + $0x38] sm:$0x3] %vm3085, 0.0
        %3093 = vst.msk [vmem:[#allocation3 + $0x40] sm:$0xff] %vm2964, 0.0
        %3094 = vst.msk [vmem:[#allocation3 + $0x48] sm:$0x3] %vm3085, 0.0
        %3095 = vst.msk [vmem:[#allocation3 + $0x50] sm:$0xff] %vm2964, 0.0
        %3096 = vst.msk [vmem:[#allocation3 + $0x58] sm:$0x3] %vm3085, 0.0
        %3097 = vst.msk [vmem:[#allocation3 + $0x60] sm:$0xff] %vm2964, 0.0
        %3098 = vst.msk [vmem:[#allocation3 + $0x68] sm:$0x3] %vm3085, 0.0
        %3099 = vst.msk [vmem:[#allocation3 + $0x70] sm:$0xff] %vm2964, 0.0
        %3100 = vst.msk [vmem:[#allocation3 + $0x78] sm:$0x3] %vm3085, 0.0
        %3101 = vst.msk [vmem:[#allocation3 + $0x80] sm:$0xff] %vm2964, 0.0
        %3102 = vst.msk [vmem:[#allocation3 + $0x88] sm:$0x3] %vm3085, 0.0
        %3103 = vst.msk [vmem:[#allocation3 + $0x90] sm:$0xff] %vm2964, 0.0
        %3104 = vst.msk [vmem:[#allocation3 + $0x98] sm:$0x3] %vm3085, 0.0
        %s3105 = scalar_lea.vmem [#allocation3], 16
        %3106 = vst.msk [vmem:[%s3105 + $0x1] sm:$0xff] %vm2964, %v3076
        %3107 = vst.msk [vmem:[%s3105 + $0x11] sm:$0xff] %vm2964, %v3077
        %3108 = vst.msk [vmem:[%s3105 + $0x21] sm:$0xff] %vm2964, %v3078
        %3109 = vst.msk [vmem:[%s3105 + $0x31] sm:$0xff] %vm2964, %v3079
        %3110 = vst.msk [vmem:[%s3105 + $0x41] sm:$0xff] %vm2964, %v3080
        %3111 = vst.msk [vmem:[%s3105 + $0x51] sm:$0xff] %vm2964, %v3081
        %3112 = vst.msk [vmem:[%s3105 + $0x61] sm:$0xff] %vm2964, %v3082
        %3113 = vst.msk [vmem:[%s3105 + $0x71] sm:$0xff] %vm2964, %v3083
        %v3114 = vld [vmem:[#allocation3] sm:$0xff]
        %v3115 = vld [vmem:[#allocation3 + $0x10] sm:$0xff]
        %v3116 = vld [vmem:[#allocation3 + $0x20] sm:$0xff]
        %v3117 = vld [vmem:[#allocation3 + $0x30] sm:$0xff]
        %v3118 = vld [vmem:[#allocation3 + $0x40] sm:$0xff]
        %v3119 = vld [vmem:[#allocation3 + $0x50] sm:$0xff]
        %v3120 = vld [vmem:[#allocation3 + $0x60] sm:$0xff]
        %v3121 = vld [vmem:[#allocation3 + $0x70] sm:$0xff]
        %v3122 = vpack.c.bf16 %v3115, %v3114
        %v3123 = vpack.c.bf16 %v3117, %v3116
        %v3124 = vpack.c.bf16 %v3119, %v3118
        %v3125 = vpack.c.bf16 %v3121, %v3120
        %v3126 = vld [vmem:[%s3] sm:$0xf]
        %v3127 = vld [vmem:[%s3 + $0x4] sm:$0xf]
        %v3128 = vld [vmem:[%s3 + $0x8] sm:$0xf]
        %v3129 = vld [vmem:[%s3 + $0xc] sm:$0xf]
        %v3130 = vld [vmem:[#allocation3 + $0x1] sm:$0xff]
        %v3131 = vld [vmem:[#allocation3 + $0x11] sm:$0xff]
        %v3132 = vld [vmem:[#allocation3 + $0x21] sm:$0xff]
        %v3133 = vld [vmem:[#allocation3 + $0x31] sm:$0xff]
        %v3134 = vld [vmem:[#allocation3 + $0x41] sm:$0xff]
        %v3135 = vld [vmem:[#allocation3 + $0x51] sm:$0xff]
        %v3136 = vld [vmem:[#allocation3 + $0x61] sm:$0xff]
        %v3137 = vld [vmem:[#allocation3 + $0x71] sm:$0xff]
        %v3138 = vpack.c.bf16 %v3131, %v3130
        %v3139 = vpack.c.bf16 %v3133, %v3132
        %v3140 = vpack.c.bf16 %v3135, %v3134
        %v3141 = vpack.c.bf16 %v3137, %v3136
        %s3142 = scalar_lea.vmem %s3, 16
        %v3143 = vld [vmem:[%s3142] sm:$0xf]
        %v3144 = vld [vmem:[%s3142 + $0x4] sm:$0xf]
        %v3145 = vld [vmem:[%s3142 + $0x8] sm:$0xf]
        %v3146 = vld [vmem:[%s3142 + $0xc] sm:$0xf]
        %v3151 = vunpack.c.l.b16 %v3143
        %v3152 = vunpack.c.l.b16 %v3144
        %v3153 = vunpack.c.l.b16 %v3145
        %v3154 = vunpack.c.l.b16 %v3146
        %v3155 = vpack.c.b16 %v3152, %v3151
        %v3156 = vpack.c.b16 %v3154, %v3153
        %v3160 = vsel %vm2964, %v3138, 0
        %v3163 = vsel %vm2964, %v3139, 0
        %v3166 = vsel %vm2964, %v3140, 0
        %v3169 = vsel %vm2964, %v3141, 0
        %3171 = vmatprep.subr.bf16.mxu0 0
        %3172 = vmatpush1.bf16.msra.mxu0 %v3155
        %3173 = vmatprep.subr.bf16.mxu0 0
        %3174 = vmatpush1.bf16.msra.mxu0 %v3156
        %3175 = vmatprep.subr.bf16.mxu0 0
        %3176 = vmatpush1.bf16.msra.mxu0 0
        %3177 = vmatprep.subr.bf16.mxu0 0
        %3178 = vmatpush1.bf16.msra.mxu0 0
        %3179 = vmatprep.subr.bf16.mxu0 0
        %3180 = vmatpush1.bf16.msra.mxu0 0
        %3181 = vmatprep.subr.bf16.mxu0 0
        %3182 = vmatpush1.bf16.msra.mxu0 0
        %3183 = vmatprep.subr.bf16.mxu0 0
        %3184 = vmatpush1.bf16.msra.mxu0 0
        %3185 = vmatprep.subr.bf16.mxu0 0
        %3186 = vmatpush1.bf16.msra.mxu0 0
        %3187 = vmatprep.subr.bf16.mxu0 0
        %3188 = vmatpush1.bf16.msra.mxu0 0
        %3189 = vmatprep.subr.bf16.mxu0 0
        %3190 = vmatpush1.bf16.msra.mxu0 0
        %3191 = vmatprep.subr.bf16.mxu0 0
        %3192 = vmatpush1.bf16.msra.mxu0 0
        %3193 = vmatprep.subr.bf16.mxu0 0
        %3194 = vmatpush1.bf16.msra.mxu0 0
        %3195 = vmatprep.subr.bf16.mxu0 0
        %3196 = vmatpush1.bf16.msra.mxu0 0
        %3197 = vmatprep.subr.bf16.mxu0 0
        %3198 = vmatpush1.bf16.msra.mxu0 0
        %3199 = vmatprep.subr.bf16.mxu0 0
        %3200 = vmatpush1.bf16.msra.mxu0 0
        %3201 = vmatprep.subr.bf16.mxu0 0
        %3202 = vmatpush1.bf16.msra.mxu0 0
        %3203 = vmatprep.mubr.bf16.mxu0 0
        %3204 = vmatmul.mubr.bf16.gmra.mrb[0].mxu0 %v3160
        %v3205 = vpop.f32.mrb[0].mxu0
        %v3206 = vadd.f32 0.0, %v3205
        %v3207 = vpop.f32.mrb[0].mxu0
        %v3208 = vpop.f32.mrb[0].mxu0
        %v3209 = vadd.f32 0.0, %v3208
        %v3210 = vpop.f32.mrb[0].mxu0
        %3211 = vmatprep.mubr.bf16.mxu0 0
        %3212 = vmatmul.mubr.bf16.gmra.mrb[0].mxu0 %v3163
        %v3213 = vpop.f32.mrb[0].mxu0
        %v3214 = vadd.f32 0.0, %v3213
        %v3215 = vpop.f32.mrb[0].mxu0
        %v3216 = vpop.f32.mrb[0].mxu0
        %v3217 = vadd.f32 0.0, %v3216
        %v3218 = vpop.f32.mrb[0].mxu0
        %3219 = vmatprep.mubr.bf16.mxu0 0
        %3220 = vmatmul.mubr.bf16.gmra.mrb[0].mxu0 %v3166
        %v3221 = vpop.f32.mrb[0].mxu0
        %v3222 = vadd.f32 0.0, %v3221
        %v3223 = vpop.f32.mrb[0].mxu0
        %v3224 = vpop.f32.mrb[0].mxu0
        %v3225 = vadd.f32 0.0, %v3224
        %v3226 = vpop.f32.mrb[0].mxu0
        %3227 = vmatprep.mubr.bf16.mxu0 0
        %3228 = vmatmul.mubr.bf16.gmra.mrb[0].mxu0 %v3169
        %v3229 = vpop.f32.mrb[0].mxu0
        %v3230 = vadd.f32 0.0, %v3229
        %v3231 = vpop.f32.mrb[0].mxu0
        %v3232 = vpop.f32.mrb[0].mxu0
        %v3233 = vadd.f32 0.0, %v3232
        %v3234 = vpop.f32.mrb[0].mxu0
        %3235 = vdwg.mxu0
        %v3240 = vunpack.c.l.b16 %v3126
        %v3241 = vunpack.c.l.b16 %v3127
        %v3242 = vunpack.c.l.b16 %v3128
        %v3243 = vunpack.c.l.b16 %v3129
        %v3244 = vpack.c.b16 %v3241, %v3240
        %v3245 = vpack.c.b16 %v3243, %v3242
        %v3249 = vsel %vm2964, %v3122, 0
        %v3252 = vsel %vm2964, %v3123, 0
        %v3255 = vsel %vm2964, %v3124, 0
        %v3258 = vsel %vm2964, %v3125, 0
        %3260 = vmatprep.subr.bf16.mxu0 0
        %3261 = vmatpush1.bf16.msra.mxu0 %v3244
        %3262 = vmatprep.subr.bf16.mxu0 0
        %3263 = vmatpush1.bf16.msra.mxu0 %v3245
        %3264 = vmatprep.subr.bf16.mxu0 0
        %3265 = vmatpush1.bf16.msra.mxu0 0
        %3266 = vmatprep.subr.bf16.mxu0 0
        %3267 = vmatpush1.bf16.msra.mxu0 0
        %3268 = vmatprep.subr.bf16.mxu0 0
        %3269 = vmatpush1.bf16.msra.mxu0 0
        %3270 = vmatprep.subr.bf16.mxu0 0
        %3271 = vmatpush1.bf16.msra.mxu0 0
        %3272 = vmatprep.subr.bf16.mxu0 0
        %3273 = vmatpush1.bf16.msra.mxu0 0
        %3274 = vmatprep.subr.bf16.mxu0 0
        %3275 = vmatpush1.bf16.msra.mxu0 0
        %3276 = vmatprep.subr.bf16.mxu0 0
        %3277 = vmatpush1.bf16.msra.mxu0 0
        %3278 = vmatprep.subr.bf16.mxu0 0
        %3279 = vmatpush1.bf16.msra.mxu0 0
        %3280 = vmatprep.subr.bf16.mxu0 0
        %3281 = vmatpush1.bf16.msra.mxu0 0
        %3282 = vmatprep.subr.bf16.mxu0 0
        %3283 = vmatpush1.bf16.msra.mxu0 0
        %3284 = vmatprep.subr.bf16.mxu0 0
        %3285 = vmatpush1.bf16.msra.mxu0 0
        %3286 = vmatprep.subr.bf16.mxu0 0
        %3287 = vmatpush1.bf16.msra.mxu0 0
        %3288 = vmatprep.subr.bf16.mxu0 0
        %3289 = vmatpush1.bf16.msra.mxu0 0
        %3290 = vmatprep.subr.bf16.mxu0 0
        %3291 = vmatpush1.bf16.msra.mxu0 0
        %3292 = vmatprep.mubr.bf16.mxu0 0
        %3293 = vmatmul.mubr.bf16.gmra.mrb[0].mxu0 %v3249
        %v3294 = vpop.f32.mrb[0].mxu0
        %v3295 = vadd.f32 %v3206, %v3294
        %v3296 = vpop.f32.mrb[0].mxu0
        %v3297 = vpop.f32.mrb[0].mxu0
        %v3298 = vadd.f32 %v3209, %v3297
        %v3299 = vpop.f32.mrb[0].mxu0
        %3300 = vmatprep.mubr.bf16.mxu0 0
        %3301 = vmatmul.mubr.bf16.gmra.mrb[0].mxu0 %v3252
        %v3302 = vpop.f32.mrb[0].mxu0
        %v3303 = vadd.f32 %v3214, %v3302
        %v3304 = vpop.f32.mrb[0].mxu0
        %v3305 = vpop.f32.mrb[0].mxu0
        %v3306 = vadd.f32 %v3217, %v3305
        %v3307 = vpop.f32.mrb[0].mxu0
        %3308 = vmatprep.mubr.bf16.mxu0 0
        %3309 = vmatmul.mubr.bf16.gmra.mrb[0].mxu0 %v3255
        %v3310 = vpop.f32.mrb[0].mxu0
        %v3311 = vadd.f32 %v3222, %v3310
        %v3312 = vpop.f32.mrb[0].mxu0
        %v3313 = vpop.f32.mrb[0].mxu0
        %v3314 = vadd.f32 %v3225, %v3313
        %v3315 = vpop.f32.mrb[0].mxu0
        %3316 = vmatprep.mubr.bf16.mxu0 0
        %3317 = vmatmul.mubr.bf16.gmra.mrb[0].mxu0 %v3258
        %v3318 = vpop.f32.mrb[0].mxu0
        %v3319 = vadd.f32 %v3230, %v3318
        %v3320 = vpop.f32.mrb[0].mxu0
        %v3321 = vpop.f32.mrb[0].mxu0
        %v3322 = vadd.f32 %v3233, %v3321
        %v3323 = vpop.f32.mrb[0].mxu0
        %3324 = vdwg.mxu0
        %v3325 = vld [vmem:[#allocation3 + $0x2] sm:$0xff]
        %v3326 = vld [vmem:[#allocation3 + $0x12] sm:$0xff]
        %v3327 = vld [vmem:[#allocation3 + $0x22] sm:$0xff]
        %v3328 = vld [vmem:[#allocation3 + $0x32] sm:$0xff]
        %v3329 = vld [vmem:[#allocation3 + $0x42] sm:$0xff]
        %v3330 = vld [vmem:[#allocation3 + $0x52] sm:$0xff]
        %v3331 = vld [vmem:[#allocation3 + $0x62] sm:$0xff]
        %v3332 = vld [vmem:[#allocation3 + $0x72] sm:$0xff]
        %v3333 = vpack.c.bf16 %v3326, %v3325
        %v3334 = vpack.c.bf16 %v3328, %v3327
        %v3335 = vpack.c.bf16 %v3330, %v3329
        %v3336 = vpack.c.bf16 %v3332, %v3331
        %s3337 = scalar_lea.vmem %s3, 32
        %v3338 = vld [vmem:[%s3337] sm:$0xf]
        %v3339 = vld [vmem:[%s3337 + $0x4] sm:$0xf]
        %v3340 = vld [vmem:[%s3337 + $0x8] sm:$0xf]
        %v3341 = vld [vmem:[%s3337 + $0xc] sm:$0xf]
        %v3346 = vunpack.c.l.b16 %v3338
        %v3347 = vunpack.c.l.b16 %v3339
        %v3348 = vunpack.c.l.b16 %v3340
        %v3349 = vunpack.c.l.b16 %v3341
        %v3350 = vpack.c.b16 %v3347, %v3346
        %v3351 = vpack.c.b16 %v3349, %v3348
        %v3355 = vsel %vm2964, %v3333, 0
        %v3358 = vsel %vm2964, %v3334, 0
        %v3361 = vsel %vm2964, %v3335, 0
        %v3364 = vsel %vm2964, %v3336, 0
        %3366 = vmatprep.subr.bf16.mxu0 0
        %3367 = vmatpush1.bf16.msra.mxu0 %v3350
        %3368 = vmatprep.subr.bf16.mxu0 0
        %3369 = vmatpush1.bf16.msra.mxu0 %v3351
        %3370 = vmatprep.subr.bf16.mxu0 0
        %3371 = vmatpush1.bf16.msra.mxu0 0
        %3372 = vmatprep.subr.bf16.mxu0 0
        %3373 = vmatpush1.bf16.msra.mxu0 0
        %3374 = vmatprep.subr.bf16.mxu0 0
        %3375 = vmatpush1.bf16.msra.mxu0 0
        %3376 = vmatprep.subr.bf16.mxu0 0
        %3377 = vmatpush1.bf16.msra.mxu0 0
        %3378 = vmatprep.subr.bf16.mxu0 0
        %3379 = vmatpush1.bf16.msra.mxu0 0
        %3380 = vmatprep.subr.bf16.mxu0 0
        %3381 = vmatpush1.bf16.msra.mxu0 0
        %3382 = vmatprep.subr.bf16.mxu0 0
        %3383 = vmatpush1.bf16.msra.mxu0 0
        %3384 = vmatprep.subr.bf16.mxu0 0
        %3385 = vmatpush1.bf16.msra.mxu0 0
        %3386 = vmatprep.subr.bf16.mxu0 0
        %3387 = vmatpush1.bf16.msra.mxu0 0
        %3388 = vmatprep.subr.bf16.mxu0 0
        %3389 = vmatpush1.bf16.msra.mxu0 0
        %3390 = vmatprep.subr.bf16.mxu0 0
        %3391 = vmatpush1.bf16.msra.mxu0 0
        %3392 = vmatprep.subr.bf16.mxu0 0
        %3393 = vmatpush1.bf16.msra.mxu0 0
        %3394 = vmatprep.subr.bf16.mxu0 0
        %3395 = vmatpush1.bf16.msra.mxu0 0
        %3396 = vmatprep.subr.bf16.mxu0 0
        %3397 = vmatpush1.bf16.msra.mxu0 0
        %3398 = vmatprep.mubr.bf16.mxu0 0
        %3399 = vmatmul.mubr.bf16.gmra.mrb[0].mxu0 %v3355
        %v3400 = vpop.f32.mrb[0].mxu0
        %v3401 = vadd.f32 0.0, %v3400
        %v3402 = vpop.f32.mrb[0].mxu0
        %v3403 = vpop.f32.mrb[0].mxu0
        %v3404 = vadd.f32 0.0, %v3403
        %v3405 = vpop.f32.mrb[0].mxu0
        %3406 = vmatprep.mubr.bf16.mxu0 0
        %3407 = vmatmul.mubr.bf16.gmra.mrb[0].mxu0 %v3358
        %v3408 = vpop.f32.mrb[0].mxu0
        %v3409 = vadd.f32 0.0, %v3408
        %v3410 = vpop.f32.mrb[0].mxu0
        %v3411 = vpop.f32.mrb[0].mxu0
        %v3412 = vadd.f32 0.0, %v3411
        %v3413 = vpop.f32.mrb[0].mxu0
        %3414 = vmatprep.mubr.bf16.mxu0 0
        %3415 = vmatmul.mubr.bf16.gmra.mrb[0].mxu0 %v3361
        %v3416 = vpop.f32.mrb[0].mxu0
        %v3417 = vadd.f32 0.0, %v3416
        %v3418 = vpop.f32.mrb[0].mxu0
        %v3419 = vpop.f32.mrb[0].mxu0
        %v3420 = vadd.f32 0.0, %v3419
        %v3421 = vpop.f32.mrb[0].mxu0
        %3422 = vmatprep.mubr.bf16.mxu0 0
        %3423 = vmatmul.mubr.bf16.gmra.mrb[0].mxu0 %v3364
        %v3424 = vpop.f32.mrb[0].mxu0
        %v3425 = vadd.f32 0.0, %v3424
        %v3426 = vpop.f32.mrb[0].mxu0
        %v3427 = vpop.f32.mrb[0].mxu0
        %v3428 = vadd.f32 0.0, %v3427
        %v3429 = vpop.f32.mrb[0].mxu0
        %3430 = vdwg.mxu0
        %v3431 = vadd.f32 %v3295, %v3401
        %v3432 = vadd.f32 %v3298, %v3404
        %v3433 = vadd.f32 %v3303, %v3409
        %v3434 = vadd.f32 %v3306, %v3412
        %v3435 = vadd.f32 %v3311, %v3417
        %v3436 = vadd.f32 %v3314, %v3420
        %v3437 = vadd.f32 %v3319, %v3425
        %v3438 = vadd.f32 %v3322, %v3428
        %v3439 = vld [vmem:[%s3105] sm:$0xff]
        %v3440 = vld [vmem:[%s3105 + $0x10] sm:$0xff]
        %v3441 = vld [vmem:[%s3105 + $0x20] sm:$0xff]
        %v3442 = vld [vmem:[%s3105 + $0x30] sm:$0xff]
        %v3443 = vld [vmem:[%s3105 + $0x40] sm:$0xff]
        %v3444 = vld [vmem:[%s3105 + $0x50] sm:$0xff]
        %v3445 = vld [vmem:[%s3105 + $0x60] sm:$0xff]
        %v3446 = vld [vmem:[%s3105 + $0x70] sm:$0xff]
        %v3447 = vpack.c.bf16 %v3440, %v3439
        %v3448 = vpack.c.bf16 %v3442, %v3441
        %v3449 = vpack.c.bf16 %v3444, %v3443
        %v3450 = vpack.c.bf16 %v3446, %v3445
        %s3451 = scalar_lea.vmem %s3, 48
        %v3452 = vld [vmem:[%s3451] sm:$0xf]
        %v3453 = vld [vmem:[%s3451 + $0x4] sm:$0xf]
        %v3454 = vld [vmem:[%s3451 + $0x8] sm:$0xf]
        %v3455 = vld [vmem:[%s3451 + $0xc] sm:$0xf]
        %v3460 = vunpack.c.l.b16 %v3452
        %v3461 = vunpack.c.l.b16 %v3453
        %v3462 = vunpack.c.l.b16 %v3454
        %v3463 = vunpack.c.l.b16 %v3455
        %v3464 = vpack.c.b16 %v3461, %v3460
        %v3465 = vpack.c.b16 %v3463, %v3462
        %v3469 = vsel %vm2964, %v3447, 0
        %v3472 = vsel %vm2964, %v3448, 0
        %v3475 = vsel %vm2964, %v3449, 0
        %v3478 = vsel %vm2964, %v3450, 0
        %3480 = vmatprep.subr.bf16.mxu0 0
        %3481 = vmatpush1.bf16.msra.mxu0 %v3464
        %3482 = vmatprep.subr.bf16.mxu0 0
        %3483 = vmatpush1.bf16.msra.mxu0 %v3465
        %3484 = vmatprep.subr.bf16.mxu0 0
        %3485 = vmatpush1.bf16.msra.mxu0 0
        %3486 = vmatprep.subr.bf16.mxu0 0
        %3487 = vmatpush1.bf16.msra.mxu0 0
        %3488 = vmatprep.subr.bf16.mxu0 0
        %3489 = vmatpush1.bf16.msra.mxu0 0
        %3490 = vmatprep.subr.bf16.mxu0 0
        %3491 = vmatpush1.bf16.msra.mxu0 0
        %3492 = vmatprep.subr.bf16.mxu0 0
        %3493 = vmatpush1.bf16.msra.mxu0 0
        %3494 = vmatprep.subr.bf16.mxu0 0
        %3495 = vmatpush1.bf16.msra.mxu0 0
        %3496 = vmatprep.subr.bf16.mxu0 0
        %3497 = vmatpush1.bf16.msra.mxu0 0
        %3498 = vmatprep.subr.bf16.mxu0 0
        %3499 = vmatpush1.bf16.msra.mxu0 0
        %3500 = vmatprep.subr.bf16.mxu0 0
        %3501 = vmatpush1.bf16.msra.mxu0 0
        %3502 = vmatprep.subr.bf16.mxu0 0
        %3503 = vmatpush1.bf16.msra.mxu0 0
        %3504 = vmatprep.subr.bf16.mxu0 0
        %3505 = vmatpush1.bf16.msra.mxu0 0
        %3506 = vmatprep.subr.bf16.mxu0 0
        %3507 = vmatpush1.bf16.msra.mxu0 0
        %3508 = vmatprep.subr.bf16.mxu0 0
        %3509 = vmatpush1.bf16.msra.mxu0 0
        %3510 = vmatprep.subr.bf16.mxu0 0
        %3511 = vmatpush1.bf16.msra.mxu0 0
        %3512 = vmatprep.mubr.bf16.mxu0 0
        %3513 = vmatmul.mubr.bf16.gmra.mrb[0].mxu0 %v3469
        %v3514 = vpop.f32.mrb[0].mxu0
        %v3515 = vadd.f32 0.0, %v3514
        %v3516 = vpop.f32.mrb[0].mxu0
        %v3517 = vpop.f32.mrb[0].mxu0
        %v3518 = vadd.f32 0.0, %v3517
        %v3519 = vpop.f32.mrb[0].mxu0
        %3520 = vmatprep.mubr.bf16.mxu0 0
        %3521 = vmatmul.mubr.bf16.gmra.mrb[0].mxu0 %v3472
        %v3522 = vpop.f32.mrb[0].mxu0
        %v3523 = vadd.f32 0.0, %v3522
        %v3524 = vpop.f32.mrb[0].mxu0
        %v3525 = vpop.f32.mrb[0].mxu0
        %v3526 = vadd.f32 0.0, %v3525
        %v3527 = vpop.f32.mrb[0].mxu0
        %3528 = vmatprep.mubr.bf16.mxu0 0
        %3529 = vmatmul.mubr.bf16.gmra.mrb[0].mxu0 %v3475
        %v3530 = vpop.f32.mrb[0].mxu0
        %v3531 = vadd.f32 0.0, %v3530
        %v3532 = vpop.f32.mrb[0].mxu0
        %v3533 = vpop.f32.mrb[0].mxu0
        %v3534 = vadd.f32 0.0, %v3533
        %v3535 = vpop.f32.mrb[0].mxu0
        %3536 = vmatprep.mubr.bf16.mxu0 0
        %3537 = vmatmul.mubr.bf16.gmra.mrb[0].mxu0 %v3478
        %v3538 = vpop.f32.mrb[0].mxu0
        %v3539 = vadd.f32 0.0, %v3538
        %v3540 = vpop.f32.mrb[0].mxu0
        %v3541 = vpop.f32.mrb[0].mxu0
        %v3542 = vadd.f32 0.0, %v3541
        %v3543 = vpop.f32.mrb[0].mxu0
        %3544 = vdwg.mxu0
        %v3545 = vadd.f32 %v3431, %v3515
        %v3546 = vadd.f32 %v3432, %v3518
        %v3547 = vadd.f32 %v3433, %v3523
        %v3548 = vadd.f32 %v3434, %v3526
        %v3549 = vadd.f32 %v3435, %v3531
        %v3550 = vadd.f32 %v3436, %v3534
        %v3551 = vadd.f32 %v3437, %v3539
        %v3552 = vadd.f32 %v3438, %v3542
        %v3553 = vld [vmem:[%s3105 + $0x1] sm:$0xff]
        %v3554 = vld [vmem:[%s3105 + $0x11] sm:$0xff]
        %v3555 = vld [vmem:[%s3105 + $0x21] sm:$0xff]
        %v3556 = vld [vmem:[%s3105 + $0x31] sm:$0xff]
        %v3557 = vld [vmem:[%s3105 + $0x41] sm:$0xff]
        %v3558 = vld [vmem:[%s3105 + $0x51] sm:$0xff]
        %v3559 = vld [vmem:[%s3105 + $0x61] sm:$0xff]
        %v3560 = vld [vmem:[%s3105 + $0x71] sm:$0xff]
        %v3561 = vpack.c.bf16 %v3554, %v3553
        %v3562 = vpack.c.bf16 %v3556, %v3555
        %v3563 = vpack.c.bf16 %v3558, %v3557
        %v3564 = vpack.c.bf16 %v3560, %v3559
        %s3565 = scalar_lea.vmem %s3, 64
        %v3566 = vld [vmem:[%s3565] sm:$0xf]
        %v3567 = vld [vmem:[%s3565 + $0x4] sm:$0xf]
        %v3568 = vld [vmem:[%s3565 + $0x8] sm:$0xf]
        %v3569 = vld [vmem:[%s3565 + $0xc] sm:$0xf]
        %v3574 = vunpack.c.l.b16 %v3566
        %v3575 = vunpack.c.l.b16 %v3567
        %v3576 = vunpack.c.l.b16 %v3568
        %v3577 = vunpack.c.l.b16 %v3569
        %v3578 = vpack.c.b16 %v3575, %v3574
        %v3579 = vpack.c.b16 %v3577, %v3576
        %v3583 = vsel %vm2964, %v3561, 0
        %v3586 = vsel %vm2964, %v3562, 0
        %v3589 = vsel %vm2964, %v3563, 0
        %v3592 = vsel %vm2964, %v3564, 0
        %3594 = vmatprep.subr.bf16.mxu0 0
        %3595 = vmatpush1.bf16.msra.mxu0 %v3578
        %3596 = vmatprep.subr.bf16.mxu0 0
        %3597 = vmatpush1.bf16.msra.mxu0 %v3579
        %3598 = vmatprep.subr.bf16.mxu0 0
        %3599 = vmatpush1.bf16.msra.mxu0 0
        %3600 = vmatprep.subr.bf16.mxu0 0
        %3601 = vmatpush1.bf16.msra.mxu0 0
        %3602 = vmatprep.subr.bf16.mxu0 0
        %3603 = vmatpush1.bf16.msra.mxu0 0
        %3604 = vmatprep.subr.bf16.mxu0 0
        %3605 = vmatpush1.bf16.msra.mxu0 0
        %3606 = vmatprep.subr.bf16.mxu0 0
        %3607 = vmatpush1.bf16.msra.mxu0 0
        %3608 = vmatprep.subr.bf16.mxu0 0
        %3609 = vmatpush1.bf16.msra.mxu0 0
        %3610 = vmatprep.subr.bf16.mxu0 0
        %3611 = vmatpush1.bf16.msra.mxu0 0
        %3612 = vmatprep.subr.bf16.mxu0 0
        %3613 = vmatpush1.bf16.msra.mxu0 0
        %3614 = vmatprep.subr.bf16.mxu0 0
        %3615 = vmatpush1.bf16.msra.mxu0 0
        %3616 = vmatprep.subr.bf16.mxu0 0
        %3617 = vmatpush1.bf16.msra.mxu0 0
        %3618 = vmatprep.subr.bf16.mxu0 0
        %3619 = vmatpush1.bf16.msra.mxu0 0
        %3620 = vmatprep.subr.bf16.mxu0 0
        %3621 = vmatpush1.bf16.msra.mxu0 0
        %3622 = vmatprep.subr.bf16.mxu0 0
        %3623 = vmatpush1.bf16.msra.mxu0 0
        %3624 = vmatprep.subr.bf16.mxu0 0
        %3625 = vmatpush1.bf16.msra.mxu0 0
        %3626 = vmatprep.mubr.bf16.mxu0 0
        %3627 = vmatmul.mubr.bf16.gmra.mrb[0].mxu0 %v3583
        %v3628 = vpop.f32.mrb[0].mxu0
        %v3629 = vadd.f32 0.0, %v3628
        %v3630 = vpop.f32.mrb[0].mxu0
        %v3631 = vpop.f32.mrb[0].mxu0
        %v3632 = vadd.f32 0.0, %v3631
        %v3633 = vpop.f32.mrb[0].mxu0
        %3634 = vmatprep.mubr.bf16.mxu0 0
        %3635 = vmatmul.mubr.bf16.gmra.mrb[0].mxu0 %v3586
        %v3636 = vpop.f32.mrb[0].mxu0
        %v3637 = vadd.f32 0.0, %v3636
        %v3638 = vpop.f32.mrb[0].mxu0
        %v3639 = vpop.f32.mrb[0].mxu0
        %v3640 = vadd.f32 0.0, %v3639
        %v3641 = vpop.f32.mrb[0].mxu0
        %3642 = vmatprep.mubr.bf16.mxu0 0
        %3643 = vmatmul.mubr.bf16.gmra.mrb[0].mxu0 %v3589
        %v3644 = vpop.f32.mrb[0].mxu0
        %v3645 = vadd.f32 0.0, %v3644
        %v3646 = vpop.f32.mrb[0].mxu0
        %v3647 = vpop.f32.mrb[0].mxu0
        %v3648 = vadd.f32 0.0, %v3647
        %v3649 = vpop.f32.mrb[0].mxu0
        %3650 = vmatprep.mubr.bf16.mxu0 0
        %3651 = vmatmul.mubr.bf16.gmra.mrb[0].mxu0 %v3592
        %v3652 = vpop.f32.mrb[0].mxu0
        %v3653 = vadd.f32 0.0, %v3652
        %v3654 = vpop.f32.mrb[0].mxu0
        %v3655 = vpop.f32.mrb[0].mxu0
        %v3656 = vadd.f32 0.0, %v3655
        %v3657 = vpop.f32.mrb[0].mxu0
        %3658 = vdwg.mxu0
        %v3659 = vadd.f32 %v3545, %v3629
        %v3660 = vadd.f32 %v3546, %v3632
        %v3661 = vadd.f32 %v3547, %v3637
        %v3662 = vadd.f32 %v3548, %v3640
        %v3663 = vadd.f32 %v3549, %v3645
        %v3664 = vadd.f32 %v3550, %v3648
        %v3665 = vadd.f32 %v3551, %v3653
        %v3666 = vadd.f32 %v3552, %v3656
        %v3667 = vld [vmem:[%s3105 + $0x2] sm:$0xff]
        %v3668 = vld [vmem:[%s3105 + $0x12] sm:$0xff]
        %v3669 = vld [vmem:[%s3105 + $0x22] sm:$0xff]
        %v3670 = vld [vmem:[%s3105 + $0x32] sm:$0xff]
        %v3671 = vld [vmem:[%s3105 + $0x42] sm:$0xff]
        %v3672 = vld [vmem:[%s3105 + $0x52] sm:$0xff]
        %v3673 = vld [vmem:[%s3105 + $0x62] sm:$0xff]
        %v3674 = vld [vmem:[%s3105 + $0x72] sm:$0xff]
        %v3675 = vpack.c.bf16 %v3668, %v3667
        %v3676 = vpack.c.bf16 %v3670, %v3669
        %v3677 = vpack.c.bf16 %v3672, %v3671
        %v3678 = vpack.c.bf16 %v3674, %v3673
        %s3679 = scalar_lea.vmem %s3, 80
        %v3680 = vld [vmem:[%s3679] sm:$0xf]
        %v3681 = vld [vmem:[%s3679 + $0x4] sm:$0xf]
        %v3682 = vld [vmem:[%s3679 + $0x8] sm:$0xf]
        %v3683 = vld [vmem:[%s3679 + $0xc] sm:$0xf]
        %v3688 = vunpack.c.l.b16 %v3680
        %v3689 = vunpack.c.l.b16 %v3681
        %v3690 = vunpack.c.l.b16 %v3682
        %v3691 = vunpack.c.l.b16 %v3683
        %v3692 = vpack.c.b16 %v3689, %v3688
        %v3693 = vpack.c.b16 %v3691, %v3690
        %v3697 = vsel %vm2964, %v3675, 0
        %v3700 = vsel %vm2964, %v3676, 0
        %v3703 = vsel %vm2964, %v3677, 0
        %v3706 = vsel %vm2964, %v3678, 0
        %3708 = vmatprep.subr.bf16.mxu0 0
        %3709 = vmatpush1.bf16.msra.mxu0 %v3692
        %3710 = vmatprep.subr.bf16.mxu0 0
        %3711 = vmatpush1.bf16.msra.mxu0 %v3693
        %3712 = vmatprep.subr.bf16.mxu0 0
        %3713 = vmatpush1.bf16.msra.mxu0 0
        %3714 = vmatprep.subr.bf16.mxu0 0
        %3715 = vmatpush1.bf16.msra.mxu0 0
        %3716 = vmatprep.subr.bf16.mxu0 0
        %3717 = vmatpush1.bf16.msra.mxu0 0
        %3718 = vmatprep.subr.bf16.mxu0 0
        %3719 = vmatpush1.bf16.msra.mxu0 0
        %3720 = vmatprep.subr.bf16.mxu0 0
        %3721 = vmatpush1.bf16.msra.mxu0 0
        %3722 = vmatprep.subr.bf16.mxu0 0
        %3723 = vmatpush1.bf16.msra.mxu0 0
        %3724 = vmatprep.subr.bf16.mxu0 0
        %3725 = vmatpush1.bf16.msra.mxu0 0
        %3726 = vmatprep.subr.bf16.mxu0 0
        %3727 = vmatpush1.bf16.msra.mxu0 0
        %3728 = vmatprep.subr.bf16.mxu0 0
        %3729 = vmatpush1.bf16.msra.mxu0 0
        %3730 = vmatprep.subr.bf16.mxu0 0
        %3731 = vmatpush1.bf16.msra.mxu0 0
        %3732 = vmatprep.subr.bf16.mxu0 0
        %3733 = vmatpush1.bf16.msra.mxu0 0
        %3734 = vmatprep.subr.bf16.mxu0 0
        %3735 = vmatpush1.bf16.msra.mxu0 0
        %3736 = vmatprep.subr.bf16.mxu0 0
        %3737 = vmatpush1.bf16.msra.mxu0 0
        %3738 = vmatprep.subr.bf16.mxu0 0
        %3739 = vmatpush1.bf16.msra.mxu0 0
        %3740 = vmatprep.mubr.bf16.mxu0 0
        %3741 = vmatmul.mubr.bf16.gmra.mrb[0].mxu0 %v3697
        %v3742 = vpop.f32.mrb[0].mxu0
        %v3743 = vadd.f32 0.0, %v3742
        %v3744 = vpop.f32.mrb[0].mxu0
        %v3745 = vpop.f32.mrb[0].mxu0
        %v3746 = vadd.f32 0.0, %v3745
        %v3747 = vpop.f32.mrb[0].mxu0
        %3748 = vmatprep.mubr.bf16.mxu0 0
        %3749 = vmatmul.mubr.bf16.gmra.mrb[0].mxu0 %v3700
        %v3750 = vpop.f32.mrb[0].mxu0
        %v3751 = vadd.f32 0.0, %v3750
        %v3752 = vpop.f32.mrb[0].mxu0
        %v3753 = vpop.f32.mrb[0].mxu0
        %v3754 = vadd.f32 0.0, %v3753
        %v3755 = vpop.f32.mrb[0].mxu0
        %3756 = vmatprep.mubr.bf16.mxu0 0
        %3757 = vmatmul.mubr.bf16.gmra.mrb[0].mxu0 %v3703
        %v3758 = vpop.f32.mrb[0].mxu0
        %v3759 = vadd.f32 0.0, %v3758
        %v3760 = vpop.f32.mrb[0].mxu0
        %v3761 = vpop.f32.mrb[0].mxu0
        %v3762 = vadd.f32 0.0, %v3761
        %v3763 = vpop.f32.mrb[0].mxu0
        %3764 = vmatprep.mubr.bf16.mxu0 0
        %3765 = vmatmul.mubr.bf16.gmra.mrb[0].mxu0 %v3706
        %v3766 = vpop.f32.mrb[0].mxu0
        %v3767 = vadd.f32 0.0, %v3766
        %v3768 = vpop.f32.mrb[0].mxu0
        %v3769 = vpop.f32.mrb[0].mxu0
        %v3770 = vadd.f32 0.0, %v3769
        %v3771 = vpop.f32.mrb[0].mxu0
        %3772 = vdwg.mxu0
        %v3773 = vadd.f32 %v3659, %v3743
        %v3774 = vadd.f32 %v3660, %v3746
        %v3775 = vadd.f32 %v3661, %v3751
        %v3776 = vadd.f32 %v3662, %v3754
        %v3777 = vadd.f32 %v3663, %v3759
        %v3778 = vadd.f32 %v3664, %v3762
        %v3779 = vadd.f32 %v3665, %v3767
        %v3780 = vadd.f32 %v3666, %v3770
        %s3781 = scalar_lea.vmem [#allocation3], 32
        %v3782 = vld [vmem:[%s3781] sm:$0xff]
        %v3783 = vld [vmem:[%s3781 + $0x10] sm:$0xff]
        %v3784 = vld [vmem:[%s3781 + $0x20] sm:$0xff]
        %v3785 = vld [vmem:[%s3781 + $0x30] sm:$0xff]
        %v3786 = vld [vmem:[%s3781 + $0x40] sm:$0xff]
        %v3787 = vld [vmem:[%s3781 + $0x50] sm:$0xff]
        %v3788 = vld [vmem:[%s3781 + $0x60] sm:$0xff]
        %v3789 = vld [vmem:[%s3781 + $0x70] sm:$0xff]
        %v3790 = vpack.c.bf16 %v3783, %v3782
        %v3791 = vpack.c.bf16 %v3785, %v3784
        %v3792 = vpack.c.bf16 %v3787, %v3786
        %v3793 = vpack.c.bf16 %v3789, %v3788
        %s3794 = scalar_lea.vmem %s3, 96
        %v3795 = vld [vmem:[%s3794] sm:$0xf]
        %v3796 = vld [vmem:[%s3794 + $0x4] sm:$0xf]
        %v3797 = vld [vmem:[%s3794 + $0x8] sm:$0xf]
        %v3798 = vld [vmem:[%s3794 + $0xc] sm:$0xf]
        %v3803 = vunpack.c.l.b16 %v3795
        %v3804 = vunpack.c.l.b16 %v3796
        %v3805 = vunpack.c.l.b16 %v3797
        %v3806 = vunpack.c.l.b16 %v3798
        %v3807 = vpack.c.b16 %v3804, %v3803
        %v3808 = vpack.c.b16 %v3806, %v3805
        %v3812 = vsel %vm2964, %v3790, 0
        %v3815 = vsel %vm2964, %v3791, 0
        %v3818 = vsel %vm2964, %v3792, 0
        %v3821 = vsel %vm2964, %v3793, 0
        %3823 = vmatprep.subr.bf16.mxu0 0
        %3824 = vmatpush1.bf16.msra.mxu0 %v3807
        %3825 = vmatprep.subr.bf16.mxu0 0
        %3826 = vmatpush1.bf16.msra.mxu0 %v3808
        %3827 = vmatprep.subr.bf16.mxu0 0
        %3828 = vmatpush1.bf16.msra.mxu0 0
        %3829 = vmatprep.subr.bf16.mxu0 0
        %3830 = vmatpush1.bf16.msra.mxu0 0
        %3831 = vmatprep.subr.bf16.mxu0 0
        %3832 = vmatpush1.bf16.msra.mxu0 0
        %3833 = vmatprep.subr.bf16.mxu0 0
        %3834 = vmatpush1.bf16.msra.mxu0 0
        %3835 = vmatprep.subr.bf16.mxu0 0
        %3836 = vmatpush1.bf16.msra.mxu0 0
        %3837 = vmatprep.subr.bf16.mxu0 0
        %3838 = vmatpush1.bf16.msra.mxu0 0
        %3839 = vmatprep.subr.bf16.mxu0 0
        %3840 = vmatpush1.bf16.msra.mxu0 0
        %3841 = vmatprep.subr.bf16.mxu0 0
        %3842 = vmatpush1.bf16.msra.mxu0 0
        %3843 = vmatprep.subr.bf16.mxu0 0
        %3844 = vmatpush1.bf16.msra.mxu0 0
        %3845 = vmatprep.subr.bf16.mxu0 0
        %3846 = vmatpush1.bf16.msra.mxu0 0
        %3847 = vmatprep.subr.bf16.mxu0 0
        %3848 = vmatpush1.bf16.msra.mxu0 0
        %3849 = vmatprep.subr.bf16.mxu0 0
        %3850 = vmatpush1.bf16.msra.mxu0 0
        %3851 = vmatprep.subr.bf16.mxu0 0
        %3852 = vmatpush1.bf16.msra.mxu0 0
        %3853 = vmatprep.subr.bf16.mxu0 0
        %3854 = vmatpush1.bf16.msra.mxu0 0
        %3855 = vmatprep.mubr.bf16.mxu0 0
        %3856 = vmatmul.mubr.bf16.gmra.mrb[0].mxu0 %v3812
        %v3857 = vpop.f32.mrb[0].mxu0
        %v3858 = vadd.f32 0.0, %v3857
        %v3859 = vpop.f32.mrb[0].mxu0
        %v3860 = vpop.f32.mrb[0].mxu0
        %v3861 = vadd.f32 0.0, %v3860
        %v3862 = vpop.f32.mrb[0].mxu0
        %3863 = vmatprep.mubr.bf16.mxu0 0
        %3864 = vmatmul.mubr.bf16.gmra.mrb[0].mxu0 %v3815
        %v3865 = vpop.f32.mrb[0].mxu0
        %v3866 = vadd.f32 0.0, %v3865
        %v3867 = vpop.f32.mrb[0].mxu0
        %v3868 = vpop.f32.mrb[0].mxu0
        %v3869 = vadd.f32 0.0, %v3868
        %v3870 = vpop.f32.mrb[0].mxu0
        %3871 = vmatprep.mubr.bf16.mxu0 0
        %3872 = vmatmul.mubr.bf16.gmra.mrb[0].mxu0 %v3818
        %v3873 = vpop.f32.mrb[0].mxu0
        %v3874 = vadd.f32 0.0, %v3873
        %v3875 = vpop.f32.mrb[0].mxu0
        %v3876 = vpop.f32.mrb[0].mxu0
        %v3877 = vadd.f32 0.0, %v3876
        %v3878 = vpop.f32.mrb[0].mxu0
        %3879 = vmatprep.mubr.bf16.mxu0 0
        %3880 = vmatmul.mubr.bf16.gmra.mrb[0].mxu0 %v3821
        %v3881 = vpop.f32.mrb[0].mxu0
        %v3882 = vadd.f32 0.0, %v3881
        %v3883 = vpop.f32.mrb[0].mxu0
        %v3884 = vpop.f32.mrb[0].mxu0
        %v3885 = vadd.f32 0.0, %v3884
        %v3886 = vpop.f32.mrb[0].mxu0
        %3887 = vdwg.mxu0
        %v3888 = vadd.f32 %v3773, %v3858
        %v3889 = vadd.f32 %v3774, %v3861
        %v3890 = vadd.f32 %v3775, %v3866
        %v3891 = vadd.f32 %v3776, %v3869
        %v3892 = vadd.f32 %v3777, %v3874
        %v3893 = vadd.f32 %v3778, %v3877
        %v3894 = vadd.f32 %v3779, %v3882
        %v3895 = vadd.f32 %v3780, %v3885
        %v3896 = vld [vmem:[%s3781 + $0x1] sm:$0xff]
        %v3897 = vld [vmem:[%s3781 + $0x11] sm:$0xff]
        %v3898 = vld [vmem:[%s3781 + $0x21] sm:$0xff]
        %v3899 = vld [vmem:[%s3781 + $0x31] sm:$0xff]
        %v3900 = vld [vmem:[%s3781 + $0x41] sm:$0xff]
        %v3901 = vld [vmem:[%s3781 + $0x51] sm:$0xff]
        %v3902 = vld [vmem:[%s3781 + $0x61] sm:$0xff]
        %v3903 = vld [vmem:[%s3781 + $0x71] sm:$0xff]
        %v3904 = vpack.c.bf16 %v3897, %v3896
        %v3905 = vpack.c.bf16 %v3899, %v3898
        %v3906 = vpack.c.bf16 %v3901, %v3900
        %v3907 = vpack.c.bf16 %v3903, %v3902
        %s3908 = scalar_lea.vmem %s3, 112
        %v3909 = vld [vmem:[%s3908] sm:$0xf]
        %v3910 = vld [vmem:[%s3908 + $0x4] sm:$0xf]
        %v3911 = vld [vmem:[%s3908 + $0x8] sm:$0xf]
        %v3912 = vld [vmem:[%s3908 + $0xc] sm:$0xf]
        %v3917 = vunpack.c.l.b16 %v3909
        %v3918 = vunpack.c.l.b16 %v3910
        %v3919 = vunpack.c.l.b16 %v3911
        %v3920 = vunpack.c.l.b16 %v3912
        %v3921 = vpack.c.b16 %v3918, %v3917
        %v3922 = vpack.c.b16 %v3920, %v3919
        %v3926 = vsel %vm2964, %v3904, 0
        %v3929 = vsel %vm2964, %v3905, 0
        %v3932 = vsel %vm2964, %v3906, 0
        %v3935 = vsel %vm2964, %v3907, 0
        %3937 = vmatprep.subr.bf16.mxu0 0
        %3938 = vmatpush1.bf16.msra.mxu0 %v3921
        %3939 = vmatprep.subr.bf16.mxu0 0
        %3940 = vmatpush1.bf16.msra.mxu0 %v3922
        %3941 = vmatprep.subr.bf16.mxu0 0
        %3942 = vmatpush1.bf16.msra.mxu0 0
        %3943 = vmatprep.subr.bf16.mxu0 0
        %3944 = vmatpush1.bf16.msra.mxu0 0
        %3945 = vmatprep.subr.bf16.mxu0 0
        %3946 = vmatpush1.bf16.msra.mxu0 0
        %3947 = vmatprep.subr.bf16.mxu0 0
        %3948 = vmatpush1.bf16.msra.mxu0 0
        %3949 = vmatprep.subr.bf16.mxu0 0
        %3950 = vmatpush1.bf16.msra.mxu0 0
        %3951 = vmatprep.subr.bf16.mxu0 0
        %3952 = vmatpush1.bf16.msra.mxu0 0
        %3953 = vmatprep.subr.bf16.mxu0 0
        %3954 = vmatpush1.bf16.msra.mxu0 0
        %3955 = vmatprep.subr.bf16.mxu0 0
        %3956 = vmatpush1.bf16.msra.mxu0 0
        %3957 = vmatprep.subr.bf16.mxu0 0
        %3958 = vmatpush1.bf16.msra.mxu0 0
        %3959 = vmatprep.subr.bf16.mxu0 0
        %3960 = vmatpush1.bf16.msra.mxu0 0
        %3961 = vmatprep.subr.bf16.mxu0 0
        %3962 = vmatpush1.bf16.msra.mxu0 0
        %3963 = vmatprep.subr.bf16.mxu0 0
        %3964 = vmatpush1.bf16.msra.mxu0 0
        %3965 = vmatprep.subr.bf16.mxu0 0
        %3966 = vmatpush1.bf16.msra.mxu0 0
        %3967 = vmatprep.subr.bf16.mxu0 0
        %3968 = vmatpush1.bf16.msra.mxu0 0
        %3969 = vmatprep.mubr.bf16.mxu0 0
        %3970 = vmatmul.mubr.bf16.gmra.mrb[0].mxu0 %v3926
        %v3971 = vpop.f32.mrb[0].mxu0
        %v3972 = vadd.f32 0.0, %v3971
        %v3973 = vpop.f32.mrb[0].mxu0
        %v3974 = vpop.f32.mrb[0].mxu0
        %v3975 = vadd.f32 0.0, %v3974
        %v3976 = vpop.f32.mrb[0].mxu0
        %3977 = vmatprep.mubr.bf16.mxu0 0
        %3978 = vmatmul.mubr.bf16.gmra.mrb[0].mxu0 %v3929
        %v3979 = vpop.f32.mrb[0].mxu0
        %v3980 = vadd.f32 0.0, %v3979
        %v3981 = vpop.f32.mrb[0].mxu0
        %v3982 = vpop.f32.mrb[0].mxu0
        %v3983 = vadd.f32 0.0, %v3982
        %v3984 = vpop.f32.mrb[0].mxu0
        %3985 = vmatprep.mubr.bf16.mxu0 0
        %3986 = vmatmul.mubr.bf16.gmra.mrb[0].mxu0 %v3932
        %v3987 = vpop.f32.mrb[0].mxu0
        %v3988 = vadd.f32 0.0, %v3987
        %v3989 = vpop.f32.mrb[0].mxu0
        %v3990 = vpop.f32.mrb[0].mxu0
        %v3991 = vadd.f32 0.0, %v3990
        %v3992 = vpop.f32.mrb[0].mxu0
        %3993 = vmatprep.mubr.bf16.mxu0 0
        %3994 = vmatmul.mubr.bf16.gmra.mrb[0].mxu0 %v3935
        %v3995 = vpop.f32.mrb[0].mxu0
        %v3996 = vadd.f32 0.0, %v3995
        %v3997 = vpop.f32.mrb[0].mxu0
        %v3998 = vpop.f32.mrb[0].mxu0
        %v3999 = vadd.f32 0.0, %v3998
        %v4000 = vpop.f32.mrb[0].mxu0
        %4001 = vdwg.mxu0
        %v4002 = vadd.f32 %v3888, %v3972
        %v4003 = vadd.f32 %v3889, %v3975
        %v4004 = vadd.f32 %v3890, %v3980
        %v4005 = vadd.f32 %v3891, %v3983
        %v4006 = vadd.f32 %v3892, %v3988
        %v4007 = vadd.f32 %v3893, %v3991
        %v4008 = vadd.f32 %v3894, %v3996
        %v4009 = vadd.f32 %v3895, %v3999
        %v4010 = vld [vmem:[%s3781 + $0x2] sm:$0xff]
        %v4011 = vld [vmem:[%s3781 + $0x12] sm:$0xff]
        %v4012 = vld [vmem:[%s3781 + $0x22] sm:$0xff]
        %v4013 = vld [vmem:[%s3781 + $0x32] sm:$0xff]
        %v4014 = vld [vmem:[%s3781 + $0x42] sm:$0xff]
        %v4015 = vld [vmem:[%s3781 + $0x52] sm:$0xff]
        %v4016 = vld [vmem:[%s3781 + $0x62] sm:$0xff]
        %v4017 = vld [vmem:[%s3781 + $0x72] sm:$0xff]
        %v4018 = vpack.c.bf16 %v4011, %v4010
        %v4019 = vpack.c.bf16 %v4013, %v4012
        %v4020 = vpack.c.bf16 %v4015, %v4014
        %v4021 = vpack.c.bf16 %v4017, %v4016
        %s4022 = scalar_lea.vmem %s3, 128
        %v4023 = vld [vmem:[%s4022] sm:$0xf]
        %v4024 = vld [vmem:[%s4022 + $0x4] sm:$0xf]
        %v4025 = vld [vmem:[%s4022 + $0x8] sm:$0xf]
        %v4026 = vld [vmem:[%s4022 + $0xc] sm:$0xf]
        %v4031 = vunpack.c.l.b16 %v4023
        %v4032 = vunpack.c.l.b16 %v4024
        %v4033 = vunpack.c.l.b16 %v4025
        %v4034 = vunpack.c.l.b16 %v4026
        %v4035 = vpack.c.b16 %v4032, %v4031
        %v4036 = vpack.c.b16 %v4034, %v4033
        %v4040 = vsel %vm2964, %v4018, 0
        %v4043 = vsel %vm2964, %v4019, 0
        %v4046 = vsel %vm2964, %v4020, 0
        %v4049 = vsel %vm2964, %v4021, 0
        %4051 = vmatprep.subr.bf16.mxu0 0
        %4052 = vmatpush1.bf16.msra.mxu0 %v4035
        %4053 = vmatprep.subr.bf16.mxu0 0
        %4054 = vmatpush1.bf16.msra.mxu0 %v4036
        %4055 = vmatprep.subr.bf16.mxu0 0
        %4056 = vmatpush1.bf16.msra.mxu0 0
        %4057 = vmatprep.subr.bf16.mxu0 0
        %4058 = vmatpush1.bf16.msra.mxu0 0
        %4059 = vmatprep.subr.bf16.mxu0 0
        %4060 = vmatpush1.bf16.msra.mxu0 0
        %4061 = vmatprep.subr.bf16.mxu0 0
        %4062 = vmatpush1.bf16.msra.mxu0 0
        %4063 = vmatprep.subr.bf16.mxu0 0
        %4064 = vmatpush1.bf16.msra.mxu0 0
        %4065 = vmatprep.subr.bf16.mxu0 0
        %4066 = vmatpush1.bf16.msra.mxu0 0
        %4067 = vmatprep.subr.bf16.mxu0 0
        %4068 = vmatpush1.bf16.msra.mxu0 0
        %4069 = vmatprep.subr.bf16.mxu0 0
        %4070 = vmatpush1.bf16.msra.mxu0 0
        %4071 = vmatprep.subr.bf16.mxu0 0
        %4072 = vmatpush1.bf16.msra.mxu0 0
        %4073 = vmatprep.subr.bf16.mxu0 0
        %4074 = vmatpush1.bf16.msra.mxu0 0
        %4075 = vmatprep.subr.bf16.mxu0 0
        %4076 = vmatpush1.bf16.msra.mxu0 0
        %4077 = vmatprep.subr.bf16.mxu0 0
        %4078 = vmatpush1.bf16.msra.mxu0 0
        %4079 = vmatprep.subr.bf16.mxu0 0
        %4080 = vmatpush1.bf16.msra.mxu0 0
        %4081 = vmatprep.subr.bf16.mxu0 0
        %4082 = vmatpush1.bf16.msra.mxu0 0
        %4083 = vmatprep.mubr.bf16.mxu0 0
        %4084 = vmatmul.mubr.bf16.gmra.mrb[0].mxu0 %v4040
        %v4085 = vpop.f32.mrb[0].mxu0
        %v4086 = vadd.f32 0.0, %v4085
        %v4087 = vpop.f32.mrb[0].mxu0
        %v4088 = vpop.f32.mrb[0].mxu0
        %v4089 = vadd.f32 0.0, %v4088
        %v4090 = vpop.f32.mrb[0].mxu0
        %4091 = vmatprep.mubr.bf16.mxu0 0
        %4092 = vmatmul.mubr.bf16.gmra.mrb[0].mxu0 %v4043
        %v4093 = vpop.f32.mrb[0].mxu0
        %v4094 = vadd.f32 0.0, %v4093
        %v4095 = vpop.f32.mrb[0].mxu0
        %v4096 = vpop.f32.mrb[0].mxu0
        %v4097 = vadd.f32 0.0, %v4096
        %v4098 = vpop.f32.mrb[0].mxu0
        %4099 = vmatprep.mubr.bf16.mxu0 0
        %4100 = vmatmul.mubr.bf16.gmra.mrb[0].mxu0 %v4046
        %v4101 = vpop.f32.mrb[0].mxu0
        %v4102 = vadd.f32 0.0, %v4101
        %v4103 = vpop.f32.mrb[0].mxu0
        %v4104 = vpop.f32.mrb[0].mxu0
        %v4105 = vadd.f32 0.0, %v4104
        %v4106 = vpop.f32.mrb[0].mxu0
        %4107 = vmatprep.mubr.bf16.mxu0 0
        %4108 = vmatmul.mubr.bf16.gmra.mrb[0].mxu0 %v4049
        %v4109 = vpop.f32.mrb[0].mxu0
        %v4110 = vadd.f32 0.0, %v4109
        %v4111 = vpop.f32.mrb[0].mxu0
        %v4112 = vpop.f32.mrb[0].mxu0
        %v4113 = vadd.f32 0.0, %v4112
        %v4114 = vpop.f32.mrb[0].mxu0
        %4115 = vdwg.mxu0
        %v4116 = vadd.f32 %v4002, %v4086
        %v4117 = vadd.f32 %v4003, %v4089
        %v4118 = vadd.f32 %v4004, %v4094
        %v4119 = vadd.f32 %v4005, %v4097
        %v4120 = vadd.f32 %v4006, %v4102
        %v4121 = vadd.f32 %v4007, %v4105
        %v4122 = vadd.f32 %v4008, %v4110
        %v4123 = vadd.f32 %v4009, %v4113
        %v4124 = vld [vmem:[%s4] sm:$0x1]
        %v4126 = vlaneseq
        %v4127 = vshrl.u32 %v4126, 7
        %v4128 = vsub.s32 0, %v4127
        %v4129 = vrot.slane %v4124, %v4128
        %v4131 = vadd.f32 %v4116, %v4129
        %v4132 = vadd.f32 %v4117, %v4129
        %v4133 = vadd.f32 %v4118, %v4129
        %v4134 = vadd.f32 %v4119, %v4129
        %v4135 = vadd.f32 %v4120, %v4129
        %v4136 = vadd.f32 %v4121, %v4129
        %v4137 = vadd.f32 %v4122, %v4129
        %v4138 = vadd.f32 %v4123, %v4129
        %v4139 = vmax.f32 %v4131, 0.0
        %v4140 = vmax.f32 %v4132, 0.0
        %v4141 = vmax.f32 %v4133, 0.0
        %v4142 = vmax.f32 %v4134, 0.0
        %v4143 = vmax.f32 %v4135, 0.0
        %v4144 = vmax.f32 %v4136, 0.0
        %v4145 = vmax.f32 %v4137, 0.0
        %v4146 = vmax.f32 %v4138, 0.0
        %v4147 = vmax.f32 %v4139, %v4140
        %v4148 = vmax.f32 %v4141, %v4142
        %v4149 = vmax.f32 %v4143, %v4144
        %v4150 = vmax.f32 %v4145, %v4146
        %4151 = vst.msk [vmem:[#allocation4] sm:$0xff] %vm2964, %v4147
        %4152 = vst.msk [vmem:[#allocation4 + $0x8] sm:$0xff] %vm2964, %v4148
        %4153 = vst.msk [vmem:[#allocation4 + $0x10] sm:$0xff] %vm2964, %v4149
        %4154 = vst.msk [vmem:[#allocation4 + $0x18] sm:$0xff] %vm2964, %v4150
        %v4155 = vld [vmem:[#allocation4] ss:$2 sm:$0xff]
        %s4156 = scalar_lea.vmem [#allocation4], 16
        %v4157 = vld [vmem:[%s4156] ss:$2 sm:$0xff]
        %s4158 = scalar_lea.vmem [#allocation4], 1
        %v4159 = vld [vmem:[%s4158] ss:$2 sm:$0xff]
        %s4160 = scalar_lea.vmem [#allocation4], 17
        %v4161 = vld [vmem:[%s4160] ss:$2 sm:$0xff]
        %v4162 = vmax.f32 %v4155, %v4159
        %v4163 = vmax.f32 %v4157, %v4161
        %4164 = vst.msk [vmem:[#allocation5] sm:$0xff] %vm2964, %v4162
        %4165 = vst.msk [vmem:[#allocation5 + $0x8] sm:$0xff] %vm2964, %v4163
        %s4166 = sld [smem:[#allocation9]]
        %v4167 = vstv %s4166
        %v4168 = vadd.f32 %v4167, 0.0
        %v4169 = vld [vmem:[#allocation5] ss:$4 sm:$0xf]
        %s4170 = sld [smem:[#allocation6]]
        %v4171 = vstv %s4170
        %v4172 = vmul.f32 %v4169, %v4171
        %v4173 = vadd.f32 %v4168, %v4172
        %s4174 = scalar_lea.vmem [#allocation5], 1
        %v4175 = vld [vmem:[%s4174] ss:$4 sm:$0xf]
        %s4176 = sld [smem:[#allocation6 + $0x1]]
        %v4177 = vstv %s4176
        %v4178 = vmul.f32 %v4175, %v4177
        %v4179 = vadd.f32 %v4173, %v4178
        %s4180 = scalar_lea.vmem [#allocation5], 2
        %v4181 = vld [vmem:[%s4180] ss:$4 sm:$0xf]
        %s4182 = sld [smem:[#allocation6 + $0x2]]
        %v4183 = vstv %s4182
        %v4184 = vmul.f32 %v4181, %v4183
        %v4185 = vadd.f32 %v4179, %v4184
        %s4186 = scalar_lea.vmem [#allocation5], 3
        %v4187 = vld [vmem:[%s4186] ss:$4 sm:$0xf]
        %s4188 = sld [smem:[#allocation6 + $0x3]]
        %v4189 = vstv %s4188
        %v4190 = vmul.f32 %v4187, %v4189
        %v4191 = vadd.f32 %v4185, %v4190
        %vm4192 = vcmask 257024
        %4193 = vst.msk [vmem:[%s298] sm:$0xf] %vm4192, %v4191
        %s4194 = sld [smem:[#allocation9 + $0x1]]
        %v4195 = vstv %s4194
        %v4196 = vadd.f32 %v4195, 0.0
        %v4197 = vld [vmem:[#allocation5] ss:$4 sm:$0xf]
        %s4198 = sld [smem:[#allocation6 + $0x80]]
        %v4199 = vstv %s4198
        %v4200 = vmul.f32 %v4197, %v4199
        %v4201 = vadd.f32 %v4196, %v4200
        %v4202 = vld [vmem:[%s4174] ss:$4 sm:$0xf]
        %s4203 = sld [smem:[#allocation6 + $0x81]]
        %v4204 = vstv %s4203
        %v4205 = vmul.f32 %v4202, %v4204
        %v4206 = vadd.f32 %v4201, %v4205
        %v4207 = vld [vmem:[%s4180] ss:$4 sm:$0xf]
        %s4208 = sld [smem:[#allocation6 + $0x82]]
        %v4209 = vstv %s4208
        %v4210 = vmul.f32 %v4207, %v4209
        %v4211 = vadd.f32 %v4206, %v4210
        %v4212 = vld [vmem:[%s4186] ss:$4 sm:$0xf]
        %s4213 = sld [smem:[#allocation6 + $0x83]]
        %v4214 = vstv %s4213
        %v4215 = vmul.f32 %v4212, %v4214
        %v4216 = vadd.f32 %v4211, %v4215
        %s4217 = scalar_lea.vmem %s298, 4 [#allocation11]
        %4218 = vst.msk [vmem:[%s4217] sm:$0xf] %vm4192, %v4216
        %s4219 = sld [smem:[#allocation9 + $0x2]]
        %v4220 = vstv %s4219
        %v4221 = vadd.f32 %v4220, 0.0
        %v4222 = vld [vmem:[#allocation5] ss:$4 sm:$0xf]
        %s4223 = sld [smem:[#allocation6 + $0x100]]
        %v4224 = vstv %s4223
        %v4225 = vmul.f32 %v4222, %v4224
        %v4226 = vadd.f32 %v4221, %v4225
        %v4227 = vld [vmem:[%s4174] ss:$4 sm:$0xf]
        %s4228 = sld [smem:[#allocation6 + $0x101]]
        %v4229 = vstv %s4228
        %v4230 = vmul.f32 %v4227, %v4229
        %v4231 = vadd.f32 %v4226, %v4230
        %v4232 = vld [vmem:[%s4180] ss:$4 sm:$0xf]
        %s4233 = sld [smem:[#allocation6 + $0x102]]
        %v4234 = vstv %s4233
        %v4235 = vmul.f32 %v4232, %v4234
        %v4236 = vadd.f32 %v4231, %v4235
        %v4237 = vld [vmem:[%s4186] ss:$4 sm:$0xf]
        %s4238 = sld [smem:[#allocation6 + $0x103]]
        %v4239 = vstv %s4238
        %v4240 = vmul.f32 %v4237, %v4239
        %v4241 = vadd.f32 %v4236, %v4240
        %s4242 = scalar_lea.vmem %s298, 8 [#allocation11]
        %4243 = vst.msk [vmem:[%s4242] sm:$0xf] %vm4192, %v4241
        %s4244 = sand.u32 %s183, 1
        %s4245 = scalar_lea.sflag [#allocation7], %s4244
        %s4246 = sand.u32 %s183, 1
        %s4247 = smul.addr %s4246, 12
        %s4248 = scalar_lea.vmem [#allocation11], %s4247
        // Predicated region
        $region57: #{cnn_forward.1} parent=47 // pred_check
          %p4249 = pneg %p193
        $region58: #{cnn_forward.1} parent=47 // pred_check_branch
          %4251 = sbr.rel (%p4249) target = $region60
        $region59: #{cnn_forward.1} parent=47 // pred_region
          %s4253 = ssub.s32 192, 192
          %4254 = vsyncadd %s4245, %s4253
          %s4255 = smul.addr %s23, 3
          %s4256 = smul.addr %s4255, 64
          %s4257 = scalar_lea.hbm %s7, %s4256
          %s4258 = sshll.u32 %s4248, 4
          %s4259 = int_to_ptr.vmem [resolvable:$true] %s4258
          %4264 = dma.vmem_to_hbm [thread:$0]  %s4259, 192, %s4257, %s4245, 64, 64, 4
        $region60: #{cnn_forward.1} parent=47 // pred_fallthru
          _
      $region48: #{cnn_forward.1} parent=5 // pred_fallthru
        _
      %p4265 = scmp.le.s32.totalorder 2, %s18
      // Predicated region
      $region61: #{cnn_forward.1} parent=5 // pred_check
        %p4266 = pneg %p4265
      $region62: #{cnn_forward.1} parent=5 // pred_check_branch
        %4268 = sbr.rel (%p4266) target = $region64
      $region63: #{cnn_forward.1} parent=5 // pred_region
        %s4269 = ssub.s32 %s18, 2
        // Predicated region
        $region65: #{cnn_forward.1} parent=63 // pred_check
          %p4270 = pneg %p199
        $region66: #{cnn_forward.1} parent=63 // pred_check_branch
          %4272 = sbr.rel (%p4270) target = $region68
        $region67: #{cnn_forward.1} parent=63 // pred_region
          %s4273 = sand.u32 %s184, 1
          %s4274 = scalar_lea.sflag [#allocation7], %s4273
          %s4275 = sand.u32 %s184, 1
          %s4276 = smul.addr %s4275, 12
          %s4277 = scalar_lea.vmem [#allocation11], %s4276
          %4278 = dma.done %s4274, 192
        $region68: #{cnn_forward.1} parent=63 // pred_fallthru
          _
      $region64: #{cnn_forward.1} parent=5 // pred_fallthru
        _
    $region6: #{cnn_forward.1} parent=1 // loop_footer
      %s22 = sadd.s32 1, %s18
    $region7: #{cnn_forward.1} parent=1 // loop_footer_branch
      %17 = sbr.rel target = $region3
    $region8: #{cnn_forward.1} parent=1 // loop_exit
      _
    %4279 = vsyncpa [#allocation7], 1
    %s4280 = scalar_lea.sflag [#allocation7], 1
    %4281 = vsyncpa %s4280, 1
    %4282 = vsyncpa [#allocation8], 1
    %s4283 = scalar_lea.sflag [#allocation8], 1
    %4284 = vsyncpa %s4283, 1
    %4285 = vsyncpa [#allocation10], 1

</llo_original>
